<compile_context>
chip_gen: v6e
topology: v6e:2x2x1
jax: 0.10.0
libtpu: 0.0.40
codegen_flags: <defaults>
</compile_context>

<pallas_src>
import functools

import numpy as np
import jax
import jax.numpy as jnp
from jax.experimental import pallas as pl
from jax.experimental.pallas import tpu as pltpu


# ----------------------------------------------------------------------------
# Fused kernel: one grid step == one chunk of `graphs_per_tile` graphs.
# ----------------------------------------------------------------------------
def _attention_embed_kernel(
    node_ref, edge_ref, n2n_ref, e2n_ref,            # per-chunk data (bf16)
    wn_ref, nb_ref, we_ref, eb_ref,                  # node/edge linear (BN1/BNe1 folded)
    wck_ref, bck_ref, bk_ref,                        # fused [conv_k | conv_k@k_weight_k], bn3 shift
    w1_ref, b1_ref, s4_ref, t4_ref,                  # att_w1 (+bias), bn4 scale/shift
    w2r_ref, b2r_ref,                                # att_w2 (BN5 + head_expand folded)
    ftile_ref, seg_ref,                              # constant replication / segment matrices
    out_ref,                                         # (1, graphs_per_tile, multi_h*latent)
    *, max_block):
    f32, bf16 = jnp.float32, jnp.bfloat16
    tm = node_ref.shape[0]          # node rows in this chunk
    d = wn_ref.shape[1]             # latent_dim
    max_k = wck_ref.shape[0]

    adj = n2n_ref[...]              # (tm, tm) bf16 block-diagonal adjacency slice
    inc = e2n_ref[...]              # (tm, te) bf16 block-diagonal edge->node incidence slice

    # ---- node / edge linear layers, eval-BatchNorm folded into W/b; bf16 in, f32 acc ----
    msg = jnp.dot(node_ref[...], wn_ref[...], preferred_element_type=f32) + nb_ref[...]
    emsg = jnp.dot(edge_ref[...], we_ref[...], preferred_element_type=f32) + eb_ref[...]
    msg = msg + jnp.dot(inc, emsg.astype(bf16), preferred_element_type=f32)   # += e2n @ edge_msg
    input_potential = jnp.maximum(msg, 0.0)

    # ---- k-hop multi-block embedding.  Per hop ONE fused (tm,D)@(D,2D) matmul:
    #        lanes [0:D)  -> next x  (conv_k + bn2_k folded)
    #        lanes [D:2D) -> this hop's k_weight (bn3-scaled) contribution, accumulated
    #      in-register; the (tm, max_k*D) concat is never materialized. ----
    # Loops kept statically unrolled: 9 tiny trip counts and few live (tm,D) temporaries
    # after the bf16 cast / matmul fusion -> no spill pressure expected.
    cur = input_potential
    for block in range(max_block):
        block_input = cur if block == 0 else cur + input_potential
        x_bf = block_input.astype(bf16)
        acc = jnp.zeros((tm, d), f32)
        for k in range(max_k):
            pooled = jnp.dot(adj, x_bf, preferred_element_type=f32) + block_input
            y = jnp.dot(pooled.astype(bf16), wck_ref[k],
                        preferred_element_type=f32) + bck_ref[k]
            x_bf = y[:, :d].astype(bf16)
            acc = acc + y[:, d:]
        cur = jnp.maximum(acc + bk_ref[...], 0.0)      # relu(bn3(result @ k_weight))
    node_emb = cur                                     # (tm, D) f32
    emb_bf = node_emb.astype(bf16)

    # ---- graph-level attention, lane-dense head-replicated layout (tm, H*D) ----
    att1 = jnp.tanh(jnp.dot(emb_bf, w1_ref[...], preferred_element_type=f32) + b1_ref[...])
    att1 = att1 * s4_ref[...] + t4_ref[...]            # bn4 (tanh in between -> not foldable)
    # logits[n, h*D + j] == att2[n, h] for every j (head_expand folded into w2)
    logits = jnp.dot(att1.astype(bf16), w2r_ref[...],
                     preferred_element_type=f32) + b2r_ref[...]
    mx = jnp.max(logits, axis=-1, keepdims=True)       # == max over the H distinct heads
    ex = jnp.exp(logits - mx)
    denom = jnp.sum(ex, axis=-1, keepdims=True)        # == D * softmax denominator
    alpha_rep = ex * (float(d) * pl.reciprocal(denom, approx=True))
    # TODO(synk): F.dropout(alpha, p=0.3) omitted -- deterministic inference (identity).

    # pooled[g, h*D + j] = sum_{n in graph g} alpha[n, h] * node_emb[n, j]
    emb_rep = jnp.dot(emb_bf, ftile_ref[...], preferred_element_type=f32)     # (tm, H*D)
    weighted = (alpha_rep * emb_rep).astype(bf16)
    pooled = jnp.dot(seg_ref[...], weighted, preferred_element_type=f32)      # (gt, H*D)
    out_ref[0] = jnp.maximum(pooled, 0.0)


# ----------------------------------------------------------------------------
# Wrapper: BN folding, matmul fusion, VMEM-aware tiling choice, BlockSpecs.
# ----------------------------------------------------------------------------
def _fold_linear_bn(w, b, scale, shift):
    """W', b' such that  x @ W' + b' == BN_eval(x @ W + b)  (exact algebra)."""
    return w * scale[None, :], (b * scale + shift)[None, :]


def _choose_graphs_per_tile(num_graphs, graph_size, edges_per_graph):
    """Largest chunk whose double-buffered bf16 adj+inc tiles fit a v7x-safe budget,
    preferring an even number (>= 2) of grid steps so both v7x TensorCores get work;
    single-TC v5e/v6e just see fewer, larger steps."""
    tile_budget = 16 * 2 ** 20
    feasible = []
    for cand in range(1, num_graphs + 1):
        if num_graphs % cand:
            continue
        tm, te = cand * graph_size, cand * edges_per_graph
        n_chunks = num_graphs // cand
        if n_chunks > 1 and (tm % 128 or te % 128):
            continue                       # multi-chunk tiling needs 128-aligned row tiles
        if 2 * 2 * (tm * tm + tm * te) > tile_budget:
            continue                       # double-buffered bf16 adjacency+incidence tiles
        feasible.append((cand, n_chunks))
    if not feasible:
        # TODO(synk): pad the chunk with dummy graphs masked out of `seg` instead of
        # falling back to one giant chunk.
        return num_graphs
    multi = [c for c, nc in feasible if nc >= 2 and nc % 2 == 0]
    return max(multi) if multi else max(c for c, _ in feasible)


def forward(params, node_feat, edge_feat, n2n, e2n, num_graphs, graph_size, *,
            max_block=3, graphs_per_tile=None):
    assert edge_feat is not None  # TODO(synk): edge_feat=None path not wired into the fused kernel.
    f32, bf16 = jnp.float32, jnp.bfloat16
    n, fn = node_feat.shape
    ne, fe = edge_feat.shape
    d = params["w_n2l"][0].shape[1]
    nheads = params["att_w2"][0].shape[1]
    max_k = len(params["conv"])
    assert n == num_graphs * graph_size
    assert ne % num_graphs == 0, "edges must be grouped per graph with equal count per graph"
    epg = ne // num_graphs

    gt = (graphs_per_tile if graphs_per_tile is not None
          else _choose_graphs_per_tile(num_graphs, graph_size, epg))
    assert num_graphs % gt == 0
    tm, te = gt * graph_size, gt * epg      # node / edge rows per grid step
    n_chunks = num_graphs // gt
    if n_chunks > 1:
        assert tm % 128 == 0 and te % 128 == 0, (
            "multi-chunk tiling needs 128-aligned node/edge tiles; "
            "pass graphs_per_tile=num_graphs for a single-chunk run")

    # ---- fold eval-mode BatchNorm affine into the adjacent Linear ----
    wn, nb = _fold_linear_bn(*params["w_n2l"], *params["bn1"])
    we, eb = _fold_linear_bn(*params["w_e2l"], *params["bne1"])
    s3, t3 = params["bn3"]
    wck, bck = [], []
    for k in range(max_k):
        wc_k, bc_k = _fold_linear_bn(*params["conv"][k], *params["bn2"][k])     # (D,D),(1,D)
        wk_k = params["k_weight"][k * d:(k + 1) * d, :] * s3[None, :]            # bn3 scale folded
        wck.append(jnp.concatenate([wc_k, wc_k @ wk_k], axis=1))                # (D, 2D)
        bck.append(jnp.concatenate([bc_k, bc_k @ wk_k], axis=1))                # (1, 2D)
    wck = jnp.stack(wck)                                                         # (K, D, 2D)
    bck = jnp.stack(bck)                                                         # (K, 1, 2D)
    bk = t3[None, :]                                                             # bn3 shift
    w1, b1_raw = params["att_w1"]
    b1 = b1_raw[None, :]
    s4 = params["bn4"][0][None, :]
    t4 = params["bn4"][1][None, :]
    w2, b2 = _fold_linear_bn(*params["att_w2"], *params["bn5"])

    # Fold the head-replication matrix into att_w2 -> lane-dense (tm, H*D) logits.
    hd = nheads * d
    head_expand = jnp.asarray(np.repeat(np.eye(nheads, dtype=np.float32), d, axis=1))  # (H, H*D)
    w2r = w2 @ head_expand                                                       # (D, H*D)
    b2r = b2 @ head_expand                                                       # (1, H*D)
    feat_tile = jnp.asarray(np.tile(np.eye(d, dtype=np.float32), (1, nheads)))   # (D, H*D)
    seg = jnp.asarray(np.kron(np.eye(gt, dtype=np.float32),
                              np.ones((1, graph_size), np.float32)))             # (gt, tm)

    # ---- bf16 MXU operands (features, 0/1 structure matrices, weights); biases/scales f32 ----
    node_bf, edge_bf = node_feat.astype(bf16), edge_feat.astype(bf16)
    n2n_bf, e2n_bf = n2n.astype(bf16), e2n.astype(bf16)
    wn_bf, we_bf, wck_bf = wn.astype(bf16), we.astype(bf16), wck.astype(bf16)
    w1_bf, w2r_bf = w1.astype(bf16), w2r.astype(bf16)
    ftile_bf, seg_bf = feat_tile.astype(bf16), seg.astype(bf16)

    kernel = functools.partial(_attention_embed_kernel, max_block=max_block)
    rep2 = lambda i: (0, 0)
    rep3 = lambda i: (0, 0, 0)

    # Cost hint so XLA can schedule/overlap the surrounding glue (L1 reductions, reshape).
    flops_chunk = (2 * tm * fn * d + 2 * te * fe * d + 2 * tm * te * d
                   + max_block * max_k * (2 * tm * tm * d + 2 * tm * d * (2 * d))
                   + 2 * tm * d * d + 2 * 2 * tm * d * hd + 2 * gt * tm * hd)
    trans_chunk = tm * d + tm * hd                                   # tanh + exp
    bytes_chunk = 2 * (tm * fn + te * fe + tm * tm + tm * te) + 4 * gt * hd
    weight_bytes = (2 * (wn.size + we.size + wck.size + w1.size + w2r.size
                         + feat_tile.size + seg.size)
                    + 4 * (nb.size + eb.size + bck.size + bk.size + b1.size
                           + s4.size + t4.size + b2r.size))
    cost = pl.CostEstimate(flops=n_chunks * flops_chunk,
                           transcendentals=n_chunks * trans_chunk,
                           bytes_accessed=n_chunks * bytes_chunk + int(weight_bytes))
    vmem_limit = int(min(48 * 2 ** 20, max(32 * 2 ** 20, 6 * 2 * (tm * tm + tm * te))))

    out = pl.pallas_call(
        kernel,
        out_shape=jax.ShapeDtypeStruct((n_chunks, gt, hd), f32),
        grid=(n_chunks,),
        in_specs=[
            pl.BlockSpec((tm, fn), lambda i: (i, 0)),     # node features of chunk i
            pl.BlockSpec((te, fe), lambda i: (i, 0)),     # edge features of chunk i
            pl.BlockSpec((tm, tm), lambda i: (i, i)),     # diagonal n2n block
            pl.BlockSpec((tm, te), lambda i: (i, i)),     # diagonal e2n block
            pl.BlockSpec((fn, d), rep2), pl.BlockSpec((1, d), rep2),
            pl.BlockSpec((fe, d), rep2), pl.BlockSpec((1, d), rep2),
            pl.BlockSpec((max_k, d, 2 * d), rep3), pl.BlockSpec((max_k, 1, 2 * d), rep3),
            pl.BlockSpec((1, d), rep2),
            pl.BlockSpec((d, d), rep2), pl.BlockSpec((1, d), rep2),
            pl.BlockSpec((1, d), rep2), pl.BlockSpec((1, d), rep2),
            pl.BlockSpec((d, hd), rep2), pl.BlockSpec((1, hd), rep2),
            pl.BlockSpec((d, hd), rep2),
            pl.BlockSpec((gt, tm), rep2),
        ],
        out_specs=pl.BlockSpec((1, gt, hd), lambda i: (i, 0, 0)),   # lane-dense (last dim = H*D)
        compiler_params=pltpu.CompilerParams(
            dimension_semantics=("parallel",), vmem_limit_bytes=vmem_limit),
        cost_estimate=cost,
    )(node_bf, edge_bf, n2n_bf, e2n_bf,
      wn_bf, nb, we_bf, eb, wck_bf, bck, bk,
      w1_bf, b1, s4, t4, w2r_bf, b2r,
      ftile_bf, seg_bf)

    h = out.reshape(num_graphs, hd)

    # ---- L1 regularization over all >1-D parameters (reg = 1); plain-JAX glue ----
    mats = ([params["w_n2l"][0], params["w_e2l"][0]]
            + [p_[0] for p_ in params["conv"]]
            + [params["k_weight"], params["att_w1"][0], params["att_w2"][0]])
    reg = sum(jnp.sum(jnp.abs(m)) for m in mats)
    return h, reg / num_graphs


# ----------------------------------------------------------------------------
# Deterministic parameter init (shapes from __init__; output_dim = 0 path).
# Linear weights stored pre-transposed (in, out); BatchNorm (eval) as scale/shift.
# ----------------------------------------------------------------------------
def init_params(key, num_node_feats, num_edge_feats, latent_dim, multi_h, max_k):
    keys = iter(jax.random.split(key, 64))

    def lin(fin, fout):
        w = 0.1 * jax.random.normal(next(keys), (fin, fout), jnp.float32)
        b = 0.1 * jax.random.normal(next(keys), (fout,), jnp.float32)
        return w, b

    def bn(dim):
        gamma = 1.0 + 0.05 * jax.random.normal(next(keys), (dim,), jnp.float32)
        beta = 0.05 * jax.random.normal(next(keys), (dim,), jnp.float32)
        mean = 0.05 * jax.random.normal(next(keys), (dim,), jnp.float32)
        var = 1.0 + 0.1 * jnp.abs(jax.random.normal(next(keys), (dim,), jnp.float32))
        scale = gamma / jnp.sqrt(var + 1e-5)
        shift = beta - mean * scale
        return scale, shift

    p = {}
    p["w_n2l"] = lin(num_node_feats, latent_dim)
    p["bn1"] = bn(latent_dim)
    p["w_e2l"] = lin(num_edge_feats, latent_dim)
    p["bne1"] = bn(latent_dim)
    p["conv"] = [lin(latent_dim, latent_dim) for _ in range(max_k)]
    p["bn2"] = [bn(latent_dim) for _ in range(max_k)]
    p["k_weight"] = 0.1 * jax.random.normal(next(keys), (max_k * latent_dim, latent_dim),
                                            jnp.float32)
    p["bn3"] = bn(latent_dim)
    p["att_w1"] = lin(latent_dim, latent_dim)
    p["bn4"] = bn(latent_dim)
    p["att_w2"] = lin(latent_dim, multi_h)
    p["bn5"] = bn(multi_h)
    return p


# ----------------------------------------------------------------------------
# Pure-JAX reference in the original (unfolded-BN) PyTorch op order.
# ----------------------------------------------------------------------------
def forward_reference(params, node_feat, edge_feat, n2n, e2n, num_graphs, graph_size, max_block):
    def bn(x, sc_sh):
        sc, sh = sc_sh
        return x * sc[None, :] + sh[None, :]

    w, b = params["w_n2l"]
    msg = bn(node_feat @ w + b[None, :], params["bn1"])
    we, be = params["w_e2l"]
    emsg = bn(edge_feat @ we + be[None, :], params["bne1"])
    msg = msg + e2n @ emsg
    pot = jnp.maximum(msg, 0.0)

    max_k = len(params["conv"])
    cur = pot
    for block in range(max_block):
        block_input = cur if block == 0 else cur + pot
        x = block_input
        chunks = []
        for k in range(max_k):
            pooled = n2n @ x + block_input
            wc, bc = params["conv"][k]
            x = bn(pooled @ wc + bc[None, :], params["bn2"][k])
            chunks.append(x)
        result = jnp.concatenate(chunks, axis=1)
        cur = jnp.maximum(bn(result @ params["k_weight"], params["bn3"]), 0.0)
    node_emb = cur

    w1, b1 = params["att_w1"]
    att1 = bn(jnp.tanh(node_emb @ w1 + b1[None, :]), params["bn4"])
    w2, b2 = params["att_w2"]
    att2 = bn(att1 @ w2 + b2[None, :], params["bn5"])

    outs = []
    for g in range(num_graphs):
        sl = slice(g * graph_size, (g + 1) * graph_size)
        alpha = jax.nn.softmax(att2[sl], axis=-1)            # (S, H)
        outs.append((alpha.T @ node_emb[sl]).reshape(-1))    # (H*D,)
    return jnp.maximum(jnp.stack(outs, axis=0), 0.0)


# ----------------------------------------------------------------------------
if __name__ == "__main__":
    latent_dim = 32
    num_node_feats = 8
    num_edge_feats = 4
    multi_h = 4
    max_k = 3
    max_block = 3
    G, S = 16, 16                    # 16 ring graphs x 16 nodes -> N=256, grid = 2 chunks x 8 graphs
    N = G * S

    # Block-diagonal adjacency + edge->node incidence (edges grouped per graph).
    n2n = np.zeros((N, N), np.float32)
    edges = []
    for g in range(G):
        for i in range(S):
            u = g * S + i
            v = g * S + (i + 1) % S
            n2n[u, v] = 1.0
            n2n[v, u] = 1.0
            edges.append((u, v))
            edges.append((v, u))
    E = len(edges)                   # 2*S directed edges per graph
    e2n = np.zeros((N, E), np.float32)
    for j, (u, v) in enumerate(edges):
        e2n[v, j] = 1.0

    key = jax.random.PRNGKey(0)
    kp, kn, ke = jax.random.split(key, 3)
    params = init_params(kp, num_node_feats, num_edge_feats, latent_dim, multi_h, max_k)
    node_feat = jax.random.normal(kn, (N, num_node_feats), jnp.float32)
    edge_feat = jax.random.normal(ke, (E, num_edge_feats), jnp.float32)
    n2n_j = jnp.asarray(n2n)
    e2n_j = jnp.asarray(e2n)

    fwd = jax.jit(functools.partial(forward, max_block=max_block), static_argnums=(5, 6))
    h, reg = fwd(params, node_feat, edge_feat, n2n_j, e2n_j, G, S)
    jax.block_until_ready(h)
    jax.block_until_ready(reg)

    assert h.shape == (G, multi_h * latent_dim)
    assert h.dtype == jnp.float32
    assert bool(jnp.all(jnp.isfinite(h)))
    assert bool(jnp.isfinite(reg))

    # Correctness: compare against the pure-JAX reference (unfolded BN, PyTorch op order).
    with jax.default_matmul_precision("highest"):
        h_ref = forward_reference(params, node_feat, edge_feat, n2n_j, e2n_j, G, S, max_block)
    np.testing.assert_allclose(np.asarray(h), np.asarray(h_ref), rtol=1e-1, atol=1e-1)

    print("KERNEL_OK")
</pallas_src>

<mosaic_0001>
module attributes {stable_mosaic.version = 11 : i64} {
  func.func @_attention_embed_kernel(%arg0: i32, %arg1: memref<128x8xbf16, #tpu.memory_space<vmem>>, %arg2: memref<256x4xbf16, #tpu.memory_space<vmem>>, %arg3: memref<128x128xbf16, #tpu.memory_space<vmem>>, %arg4: memref<128x256xbf16, #tpu.memory_space<vmem>>, %arg5: memref<8x32xbf16, #tpu.memory_space<vmem>>, %arg6: memref<1x32xf32, #tpu.memory_space<vmem>>, %arg7: memref<4x32xbf16, #tpu.memory_space<vmem>>, %arg8: memref<1x32xf32, #tpu.memory_space<vmem>>, %arg9: memref<3x32x64xbf16, #tpu.memory_space<vmem>>, %arg10: memref<3x1x64xf32, #tpu.memory_space<vmem>>, %arg11: memref<1x32xf32, #tpu.memory_space<vmem>>, %arg12: memref<32x32xbf16, #tpu.memory_space<vmem>>, %arg13: memref<1x32xf32, #tpu.memory_space<vmem>>, %arg14: memref<1x32xf32, #tpu.memory_space<vmem>>, %arg15: memref<1x32xf32, #tpu.memory_space<vmem>>, %arg16: memref<32x128xbf16, #tpu.memory_space<vmem>>, %arg17: memref<1x128xf32, #tpu.memory_space<vmem>>, %arg18: memref<32x128xbf16, #tpu.memory_space<vmem>>, %arg19: memref<8x128xbf16, #tpu.memory_space<vmem>>, %arg20: memref<1x8x128xf32, #tpu.memory_space<vmem>>) attributes {dimension_semantics = [#tpu.dimension_semantics<parallel>], iteration_bounds = array<i64: 2>, scalar_prefetch = 0 : i64, scratch_operands = 0 : i64, tpu.core_type = #tpu.core_type<tc>, window_params = [{transform_indices = @transform_0, window_bounds = array<i64: 128, 8>}, {transform_indices = @transform_1, window_bounds = array<i64: 256, 4>}, {transform_indices = @transform_2, window_bounds = array<i64: 128, 128>}, {transform_indices = @transform_3, window_bounds = array<i64: 128, 256>}, {pipeline_mode = #tpu.pipeline_mode<synchronous>, transform_indices = @transform_4, window_bounds = array<i64: 8, 32>}, {pipeline_mode = #tpu.pipeline_mode<synchronous>, transform_indices = @transform_5, window_bounds = array<i64: 1, 32>}, {pipeline_mode = #tpu.pipeline_mode<synchronous>, transform_indices = @transform_6, window_bounds = array<i64: 4, 32>}, {pipeline_mode = #tpu.pipeline_mode<synchronous>, transform_indices = @transform_7, window_bounds = array<i64: 1, 32>}, {pipeline_mode = #tpu.pipeline_mode<synchronous>, transform_indices = @transform_8, window_bounds = array<i64: 3, 32, 64>}, {pipeline_mode = #tpu.pipeline_mode<synchronous>, transform_indices = @transform_9, window_bounds = array<i64: 3, 1, 64>}, {pipeline_mode = #tpu.pipeline_mode<synchronous>, transform_indices = @transform_10, window_bounds = array<i64: 1, 32>}, {pipeline_mode = #tpu.pipeline_mode<synchronous>, transform_indices = @transform_11, window_bounds = array<i64: 32, 32>}, {pipeline_mode = #tpu.pipeline_mode<synchronous>, transform_indices = @transform_12, window_bounds = array<i64: 1, 32>}, {pipeline_mode = #tpu.pipeline_mode<synchronous>, transform_indices = @transform_13, window_bounds = array<i64: 1, 32>}, {pipeline_mode = #tpu.pipeline_mode<synchronous>, transform_indices = @transform_14, window_bounds = array<i64: 1, 32>}, {pipeline_mode = #tpu.pipeline_mode<synchronous>, transform_indices = @transform_15, window_bounds = array<i64: 32, 128>}, {pipeline_mode = #tpu.pipeline_mode<synchronous>, transform_indices = @transform_16, window_bounds = array<i64: 1, 128>}, {pipeline_mode = #tpu.pipeline_mode<synchronous>, transform_indices = @transform_17, window_bounds = array<i64: 32, 128>}, {pipeline_mode = #tpu.pipeline_mode<synchronous>, transform_indices = @transform_18, window_bounds = array<i64: 8, 128>}, {transform_indices = @transform_19, window_bounds = array<i64: 1, 8, 128>}]} {
    %c0 = arith.constant 0 : index
    %c0_0 = arith.constant 0 : index
    %0 = vector.load %arg3[%c0, %c0_0] : memref<128x128xbf16, #tpu.memory_space<vmem>>, vector<128x128xbf16>
    %c0_1 = arith.constant 0 : index
    %c0_2 = arith.constant 0 : index
    %1 = vector.load %arg4[%c0_1, %c0_2] : memref<128x256xbf16, #tpu.memory_space<vmem>>, vector<128x256xbf16>
    %c0_3 = arith.constant 0 : index
    %c0_4 = arith.constant 0 : index
    %2 = vector.load %arg1[%c0_3, %c0_4] : memref<128x8xbf16, #tpu.memory_space<vmem>>, vector<128x8xbf16>
    %c0_5 = arith.constant 0 : index
    %c0_6 = arith.constant 0 : index
    %3 = vector.load %arg5[%c0_5, %c0_6] : memref<8x32xbf16, #tpu.memory_space<vmem>>, vector<8x32xbf16>
    %cst = arith.constant dense<0.000000e+00> : vector<128x32xf32>
    %4 = tpu.matmul %2, %3, %cst {dimension_numbers = #tpu.dot_dimension_numbers<[1], [0], [0], [1], [0, 0, 1, 1], [], []>} : vector<128x8xbf16>, vector<8x32xbf16>, vector<128x32xf32> -> vector<128x32xf32>
    %c0_7 = arith.constant 0 : index
    %c0_8 = arith.constant 0 : index
    %5 = vector.load %arg6[%c0_7, %c0_8] : memref<1x32xf32, #tpu.memory_space<vmem>>, vector<1x32xf32>
    %6 = vector.broadcast %5 : vector<1x32xf32> to vector<128x32xf32>
    %7 = arith.addf %4, %6 : vector<128x32xf32>
    %c0_9 = arith.constant 0 : index
    %c0_10 = arith.constant 0 : index
    %8 = vector.load %arg2[%c0_9, %c0_10] : memref<256x4xbf16, #tpu.memory_space<vmem>>, vector<256x4xbf16>
    %c0_11 = arith.constant 0 : index
    %c0_12 = arith.constant 0 : index
    %9 = vector.load %arg7[%c0_11, %c0_12] : memref<4x32xbf16, #tpu.memory_space<vmem>>, vector<4x32xbf16>
    %cst_13 = arith.constant dense<0.000000e+00> : vector<256x32xf32>
    %10 = tpu.matmul %8, %9, %cst_13 {dimension_numbers = #tpu.dot_dimension_numbers<[1], [0], [0], [1], [0, 0, 1, 1], [], []>} : vector<256x4xbf16>, vector<4x32xbf16>, vector<256x32xf32> -> vector<256x32xf32>
    %c0_14 = arith.constant 0 : index
    %c0_15 = arith.constant 0 : index
    %11 = vector.load %arg8[%c0_14, %c0_15] : memref<1x32xf32, #tpu.memory_space<vmem>>, vector<1x32xf32>
    %12 = vector.broadcast %11 : vector<1x32xf32> to vector<256x32xf32>
    %13 = arith.addf %10, %12 : vector<256x32xf32>
    %14 = arith.truncf %13 : vector<256x32xf32> to vector<256x32xbf16>
    %cst_16 = arith.constant dense<0.000000e+00> : vector<128x32xf32>
    %15 = tpu.matmul %1, %14, %cst_16 {dimension_numbers = #tpu.dot_dimension_numbers<[1], [0], [0], [1], [0, 0, 1, 1], [], []>} : vector<128x256xbf16>, vector<256x32xbf16>, vector<128x32xf32> -> vector<128x32xf32>
    %16 = arith.addf %7, %15 : vector<128x32xf32>
    %cst_17 = arith.constant 0.000000e+00 : f32
    %17 = vector.broadcast %cst_17 : f32 to vector<128x32xf32>
    %18 = arith.maximumf %16, %17 : vector<128x32xf32>
    %19 = arith.truncf %18 : vector<128x32xf32> to vector<128x32xbf16>
    %cst_18 = arith.constant 0.000000e+00 : f32
    %20 = vector.broadcast %cst_18 : f32 to vector<128x32xf32>
    %cst_19 = arith.constant dense<0.000000e+00> : vector<128x32xf32>
    %21 = tpu.matmul %0, %19, %cst_19 {dimension_numbers = #tpu.dot_dimension_numbers<[1], [0], [0], [1], [0, 0, 1, 1], [], []>} : vector<128x128xbf16>, vector<128x32xbf16>, vector<128x32xf32> -> vector<128x32xf32>
    %22 = arith.addf %21, %18 : vector<128x32xf32>
    %23 = arith.truncf %22 : vector<128x32xf32> to vector<128x32xbf16>
    %c0_20 = arith.constant 0 : index
    %c0_21 = arith.constant 0 : index
    %c0_22 = arith.constant 0 : index
    %24 = vector.load %arg9[%c0_20, %c0_21, %c0_22] : memref<3x32x64xbf16, #tpu.memory_space<vmem>>, vector<1x32x64xbf16>
    %25 = vector.shape_cast %24 : vector<1x32x64xbf16> to vector<32x64xbf16>
    %cst_23 = arith.constant dense<0.000000e+00> : vector<128x64xf32>
    %26 = tpu.matmul %23, %25, %cst_23 {dimension_numbers = #tpu.dot_dimension_numbers<[1], [0], [0], [1], [0, 0, 1, 1], [], []>} : vector<128x32xbf16>, vector<32x64xbf16>, vector<128x64xf32> -> vector<128x64xf32>
    %c0_24 = arith.constant 0 : index
    %c0_25 = arith.constant 0 : index
    %c0_26 = arith.constant 0 : index
    %27 = vector.load %arg10[%c0_24, %c0_25, %c0_26] : memref<3x1x64xf32, #tpu.memory_space<vmem>>, vector<1x1x64xf32>
    %28 = vector.shape_cast %27 : vector<1x1x64xf32> to vector<1x64xf32>
    %29 = vector.broadcast %28 : vector<1x64xf32> to vector<128x64xf32>
    %30 = arith.addf %26, %29 : vector<128x64xf32>
    %31 = vector.extract_strided_slice %30 {offsets = [0, 0], sizes = [128, 32], strides = [1, 1]} : vector<128x64xf32> to vector<128x32xf32>
    %32 = arith.truncf %31 : vector<128x32xf32> to vector<128x32xbf16>
    %33 = vector.extract_strided_slice %30 {offsets = [0, 32], sizes = [128, 32], strides = [1, 1]} : vector<128x64xf32> to vector<128x32xf32>
    %34 = arith.addf %20, %33 : vector<128x32xf32>
    %cst_27 = arith.constant dense<0.000000e+00> : vector<128x32xf32>
    %35 = tpu.matmul %0, %32, %cst_27 {dimension_numbers = #tpu.dot_dimension_numbers<[1], [0], [0], [1], [0, 0, 1, 1], [], []>} : vector<128x128xbf16>, vector<128x32xbf16>, vector<128x32xf32> -> vector<128x32xf32>
    %36 = arith.addf %35, %18 : vector<128x32xf32>
    %37 = arith.truncf %36 : vector<128x32xf32> to vector<128x32xbf16>
    %c1 = arith.constant 1 : index
    %c0_28 = arith.constant 0 : index
    %c0_29 = arith.constant 0 : index
    %38 = vector.load %arg9[%c1, %c0_28, %c0_29] : memref<3x32x64xbf16, #tpu.memory_space<vmem>>, vector<1x32x64xbf16>
    %39 = vector.shape_cast %38 : vector<1x32x64xbf16> to vector<32x64xbf16>
    %cst_30 = arith.constant dense<0.000000e+00> : vector<128x64xf32>
    %40 = tpu.matmul %37, %39, %cst_30 {dimension_numbers = #tpu.dot_dimension_numbers<[1], [0], [0], [1], [0, 0, 1, 1], [], []>} : vector<128x32xbf16>, vector<32x64xbf16>, vector<128x64xf32> -> vector<128x64xf32>
    %c1_31 = arith.constant 1 : index
    %c0_32 = arith.constant 0 : index
    %c0_33 = arith.constant 0 : index
    %41 = vector.load %arg10[%c1_31, %c0_32, %c0_33] : memref<3x1x64xf32, #tpu.memory_space<vmem>>, vector<1x1x64xf32>
    %42 = vector.shape_cast %41 : vector<1x1x64xf32> to vector<1x64xf32>
    %43 = vector.broadcast %42 : vector<1x64xf32> to vector<128x64xf32>
    %44 = arith.addf %40, %43 : vector<128x64xf32>
    %45 = vector.extract_strided_slice %44 {offsets = [0, 0], sizes = [128, 32], strides = [1, 1]} : vector<128x64xf32> to vector<128x32xf32>
    %46 = arith.truncf %45 : vector<128x32xf32> to vector<128x32xbf16>
    %47 = vector.extract_strided_slice %44 {offsets = [0, 32], sizes = [128, 32], strides = [1, 1]} : vector<128x64xf32> to vector<128x32xf32>
    %48 = arith.addf %34, %47 : vector<128x32xf32>
    %cst_34 = arith.constant dense<0.000000e+00> : vector<128x32xf32>
    %49 = tpu.matmul %0, %46, %cst_34 {dimension_numbers = #tpu.dot_dimension_numbers<[1], [0], [0], [1], [0, 0, 1, 1], [], []>} : vector<128x128xbf16>, vector<128x32xbf16>, vector<128x32xf32> -> vector<128x32xf32>
    %50 = arith.addf %49, %18 : vector<128x32xf32>
    %51 = arith.truncf %50 : vector<128x32xf32> to vector<128x32xbf16>
    %c2 = arith.constant 2 : index
    %c0_35 = arith.constant 0 : index
    %c0_36 = arith.constant 0 : index
    %52 = vector.load %arg9[%c2, %c0_35, %c0_36] : memref<3x32x64xbf16, #tpu.memory_space<vmem>>, vector<1x32x64xbf16>
    %53 = vector.shape_cast %52 : vector<1x32x64xbf16> to vector<32x64xbf16>
    %cst_37 = arith.constant dense<0.000000e+00> : vector<128x64xf32>
    %54 = tpu.matmul %51, %53, %cst_37 {dimension_numbers = #tpu.dot_dimension_numbers<[1], [0], [0], [1], [0, 0, 1, 1], [], []>} : vector<128x32xbf16>, vector<32x64xbf16>, vector<128x64xf32> -> vector<128x64xf32>
    %c2_38 = arith.constant 2 : index
    %c0_39 = arith.constant 0 : index
    %c0_40 = arith.constant 0 : index
    %55 = vector.load %arg10[%c2_38, %c0_39, %c0_40] : memref<3x1x64xf32, #tpu.memory_space<vmem>>, vector<1x1x64xf32>
    %56 = vector.shape_cast %55 : vector<1x1x64xf32> to vector<1x64xf32>
    %57 = vector.broadcast %56 : vector<1x64xf32> to vector<128x64xf32>
    %58 = arith.addf %54, %57 : vector<128x64xf32>
    %59 = vector.extract_strided_slice %58 {offsets = [0, 32], sizes = [128, 32], strides = [1, 1]} : vector<128x64xf32> to vector<128x32xf32>
    %60 = arith.addf %48, %59 : vector<128x32xf32>
    %c0_41 = arith.constant 0 : index
    %c0_42 = arith.constant 0 : index
    %61 = vector.load %arg11[%c0_41, %c0_42] : memref<1x32xf32, #tpu.memory_space<vmem>>, vector<1x32xf32>
    %62 = vector.broadcast %61 : vector<1x32xf32> to vector<128x32xf32>
    %63 = arith.addf %60, %62 : vector<128x32xf32>
    %cst_43 = arith.constant 0.000000e+00 : f32
    %64 = vector.broadcast %cst_43 : f32 to vector<128x32xf32>
    %65 = arith.maximumf %63, %64 : vector<128x32xf32>
    %66 = arith.addf %65, %18 : vector<128x32xf32>
    %67 = arith.truncf %66 : vector<128x32xf32> to vector<128x32xbf16>
    %cst_44 = arith.constant 0.000000e+00 : f32
    %68 = vector.broadcast %cst_44 : f32 to vector<128x32xf32>
    %cst_45 = arith.constant dense<0.000000e+00> : vector<128x32xf32>
    %69 = tpu.matmul %0, %67, %cst_45 {dimension_numbers = #tpu.dot_dimension_numbers<[1], [0], [0], [1], [0, 0, 1, 1], [], []>} : vector<128x128xbf16>, vector<128x32xbf16>, vector<128x32xf32> -> vector<128x32xf32>
    %70 = arith.addf %69, %66 : vector<128x32xf32>
    %71 = arith.truncf %70 : vector<128x32xf32> to vector<128x32xbf16>
    %c0_46 = arith.constant 0 : index
    %c0_47 = arith.constant 0 : index
    %c0_48 = arith.constant 0 : index
    %72 = vector.load %arg9[%c0_46, %c0_47, %c0_48] : memref<3x32x64xbf16, #tpu.memory_space<vmem>>, vector<1x32x64xbf16>
    %73 = vector.shape_cast %72 : vector<1x32x64xbf16> to vector<32x64xbf16>
    %cst_49 = arith.constant dense<0.000000e+00> : vector<128x64xf32>
    %74 = tpu.matmul %71, %73, %cst_49 {dimension_numbers = #tpu.dot_dimension_numbers<[1], [0], [0], [1], [0, 0, 1, 1], [], []>} : vector<128x32xbf16>, vector<32x64xbf16>, vector<128x64xf32> -> vector<128x64xf32>
    %c0_50 = arith.constant 0 : index
    %c0_51 = arith.constant 0 : index
    %c0_52 = arith.constant 0 : index
    %75 = vector.load %arg10[%c0_50, %c0_51, %c0_52] : memref<3x1x64xf32, #tpu.memory_space<vmem>>, vector<1x1x64xf32>
    %76 = vector.shape_cast %75 : vector<1x1x64xf32> to vector<1x64xf32>
    %77 = vector.broadcast %76 : vector<1x64xf32> to vector<128x64xf32>
    %78 = arith.addf %74, %77 : vector<128x64xf32>
    %79 = vector.extract_strided_slice %78 {offsets = [0, 0], sizes = [128, 32], strides = [1, 1]} : vector<128x64xf32> to vector<128x32xf32>
    %80 = arith.truncf %79 : vector<128x32xf32> to vector<128x32xbf16>
    %81 = vector.extract_strided_slice %78 {offsets = [0, 32], sizes = [128, 32], strides = [1, 1]} : vector<128x64xf32> to vector<128x32xf32>
    %82 = arith.addf %68, %81 : vector<128x32xf32>
    %cst_53 = arith.constant dense<0.000000e+00> : vector<128x32xf32>
    %83 = tpu.matmul %0, %80, %cst_53 {dimension_numbers = #tpu.dot_dimension_numbers<[1], [0], [0], [1], [0, 0, 1, 1], [], []>} : vector<128x128xbf16>, vector<128x32xbf16>, vector<128x32xf32> -> vector<128x32xf32>
    %84 = arith.addf %83, %66 : vector<128x32xf32>
    %85 = arith.truncf %84 : vector<128x32xf32> to vector<128x32xbf16>
    %c1_54 = arith.constant 1 : index
    %c0_55 = arith.constant 0 : index
    %c0_56 = arith.constant 0 : index
    %86 = vector.load %arg9[%c1_54, %c0_55, %c0_56] : memref<3x32x64xbf16, #tpu.memory_space<vmem>>, vector<1x32x64xbf16>
    %87 = vector.shape_cast %86 : vector<1x32x64xbf16> to vector<32x64xbf16>
    %cst_57 = arith.constant dense<0.000000e+00> : vector<128x64xf32>
    %88 = tpu.matmul %85, %87, %cst_57 {dimension_numbers = #tpu.dot_dimension_numbers<[1], [0], [0], [1], [0, 0, 1, 1], [], []>} : vector<128x32xbf16>, vector<32x64xbf16>, vector<128x64xf32> -> vector<128x64xf32>
    %c1_58 = arith.constant 1 : index
    %c0_59 = arith.constant 0 : index
    %c0_60 = arith.constant 0 : index
    %89 = vector.load %arg10[%c1_58, %c0_59, %c0_60] : memref<3x1x64xf32, #tpu.memory_space<vmem>>, vector<1x1x64xf32>
    %90 = vector.shape_cast %89 : vector<1x1x64xf32> to vector<1x64xf32>
    %91 = vector.broadcast %90 : vector<1x64xf32> to vector<128x64xf32>
    %92 = arith.addf %88, %91 : vector<128x64xf32>
    %93 = vector.extract_strided_slice %92 {offsets = [0, 0], sizes = [128, 32], strides = [1, 1]} : vector<128x64xf32> to vector<128x32xf32>
    %94 = arith.truncf %93 : vector<128x32xf32> to vector<128x32xbf16>
    %95 = vector.extract_strided_slice %92 {offsets = [0, 32], sizes = [128, 32], strides = [1, 1]} : vector<128x64xf32> to vector<128x32xf32>
    %96 = arith.addf %82, %95 : vector<128x32xf32>
    %cst_61 = arith.constant dense<0.000000e+00> : vector<128x32xf32>
    %97 = tpu.matmul %0, %94, %cst_61 {dimension_numbers = #tpu.dot_dimension_numbers<[1], [0], [0], [1], [0, 0, 1, 1], [], []>} : vector<128x128xbf16>, vector<128x32xbf16>, vector<128x32xf32> -> vector<128x32xf32>
    %98 = arith.addf %97, %66 : vector<128x32xf32>
    %99 = arith.truncf %98 : vector<128x32xf32> to vector<128x32xbf16>
    %c2_62 = arith.constant 2 : index
    %c0_63 = arith.constant 0 : index
    %c0_64 = arith.constant 0 : index
    %100 = vector.load %arg9[%c2_62, %c0_63, %c0_64] : memref<3x32x64xbf16, #tpu.memory_space<vmem>>, vector<1x32x64xbf16>
    %101 = vector.shape_cast %100 : vector<1x32x64xbf16> to vector<32x64xbf16>
    %cst_65 = arith.constant dense<0.000000e+00> : vector<128x64xf32>
    %102 = tpu.matmul %99, %101, %cst_65 {dimension_numbers = #tpu.dot_dimension_numbers<[1], [0], [0], [1], [0, 0, 1, 1], [], []>} : vector<128x32xbf16>, vector<32x64xbf16>, vector<128x64xf32> -> vector<128x64xf32>
    %c2_66 = arith.constant 2 : index
    %c0_67 = arith.constant 0 : index
    %c0_68 = arith.constant 0 : index
    %103 = vector.load %arg10[%c2_66, %c0_67, %c0_68] : memref<3x1x64xf32, #tpu.memory_space<vmem>>, vector<1x1x64xf32>
    %104 = vector.shape_cast %103 : vector<1x1x64xf32> to vector<1x64xf32>
    %105 = vector.broadcast %104 : vector<1x64xf32> to vector<128x64xf32>
    %106 = arith.addf %102, %105 : vector<128x64xf32>
    %107 = vector.extract_strided_slice %106 {offsets = [0, 32], sizes = [128, 32], strides = [1, 1]} : vector<128x64xf32> to vector<128x32xf32>
    %108 = arith.addf %96, %107 : vector<128x32xf32>
    %c0_69 = arith.constant 0 : index
    %c0_70 = arith.constant 0 : index
    %109 = vector.load %arg11[%c0_69, %c0_70] : memref<1x32xf32, #tpu.memory_space<vmem>>, vector<1x32xf32>
    %110 = vector.broadcast %109 : vector<1x32xf32> to vector<128x32xf32>
    %111 = arith.addf %108, %110 : vector<128x32xf32>
    %cst_71 = arith.constant 0.000000e+00 : f32
    %112 = vector.broadcast %cst_71 : f32 to vector<128x32xf32>
    %113 = arith.maximumf %111, %112 : vector<128x32xf32>
    %114 = arith.addf %113, %18 : vector<128x32xf32>
    %115 = arith.truncf %114 : vector<128x32xf32> to vector<128x32xbf16>
    %cst_72 = arith.constant 0.000000e+00 : f32
    %116 = vector.broadcast %cst_72 : f32 to vector<128x32xf32>
    %cst_73 = arith.constant dense<0.000000e+00> : vector<128x32xf32>
    %117 = tpu.matmul %0, %115, %cst_73 {dimension_numbers = #tpu.dot_dimension_numbers<[1], [0], [0], [1], [0, 0, 1, 1], [], []>} : vector<128x128xbf16>, vector<128x32xbf16>, vector<128x32xf32> -> vector<128x32xf32>
    %118 = arith.addf %117, %114 : vector<128x32xf32>
    %119 = arith.truncf %118 : vector<128x32xf32> to vector<128x32xbf16>
    %c0_74 = arith.constant 0 : index
    %c0_75 = arith.constant 0 : index
    %c0_76 = arith.constant 0 : index
    %120 = vector.load %arg9[%c0_74, %c0_75, %c0_76] : memref<3x32x64xbf16, #tpu.memory_space<vmem>>, vector<1x32x64xbf16>
    %121 = vector.shape_cast %120 : vector<1x32x64xbf16> to vector<32x64xbf16>
    %cst_77 = arith.constant dense<0.000000e+00> : vector<128x64xf32>
    %122 = tpu.matmul %119, %121, %cst_77 {dimension_numbers = #tpu.dot_dimension_numbers<[1], [0], [0], [1], [0, 0, 1, 1], [], []>} : vector<128x32xbf16>, vector<32x64xbf16>, vector<128x64xf32> -> vector<128x64xf32>
    %c0_78 = arith.constant 0 : index
    %c0_79 = arith.constant 0 : index
    %c0_80 = arith.constant 0 : index
    %123 = vector.load %arg10[%c0_78, %c0_79, %c0_80] : memref<3x1x64xf32, #tpu.memory_space<vmem>>, vector<1x1x64xf32>
    %124 = vector.shape_cast %123 : vector<1x1x64xf32> to vector<1x64xf32>
    %125 = vector.broadcast %124 : vector<1x64xf32> to vector<128x64xf32>
    %126 = arith.addf %122, %125 : vector<128x64xf32>
    %127 = vector.extract_strided_slice %126 {offsets = [0, 0], sizes = [128, 32], strides = [1, 1]} : vector<128x64xf32> to vector<128x32xf32>
    %128 = arith.truncf %127 : vector<128x32xf32> to vector<128x32xbf16>
    %129 = vector.extract_strided_slice %126 {offsets = [0, 32], sizes = [128, 32], strides = [1, 1]} : vector<128x64xf32> to vector<128x32xf32>
    %130 = arith.addf %116, %129 : vector<128x32xf32>
    %cst_81 = arith.constant dense<0.000000e+00> : vector<128x32xf32>
    %131 = tpu.matmul %0, %128, %cst_81 {dimension_numbers = #tpu.dot_dimension_numbers<[1], [0], [0], [1], [0, 0, 1, 1], [], []>} : vector<128x128xbf16>, vector<128x32xbf16>, vector<128x32xf32> -> vector<128x32xf32>
    %132 = arith.addf %131, %114 : vector<128x32xf32>
    %133 = arith.truncf %132 : vector<128x32xf32> to vector<128x32xbf16>
    %c1_82 = arith.constant 1 : index
    %c0_83 = arith.constant 0 : index
    %c0_84 = arith.constant 0 : index
    %134 = vector.load %arg9[%c1_82, %c0_83, %c0_84] : memref<3x32x64xbf16, #tpu.memory_space<vmem>>, vector<1x32x64xbf16>
    %135 = vector.shape_cast %134 : vector<1x32x64xbf16> to vector<32x64xbf16>
    %cst_85 = arith.constant dense<0.000000e+00> : vector<128x64xf32>
    %136 = tpu.matmul %133, %135, %cst_85 {dimension_numbers = #tpu.dot_dimension_numbers<[1], [0], [0], [1], [0, 0, 1, 1], [], []>} : vector<128x32xbf16>, vector<32x64xbf16>, vector<128x64xf32> -> vector<128x64xf32>
    %c1_86 = arith.constant 1 : index
    %c0_87 = arith.constant 0 : index
    %c0_88 = arith.constant 0 : index
    %137 = vector.load %arg10[%c1_86, %c0_87, %c0_88] : memref<3x1x64xf32, #tpu.memory_space<vmem>>, vector<1x1x64xf32>
    %138 = vector.shape_cast %137 : vector<1x1x64xf32> to vector<1x64xf32>
    %139 = vector.broadcast %138 : vector<1x64xf32> to vector<128x64xf32>
    %140 = arith.addf %136, %139 : vector<128x64xf32>
    %141 = vector.extract_strided_slice %140 {offsets = [0, 0], sizes = [128, 32], strides = [1, 1]} : vector<128x64xf32> to vector<128x32xf32>
    %142 = arith.truncf %141 : vector<128x32xf32> to vector<128x32xbf16>
    %143 = vector.extract_strided_slice %140 {offsets = [0, 32], sizes = [128, 32], strides = [1, 1]} : vector<128x64xf32> to vector<128x32xf32>
    %144 = arith.addf %130, %143 : vector<128x32xf32>
    %cst_89 = arith.constant dense<0.000000e+00> : vector<128x32xf32>
    %145 = tpu.matmul %0, %142, %cst_89 {dimension_numbers = #tpu.dot_dimension_numbers<[1], [0], [0], [1], [0, 0, 1, 1], [], []>} : vector<128x128xbf16>, vector<128x32xbf16>, vector<128x32xf32> -> vector<128x32xf32>
    %146 = arith.addf %145, %114 : vector<128x32xf32>
    %147 = arith.truncf %146 : vector<128x32xf32> to vector<128x32xbf16>
    %c2_90 = arith.constant 2 : index
    %c0_91 = arith.constant 0 : index
    %c0_92 = arith.constant 0 : index
    %148 = vector.load %arg9[%c2_90, %c0_91, %c0_92] : memref<3x32x64xbf16, #tpu.memory_space<vmem>>, vector<1x32x64xbf16>
    %149 = vector.shape_cast %148 : vector<1x32x64xbf16> to vector<32x64xbf16>
    %cst_93 = arith.constant dense<0.000000e+00> : vector<128x64xf32>
    %150 = tpu.matmul %147, %149, %cst_93 {dimension_numbers = #tpu.dot_dimension_numbers<[1], [0], [0], [1], [0, 0, 1, 1], [], []>} : vector<128x32xbf16>, vector<32x64xbf16>, vector<128x64xf32> -> vector<128x64xf32>
    %c2_94 = arith.constant 2 : index
    %c0_95 = arith.constant 0 : index
    %c0_96 = arith.constant 0 : index
    %151 = vector.load %arg10[%c2_94, %c0_95, %c0_96] : memref<3x1x64xf32, #tpu.memory_space<vmem>>, vector<1x1x64xf32>
    %152 = vector.shape_cast %151 : vector<1x1x64xf32> to vector<1x64xf32>
    %153 = vector.broadcast %152 : vector<1x64xf32> to vector<128x64xf32>
    %154 = arith.addf %150, %153 : vector<128x64xf32>
    %155 = vector.extract_strided_slice %154 {offsets = [0, 32], sizes = [128, 32], strides = [1, 1]} : vector<128x64xf32> to vector<128x32xf32>
    %156 = arith.addf %144, %155 : vector<128x32xf32>
    %c0_97 = arith.constant 0 : index
    %c0_98 = arith.constant 0 : index
    %157 = vector.load %arg11[%c0_97, %c0_98] : memref<1x32xf32, #tpu.memory_space<vmem>>, vector<1x32xf32>
    %158 = vector.broadcast %157 : vector<1x32xf32> to vector<128x32xf32>
    %159 = arith.addf %156, %158 : vector<128x32xf32>
    %cst_99 = arith.constant 0.000000e+00 : f32
    %160 = vector.broadcast %cst_99 : f32 to vector<128x32xf32>
    %161 = arith.maximumf %159, %160 : vector<128x32xf32>
    %162 = arith.truncf %161 : vector<128x32xf32> to vector<128x32xbf16>
    %c0_100 = arith.constant 0 : index
    %c0_101 = arith.constant 0 : index
    %163 = vector.load %arg12[%c0_100, %c0_101] : memref<32x32xbf16, #tpu.memory_space<vmem>>, vector<32x32xbf16>
    %cst_102 = arith.constant dense<0.000000e+00> : vector<128x32xf32>
    %164 = tpu.matmul %162, %163, %cst_102 {dimension_numbers = #tpu.dot_dimension_numbers<[1], [0], [0], [1], [0, 0, 1, 1], [], []>} : vector<128x32xbf16>, vector<32x32xbf16>, vector<128x32xf32> -> vector<128x32xf32>
    %c0_103 = arith.constant 0 : index
    %c0_104 = arith.constant 0 : index
    %165 = vector.load %arg13[%c0_103, %c0_104] : memref<1x32xf32, #tpu.memory_space<vmem>>, vector<1x32xf32>
    %166 = vector.broadcast %165 : vector<1x32xf32> to vector<128x32xf32>
    %167 = arith.addf %164, %166 : vector<128x32xf32>
    %168 = math.tanh %167 : vector<128x32xf32>
    %c0_105 = arith.constant 0 : index
    %c0_106 = arith.constant 0 : index
    %169 = vector.load %arg14[%c0_105, %c0_106] : memref<1x32xf32, #tpu.memory_space<vmem>>, vector<1x32xf32>
    %170 = vector.broadcast %169 : vector<1x32xf32> to vector<128x32xf32>
    %171 = arith.mulf %168, %170 : vector<128x32xf32>
    %c0_107 = arith.constant 0 : index
    %c0_108 = arith.constant 0 : index
    %172 = vector.load %arg15[%c0_107, %c0_108] : memref<1x32xf32, #tpu.memory_space<vmem>>, vector<1x32xf32>
    %173 = vector.broadcast %172 : vector<1x32xf32> to vector<128x32xf32>
    %174 = arith.addf %171, %173 : vector<128x32xf32>
    %175 = arith.truncf %174 : vector<128x32xf32> to vector<128x32xbf16>
    %c0_109 = arith.constant 0 : index
    %c0_110 = arith.constant 0 : index
    %176 = vector.load %arg16[%c0_109, %c0_110] : memref<32x128xbf16, #tpu.memory_space<vmem>>, vector<32x128xbf16>
    %cst_111 = arith.constant dense<0.000000e+00> : vector<128x128xf32>
    %177 = tpu.matmul %175, %176, %cst_111 {dimension_numbers = #tpu.dot_dimension_numbers<[1], [0], [0], [1], [0, 0, 1, 1], [], []>} : vector<128x32xbf16>, vector<32x128xbf16>, vector<128x128xf32> -> vector<128x128xf32>
    %c0_112 = arith.constant 0 : index
    %c0_113 = arith.constant 0 : index
    %178 = vector.load %arg17[%c0_112, %c0_113] : memref<1x128xf32, #tpu.memory_space<vmem>>, vector<1x128xf32>
    %179 = vector.broadcast %178 : vector<1x128xf32> to vector<128x128xf32>
    %180 = arith.addf %177, %179 : vector<128x128xf32>
    %cst_114 = arith.constant dense<0xFF800000> : vector<128xf32>
    %181 = vector.multi_reduction <maximumf>, %180, %cst_114 [1] : vector<128x128xf32> to vector<128xf32>
    %182 = vector.shape_cast %181 : vector<128xf32> to vector<128x1xf32>
    %183 = vector.broadcast %182 : vector<128x1xf32> to vector<128x128xf32>
    %184 = arith.subf %180, %183 : vector<128x128xf32>
    %185 = math.exp %184 : vector<128x128xf32>
    %cst_115 = arith.constant dense<0.000000e+00> : vector<128xf32>
    %186 = vector.multi_reduction <add>, %185, %cst_115 [1] : vector<128x128xf32> to vector<128xf32>
    %187 = vector.shape_cast %186 : vector<128xf32> to vector<128x1xf32>
    %188 = tpu.reciprocal %187 {approx = true} : vector<128x1xf32> -> vector<128x1xf32>
    %cst_116 = arith.constant 3.200000e+01 : f32
    %189 = vector.broadcast %cst_116 : f32 to vector<128x1xf32>
    %190 = arith.mulf %189, %188 : vector<128x1xf32>
    %191 = vector.broadcast %190 : vector<128x1xf32> to vector<128x128xf32>
    %192 = arith.mulf %185, %191 : vector<128x128xf32>
    %c0_117 = arith.constant 0 : index
    %c0_118 = arith.constant 0 : index
    %193 = vector.load %arg18[%c0_117, %c0_118] : memref<32x128xbf16, #tpu.memory_space<vmem>>, vector<32x128xbf16>
    %cst_119 = arith.constant dense<0.000000e+00> : vector<128x128xf32>
    %194 = tpu.matmul %162, %193, %cst_119 {dimension_numbers = #tpu.dot_dimension_numbers<[1], [0], [0], [1], [0, 0, 1, 1], [], []>} : vector<128x32xbf16>, vector<32x128xbf16>, vector<128x128xf32> -> vector<128x128xf32>
    %195 = arith.mulf %192, %194 : vector<128x128xf32>
    %196 = arith.truncf %195 : vector<128x128xf32> to vector<128x128xbf16>
    %c0_120 = arith.constant 0 : index
    %c0_121 = arith.constant 0 : index
    %197 = vector.load %arg19[%c0_120, %c0_121] : memref<8x128xbf16, #tpu.memory_space<vmem>>, vector<8x128xbf16>
    %cst_122 = arith.constant dense<0.000000e+00> : vector<8x128xf32>
    %198 = tpu.matmul %197, %196, %cst_122 {dimension_numbers = #tpu.dot_dimension_numbers<[1], [0], [0], [1], [0, 0, 1, 1], [], []>} : vector<8x128xbf16>, vector<128x128xbf16>, vector<8x128xf32> -> vector<8x128xf32>
    %cst_123 = arith.constant 0.000000e+00 : f32
    %199 = vector.broadcast %cst_123 : f32 to vector<8x128xf32>
    %200 = arith.maximumf %198, %199 : vector<8x128xf32>
    %c0_124 = arith.constant 0 : index
    %c0_125 = arith.constant 0 : index
    %c0_126 = arith.constant 0 : index
    %201 = vector.load %arg20[%c0_124, %c0_125, %c0_126] : memref<1x8x128xf32, #tpu.memory_space<vmem>>, vector<1x8x128xf32>
    %202 = vector.shape_cast %201 : vector<1x8x128xf32> to vector<8x128xf32>
    %203 = vector.shape_cast %200 : vector<8x128xf32> to vector<1x8x128xf32>
    tpu.vector_store %arg20[%c0_124, %c0_125, %c0_126], %203 {strides = array<i32>} : memref<1x8x128xf32, #tpu.memory_space<vmem>>, vector<1x8x128xf32>,
    return
  }
  func.func @transform_0(%arg0: i32) -> (i32, i32) {
    %c0_i32 = arith.constant 0 : i32
    %c0_i32_0 = arith.constant 0 : i32
    return %arg0, %c0_i32 : i32, i32
  }
  func.func @transform_1(%arg0: i32) -> (i32, i32) {
    %c0_i32 = arith.constant 0 : i32
    %c0_i32_0 = arith.constant 0 : i32
    return %arg0, %c0_i32 : i32, i32
  }
  func.func @transform_2(%arg0: i32) -> (i32, i32) {
    %c0_i32 = arith.constant 0 : i32
    return %arg0, %arg0 : i32, i32
  }
  func.func @transform_3(%arg0: i32) -> (i32, i32) {
    %c0_i32 = arith.constant 0 : i32
    return %arg0, %arg0 : i32, i32
  }
  func.func @transform_4(%arg0: i32) -> (i32, i32) {
    %c0_i32 = arith.constant 0 : i32
    %c0_i32_0 = arith.constant 0 : i32
    %c0_i32_1 = arith.constant 0 : i32
    return %c0_i32, %c0_i32_0 : i32, i32
  }
  func.func @transform_5(%arg0: i32) -> (i32, i32) {
    %c0_i32 = arith.constant 0 : i32
    %c0_i32_0 = arith.constant 0 : i32
    %c0_i32_1 = arith.constant 0 : i32
    return %c0_i32, %c0_i32_0 : i32, i32
  }
  func.func @transform_6(%arg0: i32) -> (i32, i32) {
    %c0_i32 = arith.constant 0 : i32
    %c0_i32_0 = arith.constant 0 : i32
    %c0_i32_1 = arith.constant 0 : i32
    return %c0_i32, %c0_i32_0 : i32, i32
  }
  func.func @transform_7(%arg0: i32) -> (i32, i32) {
    %c0_i32 = arith.constant 0 : i32
    %c0_i32_0 = arith.constant 0 : i32
    %c0_i32_1 = arith.constant 0 : i32
    return %c0_i32, %c0_i32_0 : i32, i32
  }
  func.func @transform_8(%arg0: i32) -> (i32, i32, i32) {
    %c0_i32 = arith.constant 0 : i32
    %c0_i32_0 = arith.constant 0 : i32
    %c0_i32_1 = arith.constant 0 : i32
    %c0_i32_2 = arith.constant 0 : i32
    return %c0_i32, %c0_i32_0, %c0_i32_1 : i32, i32, i32
  }
  func.func @transform_9(%arg0: i32) -> (i32, i32, i32) {
    %c0_i32 = arith.constant 0 : i32
    %c0_i32_0 = arith.constant 0 : i32
    %c0_i32_1 = arith.constant 0 : i32
    %c0_i32_2 = arith.constant 0 : i32
    return %c0_i32, %c0_i32_0, %c0_i32_1 : i32, i32, i32
  }
  func.func @transform_10(%arg0: i32) -> (i32, i32) {
    %c0_i32 = arith.constant 0 : i32
    %c0_i32_0 = arith.constant 0 : i32
    %c0_i32_1 = arith.constant 0 : i32
    return %c0_i32, %c0_i32_0 : i32, i32
  }
  func.func @transform_11(%arg0: i32) -> (i32, i32) {
    %c0_i32 = arith.constant 0 : i32
    %c0_i32_0 = arith.constant 0 : i32
    %c0_i32_1 = arith.constant 0 : i32
    return %c0_i32, %c0_i32_0 : i32, i32
  }
  func.func @transform_12(%arg0: i32) -> (i32, i32) {
    %c0_i32 = arith.constant 0 : i32
    %c0_i32_0 = arith.constant 0 : i32
    %c0_i32_1 = arith.constant 0 : i32
    return %c0_i32, %c0_i32_0 : i32, i32
  }
  func.func @transform_13(%arg0: i32) -> (i32, i32) {
    %c0_i32 = arith.constant 0 : i32
    %c0_i32_0 = arith.constant 0 : i32
    %c0_i32_1 = arith.constant 0 : i32
    return %c0_i32, %c0_i32_0 : i32, i32
  }
  func.func @transform_14(%arg0: i32) -> (i32, i32) {
    %c0_i32 = arith.constant 0 : i32
    %c0_i32_0 = arith.constant 0 : i32
    %c0_i32_1 = arith.constant 0 : i32
    return %c0_i32, %c0_i32_0 : i32, i32
  }
  func.func @transform_15(%arg0: i32) -> (i32, i32) {
    %c0_i32 = arith.constant 0 : i32
    %c0_i32_0 = arith.constant 0 : i32
    %c0_i32_1 = arith.constant 0 : i32
    return %c0_i32, %c0_i32_0 : i32, i32
  }
  func.func @transform_16(%arg0: i32) -> (i32, i32) {
    %c0_i32 = arith.constant 0 : i32
    %c0_i32_0 = arith.constant 0 : i32
    %c0_i32_1 = arith.constant 0 : i32
    return %c0_i32, %c0_i32_0 : i32, i32
  }
  func.func @transform_17(%arg0: i32) -> (i32, i32) {
    %c0_i32 = arith.constant 0 : i32
    %c0_i32_0 = arith.constant 0 : i32
    %c0_i32_1 = arith.constant 0 : i32
    return %c0_i32, %c0_i32_0 : i32, i32
  }
  func.func @transform_18(%arg0: i32) -> (i32, i32) {
    %c0_i32 = arith.constant 0 : i32
    %c0_i32_0 = arith.constant 0 : i32
    %c0_i32_1 = arith.constant 0 : i32
    return %c0_i32, %c0_i32_0 : i32, i32
  }
  func.func @transform_19(%arg0: i32) -> (i32, i32, i32) {
    %c0_i32 = arith.constant 0 : i32
    %c0_i32_0 = arith.constant 0 : i32
    %c0_i32_1 = arith.constant 0 : i32
    return %arg0, %c0_i32, %c0_i32_0 : i32, i32, i32
  }
}

</mosaic_0001>

<llo_original>
// kernel: forward.1
$region0: #{forward.1}
  #allocation0 [shape = 'u32[]', space=smem, size = 0x4, offset = 0x4, fixed_abs, tag = 'smem constant byte address 0x4 - core index']
  #allocation1 [shape = 'u32[144,128]{1,0:T(1,128)}', space=vmem, size = 0x12000, scoped, tag = 'internal scratch']
  %s0 = inlined_call_operand.vmem [shape: bf16[256,8], index: 0, kind: input, shape index: {}]
  %s1 = inlined_call_operand.vmem [shape: bf16[512,4], index: 1, kind: input, shape index: {}]
  %s2 = inlined_call_operand.vmem [shape: bf16[256,256], index: 2, kind: input, shape index: {}]
  %s3 = inlined_call_operand.vmem [shape: bf16[256,512], index: 3, kind: input, shape index: {}]
  %s4 = inlined_call_operand.vmem [shape: bf16[8,32], index: 4, kind: input, shape index: {}]
  %s5 = inlined_call_operand.vmem [shape: f32[1,32], index: 5, kind: input, shape index: {}]
  %s6 = inlined_call_operand.vmem [shape: bf16[4,32], index: 6, kind: input, shape index: {}]
  %s7 = inlined_call_operand.vmem [shape: f32[1,32], index: 7, kind: input, shape index: {}]
  %s8 = inlined_call_operand.vmem [shape: bf16[3,32,64], index: 8, kind: input, shape index: {}]
  %s9 = inlined_call_operand.vmem [shape: f32[3,1,64], index: 9, kind: input, shape index: {}]
  %s10 = inlined_call_operand.vmem [shape: f32[1,32], index: 10, kind: input, shape index: {}]
  %s11 = inlined_call_operand.vmem [shape: bf16[32,32], index: 11, kind: input, shape index: {}]
  %s12 = inlined_call_operand.vmem [shape: f32[1,32], index: 12, kind: input, shape index: {}]
  %s13 = inlined_call_operand.vmem [shape: f32[1,32], index: 13, kind: input, shape index: {}]
  %s14 = inlined_call_operand.vmem [shape: f32[1,32], index: 14, kind: input, shape index: {}]
  %s15 = inlined_call_operand.vmem [shape: bf16[32,128], index: 15, kind: input, shape index: {}]
  %s16 = inlined_call_operand.vmem [shape: f32[1,128], index: 16, kind: input, shape index: {}]
  %s17 = inlined_call_operand.vmem [shape: bf16[32,128], index: 17, kind: input, shape index: {}]
  %s18 = inlined_call_operand.vmem [shape: bf16[8,128], index: 18, kind: input, shape index: {}]
  %s19 = inlined_call_operand.hbm [shape: f32[2,8,128], index: 19, kind: output, shape index: {}]
  %s20 = sld [smem:[#allocation0]]
  $region188: #{forward.1} parent=0
    _
  %s22 = ssub.s32 1, %s20
  %s23 = scalar_select 0, %s22, %s20
  $region1: #{forward.1} parent=0
    #allocation2 [shape = 'u8[65536]{0}', space=vmem, size = 0x10000, scoped, tag = 'input window, operand 2']
    #allocation3 [shape = 'u8[131072]{0}', space=vmem, size = 0x20000, scoped, tag = 'input window, operand 3']
    #allocation4 [shape = 'u8[8192]{0}', space=vmem, size = 0x2000, scoped, tag = 'output window, operand 0']
    #allocation5 [shape = 's32[2]{0}', space=sflag, size = 0x8, scoped, tag = 'scoped memory for forward.1']
    %24 = vsyncpa [#allocation5], 0
    %s25 = scalar_lea.sflag [#allocation5], 1
    %26 = vsyncpa %s25, 0
    loop: start=0, step=1, limit=4
    $region2: #{forward.1} parent=1 // loop_pre_header
      _
    $region3: #{forward.1} parent=1 // loop_header
      %s28 = sphi 0, %s32
      %p29 = scmp.ge.s32.totalorder %s28, 4
      %s38 = sphi 0, %s40
      %s41 = sphi 0, %s38
      %s42 = sphi 0, %s41
      %s58 = sphi 0, %s42
      %s64 = sphi 0, %s66
      %s67 = sphi 0, %s64
      %s68 = sphi 0, %s67
      %s84 = sphi 0, %s68
      %s92 = sphi 0, %s94
      %s95 = sphi 0, %s92
      %s96 = sphi 0, %s95
      %s112 = sphi 0, %s96
      %s120 = sphi 0, %s122
      %s123 = sphi 0, %s120
      %s124 = sphi 0, %s123
      %s140 = sphi 0, %s124
      %s144 = sphi 0, %s144
      %s146 = sphi 0, %s144
      %s147 = sphi 0, %s146
      %s161 = sphi 0, %s147
      %s165 = sphi 0, %s165
      %s167 = sphi 0, %s165
      %s168 = sphi 0, %s167
      %s182 = sphi 0, %s168
      %s186 = sphi 0, %s186
      %s188 = sphi 0, %s186
      %s189 = sphi 0, %s188
      %s203 = sphi 0, %s189
      %s207 = sphi 0, %s207
      %s209 = sphi 0, %s207
      %s210 = sphi 0, %s209
      %s224 = sphi 0, %s210
      %s228 = sphi 0, %s228
      %s230 = sphi 0, %s228
      %s231 = sphi 0, %s230
      %s245 = sphi 0, %s231
      %s249 = sphi 0, %s249
      %s251 = sphi 0, %s249
      %s252 = sphi 0, %s251
      %s266 = sphi 0, %s252
      %s270 = sphi 0, %s270
      %s272 = sphi 0, %s270
      %s273 = sphi 0, %s272
      %s287 = sphi 0, %s273
      %s291 = sphi 0, %s291
      %s293 = sphi 0, %s291
      %s294 = sphi 0, %s293
      %s308 = sphi 0, %s294
      %s312 = sphi 0, %s312
      %s314 = sphi 0, %s312
      %s315 = sphi 0, %s314
      %s329 = sphi 0, %s315
      %s333 = sphi 0, %s333
      %s335 = sphi 0, %s333
      %s336 = sphi 0, %s335
      %s350 = sphi 0, %s336
      %s354 = sphi 0, %s354
      %s356 = sphi 0, %s354
      %s357 = sphi 0, %s356
      %s371 = sphi 0, %s357
      %s375 = sphi 0, %s375
      %s377 = sphi 0, %s375
      %s378 = sphi 0, %s377
      %s392 = sphi 0, %s378
      %s396 = sphi 0, %s396
      %s398 = sphi 0, %s396
      %s399 = sphi 0, %s398
      %s413 = sphi 0, %s399
      %s417 = sphi 0, %s417
      %s419 = sphi 0, %s417
      %s420 = sphi 0, %s419
      %s434 = sphi 0, %s420
      %s438 = sphi 0, %s438
      %s440 = sphi 0, %s438
      %s441 = sphi 0, %s440
      %s455 = sphi 0, %s441
      %s461 = sphi 0, %s463
      %s464 = sphi 0, %s461
      %s465 = sphi 0, %s464
      %s481 = sphi 0, %s465
    $region4: #{forward.1} parent=1 // loop_header_branch
      %31 = sbr.rel (%p29) target = $region8
    $region5: #{forward.1} parent=1 // loop_body
      %s33 = ssub.s32 %s28, 1
      %s34 = ssub.s32 %s28, 2
      %s35 = sadd.s32 %s28, 1
      %s36 = ssub.s32 %s28, %s35
      %p37 = scmp.eq.s32.totalorder %s36, 0
      %s39 = sadd.s32 %s38, 1
      %s40 = scalar_select %p37, %s38, %s39
      %p43 = pneg %p37
      %p44 = scmp.eq.s32.totalorder %s28, 1
      %p45 = por %p43, %p44
      %p46 = scmp.ne.s32.totalorder %s38, %s41
      %p47 = scmp.eq.s32.totalorder %s28, 0
      %p48 = por %p46, %p47
      %p49 = scmp.ne.s32.totalorder %s38, %s41
      %p50 = scmp.eq.s32.totalorder %s33, 1
      %p51 = por %p49, %p50
      %p52 = scmp.ne.s32.totalorder %s41, %s42
      %p53 = scmp.eq.s32.totalorder %s33, 0
      %p54 = por %p52, %p53
      %p55 = scmp.ne.s32.totalorder %s41, %s42
      %p56 = scmp.eq.s32.totalorder %s34, 1
      %p57 = por %p55, %p56
      %p59 = scmp.ne.s32.totalorder %s42, %s58
      %p60 = scmp.eq.s32.totalorder %s34, 0
      %p61 = por %p59, %p60
      %s62 = ssub.s32 %s28, %s35
      %p63 = scmp.eq.s32.totalorder %s62, 0
      %s65 = sadd.s32 %s64, 1
      %s66 = scalar_select %p63, %s64, %s65
      %p69 = pneg %p63
      %p70 = scmp.eq.s32.totalorder %s28, 1
      %p71 = por %p69, %p70
      %p72 = scmp.ne.s32.totalorder %s64, %s67
      %p73 = scmp.eq.s32.totalorder %s28, 0
      %p74 = por %p72, %p73
      %p75 = scmp.ne.s32.totalorder %s64, %s67
      %p76 = scmp.eq.s32.totalorder %s33, 1
      %p77 = por %p75, %p76
      %p78 = scmp.ne.s32.totalorder %s67, %s68
      %p79 = scmp.eq.s32.totalorder %s33, 0
      %p80 = por %p78, %p79
      %p81 = scmp.ne.s32.totalorder %s67, %s68
      %p82 = scmp.eq.s32.totalorder %s34, 1
      %p83 = por %p81, %p82
      %p85 = scmp.ne.s32.totalorder %s68, %s84
      %p86 = scmp.eq.s32.totalorder %s34, 0
      %p87 = por %p85, %p86
      %s88 = ssub.s32 %s28, %s35
      %s89 = ssub.s32 %s28, %s35
      %s90 = sor.u32 %s88, %s89
      %p91 = scmp.eq.s32.totalorder %s90, 0
      %s93 = sadd.s32 %s92, 1
      %s94 = scalar_select %p91, %s92, %s93
      %p97 = pneg %p91
      %p98 = scmp.eq.s32.totalorder %s28, 1
      %p99 = por %p97, %p98
      %p100 = scmp.ne.s32.totalorder %s92, %s95
      %p101 = scmp.eq.s32.totalorder %s28, 0
      %p102 = por %p100, %p101
      %p103 = scmp.ne.s32.totalorder %s92, %s95
      %p104 = scmp.eq.s32.totalorder %s33, 1
      %p105 = por %p103, %p104
      %p106 = scmp.ne.s32.totalorder %s95, %s96
      %p107 = scmp.eq.s32.totalorder %s33, 0
      %p108 = por %p106, %p107
      %p109 = scmp.ne.s32.totalorder %s95, %s96
      %p110 = scmp.eq.s32.totalorder %s34, 1
      %p111 = por %p109, %p110
      %p113 = scmp.ne.s32.totalorder %s96, %s112
      %p114 = scmp.eq.s32.totalorder %s34, 0
      %p115 = por %p113, %p114
      %s116 = ssub.s32 %s28, %s35
      %s117 = ssub.s32 %s28, %s35
      %s118 = sor.u32 %s116, %s117
      %p119 = scmp.eq.s32.totalorder %s118, 0
      %s121 = sadd.s32 %s120, 1
      %s122 = scalar_select %p119, %s120, %s121
      %p125 = pneg %p119
      %p126 = scmp.eq.s32.totalorder %s28, 1
      %p127 = por %p125, %p126
      %p128 = scmp.ne.s32.totalorder %s120, %s123
      %p129 = scmp.eq.s32.totalorder %s28, 0
      %p130 = por %p128, %p129
      %p131 = scmp.ne.s32.totalorder %s120, %s123
      %p132 = scmp.eq.s32.totalorder %s33, 1
      %p133 = por %p131, %p132
      %p134 = scmp.ne.s32.totalorder %s123, %s124
      %p135 = scmp.eq.s32.totalorder %s33, 0
      %p136 = por %p134, %p135
      %p137 = scmp.ne.s32.totalorder %s123, %s124
      %p138 = scmp.eq.s32.totalorder %s34, 1
      %p139 = por %p137, %p138
      %p141 = scmp.ne.s32.totalorder %s124, %s140
      %p142 = scmp.eq.s32.totalorder %s34, 0
      %p143 = por %p141, %p142
      %s145 = sadd.s32 %s144, 1
      %p148 = scmp.eq.s32.totalorder %s28, 1
      %p149 = scmp.ne.s32.totalorder %s144, %s146
      %p150 = scmp.eq.s32.totalorder %s28, 0
      %p151 = por %p149, %p150
      %p152 = scmp.ne.s32.totalorder %s144, %s146
      %p153 = scmp.eq.s32.totalorder %s33, 1
      %p154 = por %p152, %p153
      %p155 = scmp.ne.s32.totalorder %s146, %s147
      %p156 = scmp.eq.s32.totalorder %s33, 0
      %p157 = por %p155, %p156
      %p158 = scmp.ne.s32.totalorder %s146, %s147
      %p159 = scmp.eq.s32.totalorder %s34, 1
      %p160 = por %p158, %p159
      %p162 = scmp.ne.s32.totalorder %s147, %s161
      %p163 = scmp.eq.s32.totalorder %s34, 0
      %p164 = por %p162, %p163
      %s166 = sadd.s32 %s165, 1
      %p169 = scmp.eq.s32.totalorder %s28, 1
      %p170 = scmp.ne.s32.totalorder %s165, %s167
      %p171 = scmp.eq.s32.totalorder %s28, 0
      %p172 = por %p170, %p171
      %p173 = scmp.ne.s32.totalorder %s165, %s167
      %p174 = scmp.eq.s32.totalorder %s33, 1
      %p175 = por %p173, %p174
      %p176 = scmp.ne.s32.totalorder %s167, %s168
      %p177 = scmp.eq.s32.totalorder %s33, 0
      %p178 = por %p176, %p177
      %p179 = scmp.ne.s32.totalorder %s167, %s168
      %p180 = scmp.eq.s32.totalorder %s34, 1
      %p181 = por %p179, %p180
      %p183 = scmp.ne.s32.totalorder %s168, %s182
      %p184 = scmp.eq.s32.totalorder %s34, 0
      %p185 = por %p183, %p184
      %s187 = sadd.s32 %s186, 1
      %p190 = scmp.eq.s32.totalorder %s28, 1
      %p191 = scmp.ne.s32.totalorder %s186, %s188
      %p192 = scmp.eq.s32.totalorder %s28, 0
      %p193 = por %p191, %p192
      %p194 = scmp.ne.s32.totalorder %s186, %s188
      %p195 = scmp.eq.s32.totalorder %s33, 1
      %p196 = por %p194, %p195
      %p197 = scmp.ne.s32.totalorder %s188, %s189
      %p198 = scmp.eq.s32.totalorder %s33, 0
      %p199 = por %p197, %p198
      %p200 = scmp.ne.s32.totalorder %s188, %s189
      %p201 = scmp.eq.s32.totalorder %s34, 1
      %p202 = por %p200, %p201
      %p204 = scmp.ne.s32.totalorder %s189, %s203
      %p205 = scmp.eq.s32.totalorder %s34, 0
      %p206 = por %p204, %p205
      %s208 = sadd.s32 %s207, 1
      %p211 = scmp.eq.s32.totalorder %s28, 1
      %p212 = scmp.ne.s32.totalorder %s207, %s209
      %p213 = scmp.eq.s32.totalorder %s28, 0
      %p214 = por %p212, %p213
      %p215 = scmp.ne.s32.totalorder %s207, %s209
      %p216 = scmp.eq.s32.totalorder %s33, 1
      %p217 = por %p215, %p216
      %p218 = scmp.ne.s32.totalorder %s209, %s210
      %p219 = scmp.eq.s32.totalorder %s33, 0
      %p220 = por %p218, %p219
      %p221 = scmp.ne.s32.totalorder %s209, %s210
      %p222 = scmp.eq.s32.totalorder %s34, 1
      %p223 = por %p221, %p222
      %p225 = scmp.ne.s32.totalorder %s210, %s224
      %p226 = scmp.eq.s32.totalorder %s34, 0
      %p227 = por %p225, %p226
      %s229 = sadd.s32 %s228, 1
      %p232 = scmp.eq.s32.totalorder %s28, 1
      %p233 = scmp.ne.s32.totalorder %s228, %s230
      %p234 = scmp.eq.s32.totalorder %s28, 0
      %p235 = por %p233, %p234
      %p236 = scmp.ne.s32.totalorder %s228, %s230
      %p237 = scmp.eq.s32.totalorder %s33, 1
      %p238 = por %p236, %p237
      %p239 = scmp.ne.s32.totalorder %s230, %s231
      %p240 = scmp.eq.s32.totalorder %s33, 0
      %p241 = por %p239, %p240
      %p242 = scmp.ne.s32.totalorder %s230, %s231
      %p243 = scmp.eq.s32.totalorder %s34, 1
      %p244 = por %p242, %p243
      %p246 = scmp.ne.s32.totalorder %s231, %s245
      %p247 = scmp.eq.s32.totalorder %s34, 0
      %p248 = por %p246, %p247
      %s250 = sadd.s32 %s249, 1
      %p253 = scmp.eq.s32.totalorder %s28, 1
      %p254 = scmp.ne.s32.totalorder %s249, %s251
      %p255 = scmp.eq.s32.totalorder %s28, 0
      %p256 = por %p254, %p255
      %p257 = scmp.ne.s32.totalorder %s249, %s251
      %p258 = scmp.eq.s32.totalorder %s33, 1
      %p259 = por %p257, %p258
      %p260 = scmp.ne.s32.totalorder %s251, %s252
      %p261 = scmp.eq.s32.totalorder %s33, 0
      %p262 = por %p260, %p261
      %p263 = scmp.ne.s32.totalorder %s251, %s252
      %p264 = scmp.eq.s32.totalorder %s34, 1
      %p265 = por %p263, %p264
      %p267 = scmp.ne.s32.totalorder %s252, %s266
      %p268 = scmp.eq.s32.totalorder %s34, 0
      %p269 = por %p267, %p268
      %s271 = sadd.s32 %s270, 1
      %p274 = scmp.eq.s32.totalorder %s28, 1
      %p275 = scmp.ne.s32.totalorder %s270, %s272
      %p276 = scmp.eq.s32.totalorder %s28, 0
      %p277 = por %p275, %p276
      %p278 = scmp.ne.s32.totalorder %s270, %s272
      %p279 = scmp.eq.s32.totalorder %s33, 1
      %p280 = por %p278, %p279
      %p281 = scmp.ne.s32.totalorder %s272, %s273
      %p282 = scmp.eq.s32.totalorder %s33, 0
      %p283 = por %p281, %p282
      %p284 = scmp.ne.s32.totalorder %s272, %s273
      %p285 = scmp.eq.s32.totalorder %s34, 1
      %p286 = por %p284, %p285
      %p288 = scmp.ne.s32.totalorder %s273, %s287
      %p289 = scmp.eq.s32.totalorder %s34, 0
      %p290 = por %p288, %p289
      %s292 = sadd.s32 %s291, 1
      %p295 = scmp.eq.s32.totalorder %s28, 1
      %p296 = scmp.ne.s32.totalorder %s291, %s293
      %p297 = scmp.eq.s32.totalorder %s28, 0
      %p298 = por %p296, %p297
      %p299 = scmp.ne.s32.totalorder %s291, %s293
      %p300 = scmp.eq.s32.totalorder %s33, 1
      %p301 = por %p299, %p300
      %p302 = scmp.ne.s32.totalorder %s293, %s294
      %p303 = scmp.eq.s32.totalorder %s33, 0
      %p304 = por %p302, %p303
      %p305 = scmp.ne.s32.totalorder %s293, %s294
      %p306 = scmp.eq.s32.totalorder %s34, 1
      %p307 = por %p305, %p306
      %p309 = scmp.ne.s32.totalorder %s294, %s308
      %p310 = scmp.eq.s32.totalorder %s34, 0
      %p311 = por %p309, %p310
      %s313 = sadd.s32 %s312, 1
      %p316 = scmp.eq.s32.totalorder %s28, 1
      %p317 = scmp.ne.s32.totalorder %s312, %s314
      %p318 = scmp.eq.s32.totalorder %s28, 0
      %p319 = por %p317, %p318
      %p320 = scmp.ne.s32.totalorder %s312, %s314
      %p321 = scmp.eq.s32.totalorder %s33, 1
      %p322 = por %p320, %p321
      %p323 = scmp.ne.s32.totalorder %s314, %s315
      %p324 = scmp.eq.s32.totalorder %s33, 0
      %p325 = por %p323, %p324
      %p326 = scmp.ne.s32.totalorder %s314, %s315
      %p327 = scmp.eq.s32.totalorder %s34, 1
      %p328 = por %p326, %p327
      %p330 = scmp.ne.s32.totalorder %s315, %s329
      %p331 = scmp.eq.s32.totalorder %s34, 0
      %p332 = por %p330, %p331
      %s334 = sadd.s32 %s333, 1
      %p337 = scmp.eq.s32.totalorder %s28, 1
      %p338 = scmp.ne.s32.totalorder %s333, %s335
      %p339 = scmp.eq.s32.totalorder %s28, 0
      %p340 = por %p338, %p339
      %p341 = scmp.ne.s32.totalorder %s333, %s335
      %p342 = scmp.eq.s32.totalorder %s33, 1
      %p343 = por %p341, %p342
      %p344 = scmp.ne.s32.totalorder %s335, %s336
      %p345 = scmp.eq.s32.totalorder %s33, 0
      %p346 = por %p344, %p345
      %p347 = scmp.ne.s32.totalorder %s335, %s336
      %p348 = scmp.eq.s32.totalorder %s34, 1
      %p349 = por %p347, %p348
      %p351 = scmp.ne.s32.totalorder %s336, %s350
      %p352 = scmp.eq.s32.totalorder %s34, 0
      %p353 = por %p351, %p352
      %s355 = sadd.s32 %s354, 1
      %p358 = scmp.eq.s32.totalorder %s28, 1
      %p359 = scmp.ne.s32.totalorder %s354, %s356
      %p360 = scmp.eq.s32.totalorder %s28, 0
      %p361 = por %p359, %p360
      %p362 = scmp.ne.s32.totalorder %s354, %s356
      %p363 = scmp.eq.s32.totalorder %s33, 1
      %p364 = por %p362, %p363
      %p365 = scmp.ne.s32.totalorder %s356, %s357
      %p366 = scmp.eq.s32.totalorder %s33, 0
      %p367 = por %p365, %p366
      %p368 = scmp.ne.s32.totalorder %s356, %s357
      %p369 = scmp.eq.s32.totalorder %s34, 1
      %p370 = por %p368, %p369
      %p372 = scmp.ne.s32.totalorder %s357, %s371
      %p373 = scmp.eq.s32.totalorder %s34, 0
      %p374 = por %p372, %p373
      %s376 = sadd.s32 %s375, 1
      %p379 = scmp.eq.s32.totalorder %s28, 1
      %p380 = scmp.ne.s32.totalorder %s375, %s377
      %p381 = scmp.eq.s32.totalorder %s28, 0
      %p382 = por %p380, %p381
      %p383 = scmp.ne.s32.totalorder %s375, %s377
      %p384 = scmp.eq.s32.totalorder %s33, 1
      %p385 = por %p383, %p384
      %p386 = scmp.ne.s32.totalorder %s377, %s378
      %p387 = scmp.eq.s32.totalorder %s33, 0
      %p388 = por %p386, %p387
      %p389 = scmp.ne.s32.totalorder %s377, %s378
      %p390 = scmp.eq.s32.totalorder %s34, 1
      %p391 = por %p389, %p390
      %p393 = scmp.ne.s32.totalorder %s378, %s392
      %p394 = scmp.eq.s32.totalorder %s34, 0
      %p395 = por %p393, %p394
      %s397 = sadd.s32 %s396, 1
      %p400 = scmp.eq.s32.totalorder %s28, 1
      %p401 = scmp.ne.s32.totalorder %s396, %s398
      %p402 = scmp.eq.s32.totalorder %s28, 0
      %p403 = por %p401, %p402
      %p404 = scmp.ne.s32.totalorder %s396, %s398
      %p405 = scmp.eq.s32.totalorder %s33, 1
      %p406 = por %p404, %p405
      %p407 = scmp.ne.s32.totalorder %s398, %s399
      %p408 = scmp.eq.s32.totalorder %s33, 0
      %p409 = por %p407, %p408
      %p410 = scmp.ne.s32.totalorder %s398, %s399
      %p411 = scmp.eq.s32.totalorder %s34, 1
      %p412 = por %p410, %p411
      %p414 = scmp.ne.s32.totalorder %s399, %s413
      %p415 = scmp.eq.s32.totalorder %s34, 0
      %p416 = por %p414, %p415
      %s418 = sadd.s32 %s417, 1
      %p421 = scmp.eq.s32.totalorder %s28, 1
      %p422 = scmp.ne.s32.totalorder %s417, %s419
      %p423 = scmp.eq.s32.totalorder %s28, 0
      %p424 = por %p422, %p423
      %p425 = scmp.ne.s32.totalorder %s417, %s419
      %p426 = scmp.eq.s32.totalorder %s33, 1
      %p427 = por %p425, %p426
      %p428 = scmp.ne.s32.totalorder %s419, %s420
      %p429 = scmp.eq.s32.totalorder %s33, 0
      %p430 = por %p428, %p429
      %p431 = scmp.ne.s32.totalorder %s419, %s420
      %p432 = scmp.eq.s32.totalorder %s34, 1
      %p433 = por %p431, %p432
      %p435 = scmp.ne.s32.totalorder %s420, %s434
      %p436 = scmp.eq.s32.totalorder %s34, 0
      %p437 = por %p435, %p436
      %s439 = sadd.s32 %s438, 1
      %p442 = scmp.eq.s32.totalorder %s28, 1
      %p443 = scmp.ne.s32.totalorder %s438, %s440
      %p444 = scmp.eq.s32.totalorder %s28, 0
      %p445 = por %p443, %p444
      %p446 = scmp.ne.s32.totalorder %s438, %s440
      %p447 = scmp.eq.s32.totalorder %s33, 1
      %p448 = por %p446, %p447
      %p449 = scmp.ne.s32.totalorder %s440, %s441
      %p450 = scmp.eq.s32.totalorder %s33, 0
      %p451 = por %p449, %p450
      %p452 = scmp.ne.s32.totalorder %s440, %s441
      %p453 = scmp.eq.s32.totalorder %s34, 1
      %p454 = por %p452, %p453
      %p456 = scmp.ne.s32.totalorder %s441, %s455
      %p457 = scmp.eq.s32.totalorder %s34, 0
      %p458 = por %p456, %p457
      %s459 = ssub.s32 %s28, %s35
      %p460 = scmp.eq.s32.totalorder %s459, 0
      %s462 = sadd.s32 %s461, 1
      %s463 = scalar_select %p460, %s461, %s462
      %p466 = pneg %p460
      %p467 = scmp.eq.s32.totalorder %s28, 1
      %p468 = por %p466, %p467
      %p469 = scmp.ne.s32.totalorder %s461, %s464
      %p470 = scmp.eq.s32.totalorder %s28, 0
      %p471 = por %p469, %p470
      %p472 = scmp.ne.s32.totalorder %s461, %s464
      %p473 = scmp.eq.s32.totalorder %s33, 1
      %p474 = por %p472, %p473
      %p475 = scmp.ne.s32.totalorder %s464, %s465
      %p476 = scmp.eq.s32.totalorder %s33, 0
      %p477 = por %p475, %p476
      %p478 = scmp.ne.s32.totalorder %s464, %s465
      %p479 = scmp.eq.s32.totalorder %s34, 1
      %p480 = por %p478, %p479
      %p482 = scmp.ne.s32.totalorder %s465, %s481
      %p483 = scmp.eq.s32.totalorder %s34, 0
      %p484 = por %p482, %p483
      %p485 = scmp.le.s32.totalorder 1, %s28
      %p486 = scmp.lt.s32.totalorder %s28, 3
      %p487 = pnand %p485, %p486
      %p488 = pneg %p487
      // Predicated region
      $region9: #{forward.1} parent=5 // pred_check
        _
      $region10: #{forward.1} parent=5 // pred_check_branch
        %490 = sbr.rel (%p487) target = $region12
      $region11: #{forward.1} parent=5 // pred_region
        %s491 = ssub.s32 %s28, 1
        // Predicated region
        $region13: #{forward.1} parent=11 // pred_check
          %p492 = pneg %p157
        $region14: #{forward.1} parent=11 // pred_check_branch
          %494 = sbr.rel (%p492) target = $region16
        $region15: #{forward.1} parent=11 // pred_region
          _
        $region16: #{forward.1} parent=11 // pred_fallthru
          _
        // Predicated region
        $region17: #{forward.1} parent=11 // pred_check
          %p495 = pneg %p178
        $region18: #{forward.1} parent=11 // pred_check_branch
          %497 = sbr.rel (%p495) target = $region20
        $region19: #{forward.1} parent=11 // pred_region
          _
        $region20: #{forward.1} parent=11 // pred_fallthru
          _
        // Predicated region
        $region21: #{forward.1} parent=11 // pred_check
          %p498 = pneg %p199
        $region22: #{forward.1} parent=11 // pred_check_branch
          %500 = sbr.rel (%p498) target = $region24
        $region23: #{forward.1} parent=11 // pred_region
          _
        $region24: #{forward.1} parent=11 // pred_fallthru
          _
        // Predicated region
        $region25: #{forward.1} parent=11 // pred_check
          %p501 = pneg %p220
        $region26: #{forward.1} parent=11 // pred_check_branch
          %503 = sbr.rel (%p501) target = $region28
        $region27: #{forward.1} parent=11 // pred_region
          _
        $region28: #{forward.1} parent=11 // pred_fallthru
          _
        // Predicated region
        $region29: #{forward.1} parent=11 // pred_check
          %p504 = pneg %p241
        $region30: #{forward.1} parent=11 // pred_check_branch
          %506 = sbr.rel (%p504) target = $region32
        $region31: #{forward.1} parent=11 // pred_region
          _
        $region32: #{forward.1} parent=11 // pred_fallthru
          _
        // Predicated region
        $region33: #{forward.1} parent=11 // pred_check
          %p507 = pneg %p262
        $region34: #{forward.1} parent=11 // pred_check_branch
          %509 = sbr.rel (%p507) target = $region36
        $region35: #{forward.1} parent=11 // pred_region
          _
        $region36: #{forward.1} parent=11 // pred_fallthru
          _
        // Predicated region
        $region37: #{forward.1} parent=11 // pred_check
          %p510 = pneg %p283
        $region38: #{forward.1} parent=11 // pred_check_branch
          %512 = sbr.rel (%p510) target = $region40
        $region39: #{forward.1} parent=11 // pred_region
          _
        $region40: #{forward.1} parent=11 // pred_fallthru
          _
        // Predicated region
        $region41: #{forward.1} parent=11 // pred_check
          %p513 = pneg %p304
        $region42: #{forward.1} parent=11 // pred_check_branch
          %515 = sbr.rel (%p513) target = $region44
        $region43: #{forward.1} parent=11 // pred_region
          _
        $region44: #{forward.1} parent=11 // pred_fallthru
          _
        // Predicated region
        $region45: #{forward.1} parent=11 // pred_check
          %p516 = pneg %p325
        $region46: #{forward.1} parent=11 // pred_check_branch
          %518 = sbr.rel (%p516) target = $region48
        $region47: #{forward.1} parent=11 // pred_region
          _
        $region48: #{forward.1} parent=11 // pred_fallthru
          _
        // Predicated region
        $region49: #{forward.1} parent=11 // pred_check
          %p519 = pneg %p346
        $region50: #{forward.1} parent=11 // pred_check_branch
          %521 = sbr.rel (%p519) target = $region52
        $region51: #{forward.1} parent=11 // pred_region
          _
        $region52: #{forward.1} parent=11 // pred_fallthru
          _
        // Predicated region
        $region53: #{forward.1} parent=11 // pred_check
          %p522 = pneg %p367
        $region54: #{forward.1} parent=11 // pred_check_branch
          %524 = sbr.rel (%p522) target = $region56
        $region55: #{forward.1} parent=11 // pred_region
          _
        $region56: #{forward.1} parent=11 // pred_fallthru
          _
        // Predicated region
        $region57: #{forward.1} parent=11 // pred_check
          %p525 = pneg %p388
        $region58: #{forward.1} parent=11 // pred_check_branch
          %527 = sbr.rel (%p525) target = $region60
        $region59: #{forward.1} parent=11 // pred_region
          _
        $region60: #{forward.1} parent=11 // pred_fallthru
          _
        // Predicated region
        $region61: #{forward.1} parent=11 // pred_check
          %p528 = pneg %p409
        $region62: #{forward.1} parent=11 // pred_check_branch
          %530 = sbr.rel (%p528) target = $region64
        $region63: #{forward.1} parent=11 // pred_region
          _
        $region64: #{forward.1} parent=11 // pred_fallthru
          _
        // Predicated region
        $region65: #{forward.1} parent=11 // pred_check
          %p531 = pneg %p430
        $region66: #{forward.1} parent=11 // pred_check_branch
          %533 = sbr.rel (%p531) target = $region68
        $region67: #{forward.1} parent=11 // pred_region
          _
        $region68: #{forward.1} parent=11 // pred_fallthru
          _
        // Predicated region
        $region69: #{forward.1} parent=11 // pred_check
          %p534 = pneg %p451
        $region70: #{forward.1} parent=11 // pred_check_branch
          %536 = sbr.rel (%p534) target = $region72
        $region71: #{forward.1} parent=11 // pred_region
          _
        $region72: #{forward.1} parent=11 // pred_fallthru
          _
      $region12: #{forward.1} parent=5 // pred_fallthru
        _
      %p537 = scmp.lt.s32.totalorder %s28, 2
      // Predicated region
      $region73: #{forward.1} parent=5 // pred_check
        %p538 = pneg %p537
      $region74: #{forward.1} parent=5 // pred_check_branch
        %540 = sbr.rel (%p538) target = $region76
      $region75: #{forward.1} parent=5 // pred_region
        // Predicated region
        $region77: #{forward.1} parent=75 // pred_check
          %p541 = pneg %p48
        $region78: #{forward.1} parent=75 // pred_check_branch
          %543 = sbr.rel (%p541) target = $region80
        $region79: #{forward.1} parent=75 // pred_region
          %s544 = smul.u32 16, %s28
          %p545 = scmp.lt.s32.totalorder %s544, 31
          %s546 = scalar_select %p545, %s544, 31
          %s547 = smul.addr %s546, 4
          %s548 = scalar_lea.vmem %s0, %s547
          %s549 = smul.u32 16, %s28
        $region80: #{forward.1} parent=75 // pred_fallthru
          _
        // Predicated region
        $region81: #{forward.1} parent=75 // pred_check
          %p550 = pneg %p74
        $region82: #{forward.1} parent=75 // pred_check_branch
          %552 = sbr.rel (%p550) target = $region84
        $region83: #{forward.1} parent=75 // pred_region
          %s553 = smul.u32 32, %s28
          %p554 = scmp.lt.s32.totalorder %s553, 63
          %s555 = scalar_select %p554, %s553, 63
          %s556 = smul.addr %s555, 4
          %s557 = scalar_lea.vmem %s1, %s556
          %s558 = smul.u32 32, %s28
        $region84: #{forward.1} parent=75 // pred_fallthru
          _
        // Predicated region
        $region85: #{forward.1} parent=75 // pred_check
          %p559 = pneg %p102
        $region86: #{forward.1} parent=75 // pred_check_branch
          %561 = sbr.rel (%p559) target = $region88
        $region87: #{forward.1} parent=75 // pred_region
          %s562 = sand.u32 %s92, 1
          %s563 = sand.u32 %s92, 1
          %s564 = smul.addr %s563, 64
          %s565 = scalar_lea.vmem [#allocation2], %s564
          %s566 = smul.u32 16, %s28
          %s567 = smul.addr %s566, 2
          %s568 = sadd.s32 %s28, %s567
          %s569 = smul.addr %s568, 4
          %s570 = scalar_lea.vmem %s2, %s569
          // Predicated region
          $region89: #{forward.1} parent=87 // pred_check
            _
          $region90: #{forward.1} parent=87 // pred_check_branch
            %572 = sbr.rel (0) target = $region92
          $region91: #{forward.1} parent=87 // pred_region
            // Predicated region
            $region93: #{forward.1} parent=91 // pred_check
              _
            $region94: #{forward.1} parent=91 // pred_check_branch
              %574 = sbr.rel target = $region96
            $region95: #{forward.1} parent=91 // pred_region
              // Predicated region
              $region108: #{forward.1} parent=95 // pred_check
                _
              $region109: #{forward.1} parent=95 // pred_check_branch
                %620 = sbr.rel (0) target = $region111
              $region110: #{forward.1} parent=95 // pred_region
                loop: start=0, step=1, limit=1
                $region112: #{forward.1} parent=110 // loop_pre_header
                  _
                $region113: #{forward.1} parent=110 // loop_header
                  %s622 = sphi 0, %s626
                  %p623 = scmp.ge.s32.totalorder %s622, 1
                  %s627 = sphi %s570, %s570
                  %s628 = sphi %s565, %s565
                $region114: #{forward.1} parent=110 // loop_header_branch
                  %625 = sbr.rel (%p623) target = $region118
                $region115: #{forward.1} parent=110 // loop_body
                  _
                $region116: #{forward.1} parent=110 // loop_footer
                  %s626 = sadd.s32 1, %s622
                $region117: #{forward.1} parent=110 // loop_footer_branch
                  %621 = sbr.rel target = $region113
                $region118: #{forward.1} parent=110 // loop_exit
                  _
                %s630 = ssub.s32 16, 1
                loop: start=0, step=1, limit=1
                $region119: #{forward.1} parent=110 // loop_pre_header
                  _
                $region120: #{forward.1} parent=110 // loop_header
                  %s632 = sphi 0, %s636
                  %p633 = scmp.ge.s32.totalorder %s632, 1
                  %s637 = sphi %s570, %s570
                  %s638 = sphi %s565, %s565
                $region121: #{forward.1} parent=110 // loop_header_branch
                  %635 = sbr.rel (%p633) target = $region125
                $region122: #{forward.1} parent=110 // loop_body
                  %v639 = vld [vmem:[%s637] sm:%s630]
                  %640 = vst [vmem:[%s638] sm:%s630] %v639
                  %v641 = vld [vmem:[%s637 + $0x8] sm:%s630]
                  %642 = vst [vmem:[%s638 + $0x4] sm:%s630] %v641
                  %v643 = vld [vmem:[%s637 + $0x10] sm:%s630]
                  %644 = vst [vmem:[%s638 + $0x8] sm:%s630] %v643
                  %v645 = vld [vmem:[%s637 + $0x18] sm:%s630]
                  %646 = vst [vmem:[%s638 + $0xc] sm:%s630] %v645
                  %v647 = vld [vmem:[%s637 + $0x20] sm:%s630]
                  %648 = vst [vmem:[%s638 + $0x10] sm:%s630] %v647
                  %v649 = vld [vmem:[%s637 + $0x28] sm:%s630]
                  %650 = vst [vmem:[%s638 + $0x14] sm:%s630] %v649
                  %v651 = vld [vmem:[%s637 + $0x30] sm:%s630]
                  %652 = vst [vmem:[%s638 + $0x18] sm:%s630] %v651
                  %v653 = vld [vmem:[%s637 + $0x38] sm:%s630]
                  %654 = vst [vmem:[%s638 + $0x1c] sm:%s630] %v653
                  %v655 = vld [vmem:[%s637 + $0x40] sm:%s630]
                  %656 = vst [vmem:[%s638 + $0x20] sm:%s630] %v655
                  %v657 = vld [vmem:[%s637 + $0x48] sm:%s630]
                  %658 = vst [vmem:[%s638 + $0x24] sm:%s630] %v657
                  %v659 = vld [vmem:[%s637 + $0x50] sm:%s630]
                  %660 = vst [vmem:[%s638 + $0x28] sm:%s630] %v659
                  %v661 = vld [vmem:[%s637 + $0x58] sm:%s630]
                  %662 = vst [vmem:[%s638 + $0x2c] sm:%s630] %v661
                  %v663 = vld [vmem:[%s637 + $0x60] sm:%s630]
                  %664 = vst [vmem:[%s638 + $0x30] sm:%s630] %v663
                  %v665 = vld [vmem:[%s637 + $0x68] sm:%s630]
                  %666 = vst [vmem:[%s638 + $0x34] sm:%s630] %v665
                  %v667 = vld [vmem:[%s637 + $0x70] sm:%s630]
                  %668 = vst [vmem:[%s638 + $0x38] sm:%s630] %v667
                  %v669 = vld [vmem:[%s637 + $0x78] sm:%s630]
                  %670 = vst [vmem:[%s638 + $0x3c] sm:%s630] %v669
                $region123: #{forward.1} parent=110 // loop_footer
                  %s636 = sadd.s32 1, %s632
                $region124: #{forward.1} parent=110 // loop_footer_branch
                  %631 = sbr.rel target = $region120
                $region125: #{forward.1} parent=110 // loop_exit
                  _
              $region111: #{forward.1} parent=95 // pred_fallthru
                _
            $region96: #{forward.1} parent=91 // pred_fallthru
              _
            // Predicated region
            $region97: #{forward.1} parent=91 // pred_check
              _
            $region98: #{forward.1} parent=91 // pred_check_branch
              %576 = sbr.rel (0) target = $region100
            $region99: #{forward.1} parent=91 // pred_region
              %s578 = ssub.s32 16, 1
              loop: start=0, step=1, limit=1
              $region101: #{forward.1} parent=99 // loop_pre_header
                _
              $region102: #{forward.1} parent=99 // loop_header
                %s580 = sphi 0, %s584
                %p581 = scmp.ge.s32.totalorder %s580, 1
                %s585 = sphi %s570, %s570
                %s586 = sphi %s565, %s565
              $region103: #{forward.1} parent=99 // loop_header_branch
                %583 = sbr.rel (%p581) target = $region107
              $region104: #{forward.1} parent=99 // loop_body
                %v587 = vld [vmem:[%s585] sm:%s578]
                %588 = vst [vmem:[%s586] sm:%s578] %v587
                %v589 = vld [vmem:[%s585 + $0x8] sm:%s578]
                %590 = vst [vmem:[%s586 + $0x4] sm:%s578] %v589
                %v591 = vld [vmem:[%s585 + $0x10] sm:%s578]
                %592 = vst [vmem:[%s586 + $0x8] sm:%s578] %v591
                %v593 = vld [vmem:[%s585 + $0x18] sm:%s578]
                %594 = vst [vmem:[%s586 + $0xc] sm:%s578] %v593
                %v595 = vld [vmem:[%s585 + $0x20] sm:%s578]
                %596 = vst [vmem:[%s586 + $0x10] sm:%s578] %v595
                %v597 = vld [vmem:[%s585 + $0x28] sm:%s578]
                %598 = vst [vmem:[%s586 + $0x14] sm:%s578] %v597
                %v599 = vld [vmem:[%s585 + $0x30] sm:%s578]
                %600 = vst [vmem:[%s586 + $0x18] sm:%s578] %v599
                %v601 = vld [vmem:[%s585 + $0x38] sm:%s578]
                %602 = vst [vmem:[%s586 + $0x1c] sm:%s578] %v601
                %v603 = vld [vmem:[%s585 + $0x40] sm:%s578]
                %604 = vst [vmem:[%s586 + $0x20] sm:%s578] %v603
                %v605 = vld [vmem:[%s585 + $0x48] sm:%s578]
                %606 = vst [vmem:[%s586 + $0x24] sm:%s578] %v605
                %v607 = vld [vmem:[%s585 + $0x50] sm:%s578]
                %608 = vst [vmem:[%s586 + $0x28] sm:%s578] %v607
                %v609 = vld [vmem:[%s585 + $0x58] sm:%s578]
                %610 = vst [vmem:[%s586 + $0x2c] sm:%s578] %v609
                %v611 = vld [vmem:[%s585 + $0x60] sm:%s578]
                %612 = vst [vmem:[%s586 + $0x30] sm:%s578] %v611
                %v613 = vld [vmem:[%s585 + $0x68] sm:%s578]
                %614 = vst [vmem:[%s586 + $0x34] sm:%s578] %v613
                %v615 = vld [vmem:[%s585 + $0x70] sm:%s578]
                %616 = vst [vmem:[%s586 + $0x38] sm:%s578] %v615
                %v617 = vld [vmem:[%s585 + $0x78] sm:%s578]
                %618 = vst [vmem:[%s586 + $0x3c] sm:%s578] %v617
              $region105: #{forward.1} parent=99 // loop_footer
                %s584 = sadd.s32 1, %s580
              $region106: #{forward.1} parent=99 // loop_footer_branch
                %579 = sbr.rel target = $region102
              $region107: #{forward.1} parent=99 // loop_exit
                _
            $region100: #{forward.1} parent=91 // pred_fallthru
              _
          $region92: #{forward.1} parent=87 // pred_fallthru
            _
          %671 = vnop
        $region88: #{forward.1} parent=75 // pred_fallthru
          _
        // Predicated region
        $region126: #{forward.1} parent=75 // pred_check
          %p672 = pneg %p130
        $region127: #{forward.1} parent=75 // pred_check_branch
          %674 = sbr.rel (%p672) target = $region129
        $region128: #{forward.1} parent=75 // pred_region
          %s675 = sand.u32 %s120, 1
          %s676 = sand.u32 %s120, 1
          %s677 = smul.addr %s676, 128
          %s678 = scalar_lea.vmem [#allocation3], %s677
          %s679 = smul.u32 16, %s28
          %s680 = smul.u32 2, %s28
          %s681 = smul.addr %s679, 4
          %s682 = sadd.s32 %s680, %s681
          %s683 = smul.addr %s682, 4
          %s684 = scalar_lea.vmem %s3, %s683
          // Predicated region
          $region130: #{forward.1} parent=128 // pred_check
            _
          $region131: #{forward.1} parent=128 // pred_check_branch
            %686 = sbr.rel (0) target = $region133
          $region132: #{forward.1} parent=128 // pred_region
            // Predicated region
            $region134: #{forward.1} parent=132 // pred_check
              _
            $region135: #{forward.1} parent=132 // pred_check_branch
              %688 = sbr.rel (0) target = $region137
            $region136: #{forward.1} parent=132 // pred_region
              // Predicated region
              $region149: #{forward.1} parent=136 // pred_check
                _
              $region150: #{forward.1} parent=136 // pred_check_branch
                %734 = sbr.rel (0) target = $region152
              $region151: #{forward.1} parent=136 // pred_region
                loop: start=0, step=1, limit=1
                $region153: #{forward.1} parent=151 // loop_pre_header
                  _
                $region154: #{forward.1} parent=151 // loop_header
                  %s736 = sphi 0, %s740
                  %p737 = scmp.ge.s32.totalorder %s736, 1
                  %s741 = sphi %s684, %s684
                  %s742 = sphi %s678, %s678
                $region155: #{forward.1} parent=151 // loop_header_branch
                  %739 = sbr.rel (%p737) target = $region159
                $region156: #{forward.1} parent=151 // loop_body
                  %v743 = vld [vmem:[%s741] sm:$0xff]
                  %744 = vst [vmem:[%s742] sm:$0xff] %v743
                  %v745 = vld [vmem:[%s741 + $0x10] sm:$0xff]
                  %746 = vst [vmem:[%s742 + $0x8] sm:$0xff] %v745
                  %v747 = vld [vmem:[%s741 + $0x20] sm:$0xff]
                  %748 = vst [vmem:[%s742 + $0x10] sm:$0xff] %v747
                  %v749 = vld [vmem:[%s741 + $0x30] sm:$0xff]
                  %750 = vst [vmem:[%s742 + $0x18] sm:$0xff] %v749
                  %v751 = vld [vmem:[%s741 + $0x40] sm:$0xff]
                  %752 = vst [vmem:[%s742 + $0x20] sm:$0xff] %v751
                  %v753 = vld [vmem:[%s741 + $0x50] sm:$0xff]
                  %754 = vst [vmem:[%s742 + $0x28] sm:$0xff] %v753
                  %v755 = vld [vmem:[%s741 + $0x60] sm:$0xff]
                  %756 = vst [vmem:[%s742 + $0x30] sm:$0xff] %v755
                  %v757 = vld [vmem:[%s741 + $0x70] sm:$0xff]
                  %758 = vst [vmem:[%s742 + $0x38] sm:$0xff] %v757
                  %v759 = vld [vmem:[%s741 + $0x80] sm:$0xff]
                  %760 = vst [vmem:[%s742 + $0x40] sm:$0xff] %v759
                  %v761 = vld [vmem:[%s741 + $0x90] sm:$0xff]
                  %762 = vst [vmem:[%s742 + $0x48] sm:$0xff] %v761
                  %v763 = vld [vmem:[%s741 + $0xa0] sm:$0xff]
                  %764 = vst [vmem:[%s742 + $0x50] sm:$0xff] %v763
                  %v765 = vld [vmem:[%s741 + $0xb0] sm:$0xff]
                  %766 = vst [vmem:[%s742 + $0x58] sm:$0xff] %v765
                  %v767 = vld [vmem:[%s741 + $0xc0] sm:$0xff]
                  %768 = vst [vmem:[%s742 + $0x60] sm:$0xff] %v767
                  %v769 = vld [vmem:[%s741 + $0xd0] sm:$0xff]
                  %770 = vst [vmem:[%s742 + $0x68] sm:$0xff] %v769
                  %v771 = vld [vmem:[%s741 + $0xe0] sm:$0xff]
                  %772 = vst [vmem:[%s742 + $0x70] sm:$0xff] %v771
                  %v773 = vld [vmem:[%s741 + $0xf0] sm:$0xff]
                  %774 = vst [vmem:[%s742 + $0x78] sm:$0xff] %v773
                $region157: #{forward.1} parent=151 // loop_footer
                  %s740 = sadd.s32 1, %s736
                $region158: #{forward.1} parent=151 // loop_footer_branch
                  %735 = sbr.rel target = $region154
                $region159: #{forward.1} parent=151 // loop_exit
                  _
              $region152: #{forward.1} parent=136 // pred_fallthru
                _
              // Predicated region
              $region160: #{forward.1} parent=136 // pred_check
                _
              $region161: #{forward.1} parent=136 // pred_check_branch
                %776 = sbr.rel target = $region163
              $region162: #{forward.1} parent=136 // pred_region
                _
              $region163: #{forward.1} parent=136 // pred_fallthru
                _
            $region137: #{forward.1} parent=132 // pred_fallthru
              _
            // Predicated region
            $region138: #{forward.1} parent=132 // pred_check
              _
            $region139: #{forward.1} parent=132 // pred_check_branch
              %690 = sbr.rel target = $region141
            $region140: #{forward.1} parent=132 // pred_region
              %s692 = ssub.s32 256, 1
              loop: start=0, step=1, limit=1
              $region142: #{forward.1} parent=140 // loop_pre_header
                _
              $region143: #{forward.1} parent=140 // loop_header
                %s694 = sphi 0, %s698
                %p695 = scmp.ge.s32.totalorder %s694, 1
                %s699 = sphi %s684, %s684
                %s700 = sphi %s678, %s678
              $region144: #{forward.1} parent=140 // loop_header_branch
                %697 = sbr.rel (%p695) target = $region148
              $region145: #{forward.1} parent=140 // loop_body
                %v701 = vld [vmem:[%s699] sm:%s692]
                %702 = vst [vmem:[%s700] sm:%s692] %v701
                %v703 = vld [vmem:[%s699 + $0x10] sm:%s692]
                %704 = vst [vmem:[%s700 + $0x8] sm:%s692] %v703
                %v705 = vld [vmem:[%s699 + $0x20] sm:%s692]
                %706 = vst [vmem:[%s700 + $0x10] sm:%s692] %v705
                %v707 = vld [vmem:[%s699 + $0x30] sm:%s692]
                %708 = vst [vmem:[%s700 + $0x18] sm:%s692] %v707
                %v709 = vld [vmem:[%s699 + $0x40] sm:%s692]
                %710 = vst [vmem:[%s700 + $0x20] sm:%s692] %v709
                %v711 = vld [vmem:[%s699 + $0x50] sm:%s692]
                %712 = vst [vmem:[%s700 + $0x28] sm:%s692] %v711
                %v713 = vld [vmem:[%s699 + $0x60] sm:%s692]
                %714 = vst [vmem:[%s700 + $0x30] sm:%s692] %v713
                %v715 = vld [vmem:[%s699 + $0x70] sm:%s692]
                %716 = vst [vmem:[%s700 + $0x38] sm:%s692] %v715
                %v717 = vld [vmem:[%s699 + $0x80] sm:%s692]
                %718 = vst [vmem:[%s700 + $0x40] sm:%s692] %v717
                %v719 = vld [vmem:[%s699 + $0x90] sm:%s692]
                %720 = vst [vmem:[%s700 + $0x48] sm:%s692] %v719
                %v721 = vld [vmem:[%s699 + $0xa0] sm:%s692]
                %722 = vst [vmem:[%s700 + $0x50] sm:%s692] %v721
                %v723 = vld [vmem:[%s699 + $0xb0] sm:%s692]
                %724 = vst [vmem:[%s700 + $0x58] sm:%s692] %v723
                %v725 = vld [vmem:[%s699 + $0xc0] sm:%s692]
                %726 = vst [vmem:[%s700 + $0x60] sm:%s692] %v725
                %v727 = vld [vmem:[%s699 + $0xd0] sm:%s692]
                %728 = vst [vmem:[%s700 + $0x68] sm:%s692] %v727
                %v729 = vld [vmem:[%s699 + $0xe0] sm:%s692]
                %730 = vst [vmem:[%s700 + $0x70] sm:%s692] %v729
                %v731 = vld [vmem:[%s699 + $0xf0] sm:%s692]
                %732 = vst [vmem:[%s700 + $0x78] sm:%s692] %v731
              $region146: #{forward.1} parent=140 // loop_footer
                %s698 = sadd.s32 1, %s694
              $region147: #{forward.1} parent=140 // loop_footer_branch
                %693 = sbr.rel target = $region143
              $region148: #{forward.1} parent=140 // loop_exit
                _
            $region141: #{forward.1} parent=132 // pred_fallthru
              _
          $region133: #{forward.1} parent=128 // pred_fallthru
            _
          %777 = vnop
        $region129: #{forward.1} parent=75 // pred_fallthru
          _
      $region76: #{forward.1} parent=5 // pred_fallthru
        _
      %p778 = scmp.le.s32.totalorder 1, %s28
      %p779 = scmp.lt.s32.totalorder %s28, 3
      %p780 = pnand %p778, %p779
      %p781 = pneg %p780
      // Predicated region
      $region164: #{forward.1} parent=5 // pred_check
        _
      $region165: #{forward.1} parent=5 // pred_check_branch
        %783 = sbr.rel (%p780) target = $region167
      $region166: #{forward.1} parent=5 // pred_region
        %s784 = ssub.s32 %s28, 1
        %s785 = sand.u32 %s95, 1
        %s786 = sand.u32 %s95, 1
        %s787 = smul.addr %s786, 64
        %s788 = scalar_lea.vmem [#allocation2], %s787
        // Predicated region
        $region168: #{forward.1} parent=166 // pred_check
          %p789 = pneg %p108
        $region169: #{forward.1} parent=166 // pred_check_branch
          %791 = sbr.rel (%p789) target = $region171
        $region170: #{forward.1} parent=166 // pred_region
          _
        $region171: #{forward.1} parent=166 // pred_fallthru
          _
        %s792 = sand.u32 %s123, 1
        %s793 = sand.u32 %s123, 1
        %s794 = smul.addr %s793, 128
        %s795 = scalar_lea.vmem [#allocation3], %s794
        // Predicated region
        $region172: #{forward.1} parent=166 // pred_check
          %p796 = pneg %p136
        $region173: #{forward.1} parent=166 // pred_check_branch
          %798 = sbr.rel (%p796) target = $region175
        $region174: #{forward.1} parent=166 // pred_region
          _
        $region175: #{forward.1} parent=166 // pred_fallthru
          _
        %s799 = smul.u32 16, %s33
        %p800 = scmp.lt.s32.totalorder %s799, 31
        %s801 = scalar_select %p800, %s799, 31
        %s802 = smul.addr %s801, 4
        %s803 = scalar_lea.vmem %s0, %s802
        %p804 = pneg %p54
        %p805 = pneg %p51
        %s806 = smul.u32 32, %s33
        %p807 = scmp.lt.s32.totalorder %s806, 63
        %s808 = scalar_select %p807, %s806, 63
        %s809 = smul.addr %s808, 4
        %s810 = scalar_lea.vmem %s1, %s809
        %p811 = pneg %p80
        %p812 = pneg %p77
        %s813 = sand.u32 %s95, 1
        %s814 = sand.u32 %s95, 1
        %s815 = smul.addr %s814, 64
        %s816 = scalar_lea.vmem [#allocation2], %s815
        %p817 = pneg %p108
        %p818 = pneg %p105
        %s819 = sand.u32 %s123, 1
        %s820 = sand.u32 %s123, 1
        %s821 = smul.addr %s820, 128
        %s822 = scalar_lea.vmem [#allocation3], %s821
        %p823 = pneg %p136
        %p824 = pneg %p133
        %p825 = pneg %p157
        %p826 = pneg %p154
        %p827 = pneg %p178
        %p828 = pneg %p175
        %p829 = pneg %p199
        %p830 = pneg %p196
        %p831 = pneg %p220
        %p832 = pneg %p217
        %p833 = pneg %p241
        %p834 = pneg %p238
        %p835 = pneg %p262
        %p836 = pneg %p259
        %p837 = pneg %p283
        %p838 = pneg %p280
        %p839 = pneg %p304
        %p840 = pneg %p301
        %p841 = pneg %p325
        %p842 = pneg %p322
        %p843 = pneg %p346
        %p844 = pneg %p343
        %p845 = pneg %p367
        %p846 = pneg %p364
        %p847 = pneg %p388
        %p848 = pneg %p385
        %p849 = pneg %p409
        %p850 = pneg %p406
        %p851 = pneg %p430
        %p852 = pneg %p427
        %p853 = pneg %p451
        %p854 = pneg %p448
        %p855 = pneg %p477
        %p856 = pneg %p474
        %s857 = sand.u32 %s464, 1
        %s858 = scalar_lea.sflag [#allocation5], %s857
        %s859 = sand.u32 %s464, 1
        %s860 = smul.addr %s859, 8
        %s861 = scalar_lea.vmem [#allocation4], %s860
        %s862 = smul.u32 16, %s33
        %p863 = scmp.lt.s32.totalorder %s862, 31
        %s864 = scalar_select %p863, %s862, 31
        %s865 = smul.addr %s864, 4
        %s866 = scalar_lea.vmem %s0, %s865
        %s867 = smul.u32 16, %s33
        %s868 = smul.u32 32, %s33
        %p869 = scmp.lt.s32.totalorder %s868, 63
        %s870 = scalar_select %p869, %s868, 63
        %s871 = smul.addr %s870, 4
        %s872 = scalar_lea.vmem %s1, %s871
        %s873 = smul.u32 32, %s33
        %s874 = smul.u32 16, %s33
        %s875 = smul.u32 16, %s33
        %s876 = smul.u32 2, %s33
        %v878 = vld [vmem:[%s788] sm:$0xf]
        %v879 = vld [vmem:[%s788 + $0x4] sm:$0xf]
        %v880 = vld [vmem:[%s788 + $0x8] sm:$0xf]
        %v881 = vld [vmem:[%s788 + $0xc] sm:$0xf]
        %v882 = vld [vmem:[%s788 + $0x10] sm:$0xf]
        %v883 = vld [vmem:[%s788 + $0x14] sm:$0xf]
        %v884 = vld [vmem:[%s788 + $0x18] sm:$0xf]
        %v885 = vld [vmem:[%s788 + $0x1c] sm:$0xf]
        %v886 = vld [vmem:[%s788 + $0x20] sm:$0xf]
        %v887 = vld [vmem:[%s788 + $0x24] sm:$0xf]
        %v888 = vld [vmem:[%s788 + $0x28] sm:$0xf]
        %v889 = vld [vmem:[%s788 + $0x2c] sm:$0xf]
        %v890 = vld [vmem:[%s788 + $0x30] sm:$0xf]
        %v891 = vld [vmem:[%s788 + $0x34] sm:$0xf]
        %v892 = vld [vmem:[%s788 + $0x38] sm:$0xf]
        %v893 = vld [vmem:[%s788 + $0x3c] sm:$0xf]
        %v894 = vld [vmem:[%s795] sm:$0xff]
        %v895 = vld [vmem:[%s795 + $0x8] sm:$0xff]
        %v896 = vld [vmem:[%s795 + $0x10] sm:$0xff]
        %v897 = vld [vmem:[%s795 + $0x18] sm:$0xff]
        %v898 = vld [vmem:[%s795 + $0x20] sm:$0xff]
        %v899 = vld [vmem:[%s795 + $0x28] sm:$0xff]
        %v900 = vld [vmem:[%s795 + $0x30] sm:$0xff]
        %v901 = vld [vmem:[%s795 + $0x38] sm:$0xff]
        %v902 = vld [vmem:[%s795 + $0x40] sm:$0xff]
        %v903 = vld [vmem:[%s795 + $0x48] sm:$0xff]
        %v904 = vld [vmem:[%s795 + $0x50] sm:$0xff]
        %v905 = vld [vmem:[%s795 + $0x58] sm:$0xff]
        %v906 = vld [vmem:[%s795 + $0x60] sm:$0xff]
        %v907 = vld [vmem:[%s795 + $0x68] sm:$0xff]
        %v908 = vld [vmem:[%s795 + $0x70] sm:$0xff]
        %v909 = vld [vmem:[%s795 + $0x78] sm:$0xff]
        %v910 = vld [vmem:[%s866] sm:$0xf]
        %v911 = vld [vmem:[%s866 + $0x4] sm:$0xf]
        %v912 = vld [vmem:[%s866 + $0x8] sm:$0xf]
        %v913 = vld [vmem:[%s866 + $0xc] sm:$0xf]
        %v914 = vld [vmem:[%s866 + $0x10] sm:$0xf]
        %v915 = vld [vmem:[%s866 + $0x14] sm:$0xf]
        %v916 = vld [vmem:[%s866 + $0x18] sm:$0xf]
        %v917 = vld [vmem:[%s866 + $0x1c] sm:$0xf]
        %v918 = vld [vmem:[%s866 + $0x20] sm:$0xf]
        %v919 = vld [vmem:[%s866 + $0x24] sm:$0xf]
        %v920 = vld [vmem:[%s866 + $0x28] sm:$0xf]
        %v921 = vld [vmem:[%s866 + $0x2c] sm:$0xf]
        %v922 = vld [vmem:[%s866 + $0x30] sm:$0xf]
        %v923 = vld [vmem:[%s866 + $0x34] sm:$0xf]
        %v924 = vld [vmem:[%s866 + $0x38] sm:$0xf]
        %v925 = vld [vmem:[%s866 + $0x3c] sm:$0xf]
        %v926 = vld [vmem:[%s4] sm:$0xf]
        %v927 = vld [vmem:[%s5] sm:$0x1]
        %v929 = vlaneseq
        %v930 = vshrl.u32 %v929, 7
        %v931 = vsub.s32 0, %v930
        %v932 = vrot.slane %v927, %v931
        %v950 = vunpack.c.l.b16 %v910
        %v951 = vunpack.c.l.b16 %v911
        %v952 = vunpack.c.l.b16 %v912
        %v953 = vunpack.c.l.b16 %v913
        %v954 = vunpack.c.l.b16 %v914
        %v955 = vunpack.c.l.b16 %v915
        %v956 = vunpack.c.l.b16 %v916
        %v957 = vunpack.c.l.b16 %v917
        %v958 = vunpack.c.l.b16 %v918
        %v959 = vunpack.c.l.b16 %v919
        %v960 = vunpack.c.l.b16 %v920
        %v961 = vunpack.c.l.b16 %v921
        %v962 = vunpack.c.l.b16 %v922
        %v963 = vunpack.c.l.b16 %v923
        %v964 = vunpack.c.l.b16 %v924
        %v965 = vunpack.c.l.b16 %v925
        %v966 = vpack.c.b16 %v951, %v950
        %v967 = vpack.c.b16 %v953, %v952
        %v968 = vpack.c.b16 %v955, %v954
        %v969 = vpack.c.b16 %v957, %v956
        %v970 = vpack.c.b16 %v959, %v958
        %v971 = vpack.c.b16 %v961, %v960
        %v972 = vpack.c.b16 %v963, %v962
        %v973 = vpack.c.b16 %v965, %v964
        %vm974 = vcmask 64512
        %v976 = vsel %vm974, %v966, 0
        %v979 = vsel %vm974, %v967, 0
        %v982 = vsel %vm974, %v968, 0
        %v985 = vsel %vm974, %v969, 0
        %v988 = vsel %vm974, %v970, 0
        %v991 = vsel %vm974, %v971, 0
        %v994 = vsel %vm974, %v972, 0
        %v997 = vsel %vm974, %v973, 0
        %vm999 = vcmask 1043456
        %v1001 = vsel %vm999, %v926, 0
        %1003 = vmatprep.subr.bf16.mxu0 0
        %1004 = vmatpush1.bf16.msra.mxu0 0
        %1005 = vmatprep.subr.bf16.mxu0 0
        %1006 = vmatpush1.bf16.msra.mxu0 0
        %1007 = vmatprep.subr.bf16.mxu0 0
        %1008 = vmatpush1.bf16.msra.mxu0 0
        %1009 = vmatprep.subr.bf16.mxu0 0
        %1010 = vmatpush1.bf16.msra.mxu0 0
        %1011 = vmatprep.subr.bf16.mxu0 0
        %1012 = vmatpush1.bf16.msra.mxu0 0
        %1013 = vmatprep.subr.bf16.mxu0 0
        %1014 = vmatpush1.bf16.msra.mxu0 0
        %1015 = vmatprep.subr.bf16.mxu0 0
        %1016 = vmatpush1.bf16.msra.mxu0 0
        %1017 = vmatprep.subr.bf16.mxu0 0
        %1018 = vmatpush1.bf16.msra.mxu0 %v1001
        %1019 = vmatprep.subr.bf16.mxu0 0
        %1020 = vmatpush2.bf16.msra.mxu0 0
        %1021 = vmatprep.subr.bf16.mxu0 0
        %1022 = vmatpush2.bf16.msra.mxu0 0
        %1023 = vmatprep.subr.bf16.mxu0 0
        %1024 = vmatpush2.bf16.msra.mxu0 0
        %1025 = vmatprep.subr.bf16.mxu0 0
        %1026 = vmatpush2.bf16.msra.mxu0 0
        %1027 = vmatprep.subr.bf16.mxu0 0
        %1028 = vmatpush2.bf16.msra.mxu0 0
        %1029 = vmatprep.subr.bf16.mxu0 0
        %1030 = vmatpush2.bf16.msra.mxu0 0
        %1031 = vmatprep.subr.bf16.mxu0 0
        %1032 = vmatpush2.bf16.msra.mxu0 0
        %1033 = vmatprep.subr.bf16.mxu0 0
        %1034 = vmatpush2.bf16.msra.mxu0 0
        %1035 = vmatprep.mubr.bf16.mxu0 0
        %1036 = vmatmul.mubr.bf16.gmra.mxu0 %v976
        %v1037 = vpop.f32.mrf.mxu0
        %v1038 = vadd.f32 %v932, %v1037
        %v1039 = vpop.f32.mrf.mxu0
        %v1040 = vpop.f32.mrf.mxu0
        %v1041 = vadd.f32 %v932, %v1040
        %v1042 = vpop.f32.mrf.mxu0
        %1043 = vmatprep.mubr.bf16.mxu0 0
        %1044 = vmatmul.mubr.bf16.gmra.mxu0 %v979
        %v1045 = vpop.f32.mrf.mxu0
        %v1046 = vadd.f32 %v932, %v1045
        %v1047 = vpop.f32.mrf.mxu0
        %v1048 = vpop.f32.mrf.mxu0
        %v1049 = vadd.f32 %v932, %v1048
        %v1050 = vpop.f32.mrf.mxu0
        %1051 = vmatprep.mubr.bf16.mxu0 0
        %1052 = vmatmul.mubr.bf16.gmra.mxu0 %v982
        %v1053 = vpop.f32.mrf.mxu0
        %v1054 = vadd.f32 %v932, %v1053
        %v1055 = vpop.f32.mrf.mxu0
        %v1056 = vpop.f32.mrf.mxu0
        %v1057 = vadd.f32 %v932, %v1056
        %v1058 = vpop.f32.mrf.mxu0
        %1059 = vmatprep.mubr.bf16.mxu0 0
        %1060 = vmatmul.mubr.bf16.gmra.mxu0 %v985
        %v1061 = vpop.f32.mrf.mxu0
        %v1062 = vadd.f32 %v932, %v1061
        %v1063 = vpop.f32.mrf.mxu0
        %v1064 = vpop.f32.mrf.mxu0
        %v1065 = vadd.f32 %v932, %v1064
        %v1066 = vpop.f32.mrf.mxu0
        %1067 = vmatprep.mubr.bf16.mxu0 0
        %1068 = vmatmul.mubr.bf16.gmra.mxu0 %v988
        %v1069 = vpop.f32.mrf.mxu0
        %v1070 = vadd.f32 %v932, %v1069
        %v1071 = vpop.f32.mrf.mxu0
        %v1072 = vpop.f32.mrf.mxu0
        %v1073 = vadd.f32 %v932, %v1072
        %v1074 = vpop.f32.mrf.mxu0
        %1075 = vmatprep.mubr.bf16.mxu0 0
        %1076 = vmatmul.mubr.bf16.gmra.mxu0 %v991
        %v1077 = vpop.f32.mrf.mxu0
        %v1078 = vadd.f32 %v932, %v1077
        %v1079 = vpop.f32.mrf.mxu0
        %v1080 = vpop.f32.mrf.mxu0
        %v1081 = vadd.f32 %v932, %v1080
        %v1082 = vpop.f32.mrf.mxu0
        %1083 = vmatprep.mubr.bf16.mxu0 0
        %1084 = vmatmul.mubr.bf16.gmra.mxu0 %v994
        %v1085 = vpop.f32.mrf.mxu0
        %v1086 = vadd.f32 %v932, %v1085
        %v1087 = vpop.f32.mrf.mxu0
        %v1088 = vpop.f32.mrf.mxu0
        %v1089 = vadd.f32 %v932, %v1088
        %v1090 = vpop.f32.mrf.mxu0
        %1091 = vmatprep.mubr.bf16.mxu0 0
        %1092 = vmatmul.mubr.bf16.gmra.mxu0 %v997
        %v1093 = vpop.f32.mrf.mxu0
        %v1094 = vadd.f32 %v932, %v1093
        %v1095 = vpop.f32.mrf.mxu0
        %v1096 = vpop.f32.mrf.mxu0
        %v1097 = vadd.f32 %v932, %v1096
        %v1098 = vpop.f32.mrf.mxu0
        %1099 = vdwg.mxu0
        %v1100 = vld [vmem:[%s872] sm:$0xf]
        %v1101 = vld [vmem:[%s872 + $0x4] sm:$0xf]
        %v1102 = vld [vmem:[%s872 + $0x8] sm:$0xf]
        %v1103 = vld [vmem:[%s872 + $0xc] sm:$0xf]
        %v1104 = vld [vmem:[%s872 + $0x10] sm:$0xf]
        %v1105 = vld [vmem:[%s872 + $0x14] sm:$0xf]
        %v1106 = vld [vmem:[%s872 + $0x18] sm:$0xf]
        %v1107 = vld [vmem:[%s872 + $0x1c] sm:$0xf]
        %v1108 = vld [vmem:[%s872 + $0x20] sm:$0xf]
        %v1109 = vld [vmem:[%s872 + $0x24] sm:$0xf]
        %v1110 = vld [vmem:[%s872 + $0x28] sm:$0xf]
        %v1111 = vld [vmem:[%s872 + $0x2c] sm:$0xf]
        %v1112 = vld [vmem:[%s872 + $0x30] sm:$0xf]
        %v1113 = vld [vmem:[%s872 + $0x34] sm:$0xf]
        %v1114 = vld [vmem:[%s872 + $0x38] sm:$0xf]
        %v1115 = vld [vmem:[%s872 + $0x3c] sm:$0xf]
        %v1116 = vld [vmem:[%s872 + $0x40] sm:$0xf]
        %v1117 = vld [vmem:[%s872 + $0x44] sm:$0xf]
        %v1118 = vld [vmem:[%s872 + $0x48] sm:$0xf]
        %v1119 = vld [vmem:[%s872 + $0x4c] sm:$0xf]
        %v1120 = vld [vmem:[%s872 + $0x50] sm:$0xf]
        %v1121 = vld [vmem:[%s872 + $0x54] sm:$0xf]
        %v1122 = vld [vmem:[%s872 + $0x58] sm:$0xf]
        %v1123 = vld [vmem:[%s872 + $0x5c] sm:$0xf]
        %v1124 = vld [vmem:[%s872 + $0x60] sm:$0xf]
        %v1125 = vld [vmem:[%s872 + $0x64] sm:$0xf]
        %v1126 = vld [vmem:[%s872 + $0x68] sm:$0xf]
        %v1127 = vld [vmem:[%s872 + $0x6c] sm:$0xf]
        %v1128 = vld [vmem:[%s872 + $0x70] sm:$0xf]
        %v1129 = vld [vmem:[%s872 + $0x74] sm:$0xf]
        %v1130 = vld [vmem:[%s872 + $0x78] sm:$0xf]
        %v1131 = vld [vmem:[%s872 + $0x7c] sm:$0xf]
        %v1132 = vld [vmem:[%s6] sm:$0x3]
        %v1133 = vld [vmem:[%s7] sm:$0x1]
        %v1135 = vlaneseq
        %v1136 = vshrl.u32 %v1135, 7
        %v1137 = vsub.s32 0, %v1136
        %v1138 = vrot.slane %v1133, %v1137
        %v1172 = vunpack.c.l.b16 %v1100
        %v1173 = vunpack.c.l.b16 %v1101
        %v1174 = vunpack.c.l.b16 %v1102
        %v1175 = vunpack.c.l.b16 %v1103
        %v1176 = vunpack.c.l.b16 %v1104
        %v1177 = vunpack.c.l.b16 %v1105
        %v1178 = vunpack.c.l.b16 %v1106
        %v1179 = vunpack.c.l.b16 %v1107
        %v1180 = vunpack.c.l.b16 %v1108
        %v1181 = vunpack.c.l.b16 %v1109
        %v1182 = vunpack.c.l.b16 %v1110
        %v1183 = vunpack.c.l.b16 %v1111
        %v1184 = vunpack.c.l.b16 %v1112
        %v1185 = vunpack.c.l.b16 %v1113
        %v1186 = vunpack.c.l.b16 %v1114
        %v1187 = vunpack.c.l.b16 %v1115
        %v1188 = vunpack.c.l.b16 %v1116
        %v1189 = vunpack.c.l.b16 %v1117
        %v1190 = vunpack.c.l.b16 %v1118
        %v1191 = vunpack.c.l.b16 %v1119
        %v1192 = vunpack.c.l.b16 %v1120
        %v1193 = vunpack.c.l.b16 %v1121
        %v1194 = vunpack.c.l.b16 %v1122
        %v1195 = vunpack.c.l.b16 %v1123
        %v1196 = vunpack.c.l.b16 %v1124
        %v1197 = vunpack.c.l.b16 %v1125
        %v1198 = vunpack.c.l.b16 %v1126
        %v1199 = vunpack.c.l.b16 %v1127
        %v1200 = vunpack.c.l.b16 %v1128
        %v1201 = vunpack.c.l.b16 %v1129
        %v1202 = vunpack.c.l.b16 %v1130
        %v1203 = vunpack.c.l.b16 %v1131
        %v1204 = vpack.c.b16 %v1173, %v1172
        %v1205 = vpack.c.b16 %v1175, %v1174
        %v1206 = vpack.c.b16 %v1177, %v1176
        %v1207 = vpack.c.b16 %v1179, %v1178
        %v1208 = vpack.c.b16 %v1181, %v1180
        %v1209 = vpack.c.b16 %v1183, %v1182
        %v1210 = vpack.c.b16 %v1185, %v1184
        %v1211 = vpack.c.b16 %v1187, %v1186
        %v1212 = vpack.c.b16 %v1189, %v1188
        %v1213 = vpack.c.b16 %v1191, %v1190
        %v1214 = vpack.c.b16 %v1193, %v1192
        %v1215 = vpack.c.b16 %v1195, %v1194
        %v1216 = vpack.c.b16 %v1197, %v1196
        %v1217 = vpack.c.b16 %v1199, %v1198
        %v1218 = vpack.c.b16 %v1201, %v1200
        %v1219 = vpack.c.b16 %v1203, %v1202
        %vm1220 = vcmask 31744
        %v1222 = vsel %vm1220, %v1204, 0
        %v1225 = vsel %vm1220, %v1205, 0
        %v1228 = vsel %vm1220, %v1206, 0
        %v1231 = vsel %vm1220, %v1207, 0
        %v1234 = vsel %vm1220, %v1208, 0
        %v1237 = vsel %vm1220, %v1209, 0
        %v1240 = vsel %vm1220, %v1210, 0
        %v1243 = vsel %vm1220, %v1211, 0
        %v1246 = vsel %vm1220, %v1212, 0
        %v1249 = vsel %vm1220, %v1213, 0
        %v1252 = vsel %vm1220, %v1214, 0
        %v1255 = vsel %vm1220, %v1215, 0
        %v1258 = vsel %vm1220, %v1216, 0
        %v1261 = vsel %vm1220, %v1217, 0
        %v1264 = vsel %vm1220, %v1218, 0
        %v1267 = vsel %vm1220, %v1219, 0
        %vm1269 = vcmask 1041408
        %v1271 = vsel %vm1269, %v1132, 0
        %1273 = vmatprep.subr.bf16.mxu0 0
        %1274 = vmatpush1.bf16.msra.mxu0 0
        %1275 = vmatprep.subr.bf16.mxu0 0
        %1276 = vmatpush1.bf16.msra.mxu0 0
        %1277 = vmatprep.subr.bf16.mxu0 0
        %1278 = vmatpush1.bf16.msra.mxu0 0
        %1279 = vmatprep.subr.bf16.mxu0 0
        %1280 = vmatpush1.bf16.msra.mxu0 0
        %1281 = vmatprep.subr.bf16.mxu0 0
        %1282 = vmatpush1.bf16.msra.mxu0 0
        %1283 = vmatprep.subr.bf16.mxu0 0
        %1284 = vmatpush1.bf16.msra.mxu0 0
        %1285 = vmatprep.subr.bf16.mxu0 0
        %1286 = vmatpush1.bf16.msra.mxu0 0
        %1287 = vmatprep.subr.bf16.mxu0 0
        %1288 = vmatpush1.bf16.msra.mxu0 %v1271
        %1289 = vmatprep.subr.bf16.mxu0 0
        %1290 = vmatpush2.bf16.msra.mxu0 0
        %1291 = vmatprep.subr.bf16.mxu0 0
        %1292 = vmatpush2.bf16.msra.mxu0 0
        %1293 = vmatprep.subr.bf16.mxu0 0
        %1294 = vmatpush2.bf16.msra.mxu0 0
        %1295 = vmatprep.subr.bf16.mxu0 0
        %1296 = vmatpush2.bf16.msra.mxu0 0
        %1297 = vmatprep.subr.bf16.mxu0 0
        %1298 = vmatpush2.bf16.msra.mxu0 0
        %1299 = vmatprep.subr.bf16.mxu0 0
        %1300 = vmatpush2.bf16.msra.mxu0 0
        %1301 = vmatprep.subr.bf16.mxu0 0
        %1302 = vmatpush2.bf16.msra.mxu0 0
        %1303 = vmatprep.subr.bf16.mxu0 0
        %1304 = vmatpush2.bf16.msra.mxu0 0
        %1305 = vmatprep.mubr.bf16.mxu0 0
        %1306 = vmatmul.mubr.bf16.gmra.mxu0 %v1222
        %v1307 = vpop.f32.mrf.mxu0
        %v1308 = vadd.f32 %v1138, %v1307
        %v1309 = vpop.f32.mrf.mxu0
        %v1310 = vpop.f32.mrf.mxu0
        %v1311 = vadd.f32 %v1138, %v1310
        %v1312 = vpop.f32.mrf.mxu0
        %1313 = vmatprep.mubr.bf16.mxu0 0
        %1314 = vmatmul.mubr.bf16.gmra.mxu0 %v1225
        %v1315 = vpop.f32.mrf.mxu0
        %v1316 = vadd.f32 %v1138, %v1315
        %v1317 = vpop.f32.mrf.mxu0
        %v1318 = vpop.f32.mrf.mxu0
        %v1319 = vadd.f32 %v1138, %v1318
        %v1320 = vpop.f32.mrf.mxu0
        %1321 = vmatprep.mubr.bf16.mxu0 0
        %1322 = vmatmul.mubr.bf16.gmra.mxu0 %v1228
        %v1323 = vpop.f32.mrf.mxu0
        %v1324 = vadd.f32 %v1138, %v1323
        %v1325 = vpop.f32.mrf.mxu0
        %v1326 = vpop.f32.mrf.mxu0
        %v1327 = vadd.f32 %v1138, %v1326
        %v1328 = vpop.f32.mrf.mxu0
        %1329 = vmatprep.mubr.bf16.mxu0 0
        %1330 = vmatmul.mubr.bf16.gmra.mxu0 %v1231
        %v1331 = vpop.f32.mrf.mxu0
        %v1332 = vadd.f32 %v1138, %v1331
        %v1333 = vpop.f32.mrf.mxu0
        %v1334 = vpop.f32.mrf.mxu0
        %v1335 = vadd.f32 %v1138, %v1334
        %v1336 = vpop.f32.mrf.mxu0
        %1337 = vmatprep.mubr.bf16.mxu0 0
        %1338 = vmatmul.mubr.bf16.gmra.mxu0 %v1234
        %v1339 = vpop.f32.mrf.mxu0
        %v1340 = vadd.f32 %v1138, %v1339
        %v1341 = vpop.f32.mrf.mxu0
        %v1342 = vpop.f32.mrf.mxu0
        %v1343 = vadd.f32 %v1138, %v1342
        %v1344 = vpop.f32.mrf.mxu0
        %1345 = vmatprep.mubr.bf16.mxu0 0
        %1346 = vmatmul.mubr.bf16.gmra.mxu0 %v1237
        %v1347 = vpop.f32.mrf.mxu0
        %v1348 = vadd.f32 %v1138, %v1347
        %v1349 = vpop.f32.mrf.mxu0
        %v1350 = vpop.f32.mrf.mxu0
        %v1351 = vadd.f32 %v1138, %v1350
        %v1352 = vpop.f32.mrf.mxu0
        %1353 = vmatprep.mubr.bf16.mxu0 0
        %1354 = vmatmul.mubr.bf16.gmra.mxu0 %v1240
        %v1355 = vpop.f32.mrf.mxu0
        %v1356 = vadd.f32 %v1138, %v1355
        %v1357 = vpop.f32.mrf.mxu0
        %v1358 = vpop.f32.mrf.mxu0
        %v1359 = vadd.f32 %v1138, %v1358
        %v1360 = vpop.f32.mrf.mxu0
        %1361 = vmatprep.mubr.bf16.mxu0 0
        %1362 = vmatmul.mubr.bf16.gmra.mxu0 %v1243
        %v1363 = vpop.f32.mrf.mxu0
        %v1364 = vadd.f32 %v1138, %v1363
        %v1365 = vpop.f32.mrf.mxu0
        %v1366 = vpop.f32.mrf.mxu0
        %v1367 = vadd.f32 %v1138, %v1366
        %v1368 = vpop.f32.mrf.mxu0
        %1369 = vmatprep.mubr.bf16.mxu0 0
        %1370 = vmatmul.mubr.bf16.gmra.mxu0 %v1246
        %v1371 = vpop.f32.mrf.mxu0
        %v1372 = vadd.f32 %v1138, %v1371
        %v1373 = vpop.f32.mrf.mxu0
        %v1374 = vpop.f32.mrf.mxu0
        %v1375 = vadd.f32 %v1138, %v1374
        %v1376 = vpop.f32.mrf.mxu0
        %1377 = vmatprep.mubr.bf16.mxu0 0
        %1378 = vmatmul.mubr.bf16.gmra.mxu0 %v1249
        %v1379 = vpop.f32.mrf.mxu0
        %v1380 = vadd.f32 %v1138, %v1379
        %v1381 = vpop.f32.mrf.mxu0
        %v1382 = vpop.f32.mrf.mxu0
        %v1383 = vadd.f32 %v1138, %v1382
        %v1384 = vpop.f32.mrf.mxu0
        %1385 = vmatprep.mubr.bf16.mxu0 0
        %1386 = vmatmul.mubr.bf16.gmra.mxu0 %v1252
        %v1387 = vpop.f32.mrf.mxu0
        %v1388 = vadd.f32 %v1138, %v1387
        %v1389 = vpop.f32.mrf.mxu0
        %v1390 = vpop.f32.mrf.mxu0
        %v1391 = vadd.f32 %v1138, %v1390
        %v1392 = vpop.f32.mrf.mxu0
        %1393 = vmatprep.mubr.bf16.mxu0 0
        %1394 = vmatmul.mubr.bf16.gmra.mxu0 %v1255
        %v1395 = vpop.f32.mrf.mxu0
        %v1396 = vadd.f32 %v1138, %v1395
        %v1397 = vpop.f32.mrf.mxu0
        %v1398 = vpop.f32.mrf.mxu0
        %v1399 = vadd.f32 %v1138, %v1398
        %v1400 = vpop.f32.mrf.mxu0
        %1401 = vmatprep.mubr.bf16.mxu0 0
        %1402 = vmatmul.mubr.bf16.gmra.mxu0 %v1258
        %v1403 = vpop.f32.mrf.mxu0
        %v1404 = vadd.f32 %v1138, %v1403
        %v1405 = vpop.f32.mrf.mxu0
        %v1406 = vpop.f32.mrf.mxu0
        %v1407 = vadd.f32 %v1138, %v1406
        %v1408 = vpop.f32.mrf.mxu0
        %1409 = vmatprep.mubr.bf16.mxu0 0
        %1410 = vmatmul.mubr.bf16.gmra.mxu0 %v1261
        %v1411 = vpop.f32.mrf.mxu0
        %v1412 = vadd.f32 %v1138, %v1411
        %v1413 = vpop.f32.mrf.mxu0
        %v1414 = vpop.f32.mrf.mxu0
        %v1415 = vadd.f32 %v1138, %v1414
        %v1416 = vpop.f32.mrf.mxu0
        %1417 = vmatprep.mubr.bf16.mxu0 0
        %1418 = vmatmul.mubr.bf16.gmra.mxu0 %v1264
        %v1419 = vpop.f32.mrf.mxu0
        %v1420 = vadd.f32 %v1138, %v1419
        %v1421 = vpop.f32.mrf.mxu0
        %v1422 = vpop.f32.mrf.mxu0
        %v1423 = vadd.f32 %v1138, %v1422
        %v1424 = vpop.f32.mrf.mxu0
        %1425 = vmatprep.mubr.bf16.mxu0 0
        %1426 = vmatmul.mubr.bf16.gmra.mxu0 %v1267
        %v1427 = vpop.f32.mrf.mxu0
        %v1428 = vadd.f32 %v1138, %v1427
        %v1429 = vpop.f32.mrf.mxu0
        %v1430 = vpop.f32.mrf.mxu0
        %v1431 = vadd.f32 %v1138, %v1430
        %v1432 = vpop.f32.mrf.mxu0
        %1433 = vdwg.mxu0
        %v1434 = vpack.c.bf16 %v1311, %v1308
        %v1435 = vpack.c.bf16 %v1319, %v1316
        %v1436 = vpack.c.bf16 %v1327, %v1324
        %v1437 = vpack.c.bf16 %v1335, %v1332
        %v1438 = vpack.c.bf16 %v1343, %v1340
        %v1439 = vpack.c.bf16 %v1351, %v1348
        %v1440 = vpack.c.bf16 %v1359, %v1356
        %v1441 = vpack.c.bf16 %v1367, %v1364
        %v1442 = vpack.c.bf16 %v1375, %v1372
        %v1443 = vpack.c.bf16 %v1383, %v1380
        %v1444 = vpack.c.bf16 %v1391, %v1388
        %v1445 = vpack.c.bf16 %v1399, %v1396
        %v1446 = vpack.c.bf16 %v1407, %v1404
        %v1447 = vpack.c.bf16 %v1415, %v1412
        %v1448 = vpack.c.bf16 %v1423, %v1420
        %v1449 = vpack.c.bf16 %v1431, %v1428
        %v1466 = vunpack.c.l.b16 %v894
        %v1467 = vunpack.c.h.b16 %v894
        %v1468 = vunpack.c.l.b16 %v895
        %v1469 = vunpack.c.h.b16 %v895
        %v1470 = vunpack.c.l.b16 %v896
        %v1471 = vunpack.c.h.b16 %v896
        %v1472 = vunpack.c.l.b16 %v897
        %v1473 = vunpack.c.h.b16 %v897
        %v1474 = vunpack.c.l.b16 %v898
        %v1475 = vunpack.c.h.b16 %v898
        %v1476 = vunpack.c.l.b16 %v899
        %v1477 = vunpack.c.h.b16 %v899
        %v1478 = vunpack.c.l.b16 %v900
        %v1479 = vunpack.c.h.b16 %v900
        %v1480 = vunpack.c.l.b16 %v901
        %v1481 = vunpack.c.h.b16 %v901
        %v1482 = vunpack.c.l.b16 %v902
        %v1483 = vunpack.c.h.b16 %v902
        %v1484 = vunpack.c.l.b16 %v903
        %v1485 = vunpack.c.h.b16 %v903
        %v1486 = vunpack.c.l.b16 %v904
        %v1487 = vunpack.c.h.b16 %v904
        %v1488 = vunpack.c.l.b16 %v905
        %v1489 = vunpack.c.h.b16 %v905
        %v1490 = vunpack.c.l.b16 %v906
        %v1491 = vunpack.c.h.b16 %v906
        %v1492 = vunpack.c.l.b16 %v907
        %v1493 = vunpack.c.h.b16 %v907
        %v1494 = vunpack.c.l.b16 %v908
        %v1495 = vunpack.c.h.b16 %v908
        %v1496 = vunpack.c.l.b16 %v909
        %v1497 = vunpack.c.h.b16 %v909
        %v1498 = vpack.c.b16 %v1468, %v1466
        %v1499 = vpack.c.b16 %v1469, %v1467
        %v1500 = vpack.c.b16 %v1472, %v1470
        %v1501 = vpack.c.b16 %v1473, %v1471
        %v1502 = vpack.c.b16 %v1476, %v1474
        %v1503 = vpack.c.b16 %v1477, %v1475
        %v1504 = vpack.c.b16 %v1480, %v1478
        %v1505 = vpack.c.b16 %v1481, %v1479
        %v1506 = vpack.c.b16 %v1484, %v1482
        %v1507 = vpack.c.b16 %v1485, %v1483
        %v1508 = vpack.c.b16 %v1488, %v1486
        %v1509 = vpack.c.b16 %v1489, %v1487
        %v1510 = vpack.c.b16 %v1492, %v1490
        %v1511 = vpack.c.b16 %v1493, %v1491
        %v1512 = vpack.c.b16 %v1496, %v1494
        %v1513 = vpack.c.b16 %v1497, %v1495
        %1530 = vmatprep.subr.bf16.mxu0 0
        %1531 = vmatpush1.bf16.msra.mxu0 %v1441
        %1532 = vmatprep.subr.bf16.mxu0 0
        %1533 = vmatpush1.bf16.msra.mxu0 %v1440
        %1534 = vmatprep.subr.bf16.mxu0 0
        %1535 = vmatpush1.bf16.msra.mxu0 %v1439
        %1536 = vmatprep.subr.bf16.mxu0 0
        %1537 = vmatpush1.bf16.msra.mxu0 %v1438
        %1538 = vmatprep.subr.bf16.mxu0 0
        %1539 = vmatpush1.bf16.msra.mxu0 %v1437
        %1540 = vmatprep.subr.bf16.mxu0 0
        %1541 = vmatpush1.bf16.msra.mxu0 %v1436
        %1542 = vmatprep.subr.bf16.mxu0 0
        %1543 = vmatpush1.bf16.msra.mxu0 %v1435
        %1544 = vmatprep.subr.bf16.mxu0 0
        %1545 = vmatpush1.bf16.msra.mxu0 %v1434
        %1546 = vmatprep.subr.bf16.mxu0 0
        %1547 = vmatpush2.bf16.msra.mxu0 %v1449
        %1548 = vmatprep.subr.bf16.mxu0 0
        %1549 = vmatpush2.bf16.msra.mxu0 %v1448
        %1550 = vmatprep.subr.bf16.mxu0 0
        %1551 = vmatpush2.bf16.msra.mxu0 %v1447
        %1552 = vmatprep.subr.bf16.mxu0 0
        %1553 = vmatpush2.bf16.msra.mxu0 %v1446
        %1554 = vmatprep.subr.bf16.mxu0 0
        %1555 = vmatpush2.bf16.msra.mxu0 %v1445
        %1556 = vmatprep.subr.bf16.mxu0 0
        %1557 = vmatpush2.bf16.msra.mxu0 %v1444
        %1558 = vmatprep.subr.bf16.mxu0 0
        %1559 = vmatpush2.bf16.msra.mxu0 %v1443
        %1560 = vmatprep.subr.bf16.mxu0 0
        %1561 = vmatpush2.bf16.msra.mxu0 %v1442
        %1562 = vmatprep.mubr.bf16.mxu0 %v1499
        %1563 = vmatmul.mubr.bf16.gmra.mxu0 %v1498
        %v1564 = vpop.f32.mrf.mxu0
        %v1565 = vadd.f32 0.0, %v1564
        %v1566 = vpop.f32.mrf.mxu0
        %v1567 = vpop.f32.mrf.mxu0
        %v1568 = vadd.f32 0.0, %v1567
        %v1569 = vpop.f32.mrf.mxu0
        %1570 = vmatprep.mubr.bf16.mxu0 %v1501
        %1571 = vmatmul.mubr.bf16.gmra.mxu0 %v1500
        %v1572 = vpop.f32.mrf.mxu0
        %v1573 = vadd.f32 0.0, %v1572
        %v1574 = vpop.f32.mrf.mxu0
        %v1575 = vpop.f32.mrf.mxu0
        %v1576 = vadd.f32 0.0, %v1575
        %v1577 = vpop.f32.mrf.mxu0
        %1578 = vmatprep.mubr.bf16.mxu0 %v1503
        %1579 = vmatmul.mubr.bf16.gmra.mxu0 %v1502
        %v1580 = vpop.f32.mrf.mxu0
        %v1581 = vadd.f32 0.0, %v1580
        %v1582 = vpop.f32.mrf.mxu0
        %v1583 = vpop.f32.mrf.mxu0
        %v1584 = vadd.f32 0.0, %v1583
        %v1585 = vpop.f32.mrf.mxu0
        %1586 = vmatprep.mubr.bf16.mxu0 %v1505
        %1587 = vmatmul.mubr.bf16.gmra.mxu0 %v1504
        %v1588 = vpop.f32.mrf.mxu0
        %v1589 = vadd.f32 0.0, %v1588
        %v1590 = vpop.f32.mrf.mxu0
        %v1591 = vpop.f32.mrf.mxu0
        %v1592 = vadd.f32 0.0, %v1591
        %v1593 = vpop.f32.mrf.mxu0
        %1594 = vmatprep.mubr.bf16.mxu0 %v1507
        %1595 = vmatmul.mubr.bf16.gmra.mxu0 %v1506
        %v1596 = vpop.f32.mrf.mxu0
        %v1597 = vadd.f32 0.0, %v1596
        %v1598 = vpop.f32.mrf.mxu0
        %v1599 = vpop.f32.mrf.mxu0
        %v1600 = vadd.f32 0.0, %v1599
        %v1601 = vpop.f32.mrf.mxu0
        %1602 = vmatprep.mubr.bf16.mxu0 %v1509
        %1603 = vmatmul.mubr.bf16.gmra.mxu0 %v1508
        %v1604 = vpop.f32.mrf.mxu0
        %v1605 = vadd.f32 0.0, %v1604
        %v1606 = vpop.f32.mrf.mxu0
        %v1607 = vpop.f32.mrf.mxu0
        %v1608 = vadd.f32 0.0, %v1607
        %v1609 = vpop.f32.mrf.mxu0
        %1610 = vmatprep.mubr.bf16.mxu0 %v1511
        %1611 = vmatmul.mubr.bf16.gmra.mxu0 %v1510
        %v1612 = vpop.f32.mrf.mxu0
        %v1613 = vadd.f32 0.0, %v1612
        %v1614 = vpop.f32.mrf.mxu0
        %v1615 = vpop.f32.mrf.mxu0
        %v1616 = vadd.f32 0.0, %v1615
        %v1617 = vpop.f32.mrf.mxu0
        %1618 = vmatprep.mubr.bf16.mxu0 %v1513
        %1619 = vmatmul.mubr.bf16.gmra.mxu0 %v1512
        %v1620 = vpop.f32.mrf.mxu0
        %v1621 = vadd.f32 0.0, %v1620
        %v1622 = vpop.f32.mrf.mxu0
        %v1623 = vpop.f32.mrf.mxu0
        %v1624 = vadd.f32 0.0, %v1623
        %v1625 = vpop.f32.mrf.mxu0
        %1626 = vdwg.mxu0
        %v1627 = vadd.f32 %v1038, %v1565
        %v1628 = vadd.f32 %v1041, %v1568
        %v1629 = vadd.f32 %v1046, %v1573
        %v1630 = vadd.f32 %v1049, %v1576
        %v1631 = vadd.f32 %v1054, %v1581
        %v1632 = vadd.f32 %v1057, %v1584
        %v1633 = vadd.f32 %v1062, %v1589
        %v1634 = vadd.f32 %v1065, %v1592
        %v1635 = vadd.f32 %v1070, %v1597
        %v1636 = vadd.f32 %v1073, %v1600
        %v1637 = vadd.f32 %v1078, %v1605
        %v1638 = vadd.f32 %v1081, %v1608
        %v1639 = vadd.f32 %v1086, %v1613
        %v1640 = vadd.f32 %v1089, %v1616
        %v1641 = vadd.f32 %v1094, %v1621
        %v1642 = vadd.f32 %v1097, %v1624
        %v1643 = vmax.f32 %v1627, 0.0
        %v1644 = vmax.f32 %v1628, 0.0
        %v1645 = vmax.f32 %v1629, 0.0
        %v1646 = vmax.f32 %v1630, 0.0
        %v1647 = vmax.f32 %v1631, 0.0
        %v1648 = vmax.f32 %v1632, 0.0
        %v1649 = vmax.f32 %v1633, 0.0
        %v1650 = vmax.f32 %v1634, 0.0
        %v1651 = vmax.f32 %v1635, 0.0
        %v1652 = vmax.f32 %v1636, 0.0
        %v1653 = vmax.f32 %v1637, 0.0
        %v1654 = vmax.f32 %v1638, 0.0
        %v1655 = vmax.f32 %v1639, 0.0
        %v1656 = vmax.f32 %v1640, 0.0
        %v1657 = vmax.f32 %v1641, 0.0
        %v1658 = vmax.f32 %v1642, 0.0
        %v1659 = vpack.c.bf16 %v1644, %v1643
        %v1660 = vpack.c.bf16 %v1646, %v1645
        %v1661 = vpack.c.bf16 %v1648, %v1647
        %v1662 = vpack.c.bf16 %v1650, %v1649
        %v1663 = vpack.c.bf16 %v1652, %v1651
        %v1664 = vpack.c.bf16 %v1654, %v1653
        %v1665 = vpack.c.bf16 %v1656, %v1655
        %v1666 = vpack.c.bf16 %v1658, %v1657
        %v1683 = vunpack.c.l.b16 %v878
        %v1684 = vunpack.c.l.b16 %v879
        %v1685 = vunpack.c.l.b16 %v880
        %v1686 = vunpack.c.l.b16 %v881
        %v1687 = vunpack.c.l.b16 %v882
        %v1688 = vunpack.c.l.b16 %v883
        %v1689 = vunpack.c.l.b16 %v884
        %v1690 = vunpack.c.l.b16 %v885
        %v1691 = vunpack.c.l.b16 %v886
        %v1692 = vunpack.c.l.b16 %v887
        %v1693 = vunpack.c.l.b16 %v888
        %v1694 = vunpack.c.l.b16 %v889
        %v1695 = vunpack.c.l.b16 %v890
        %v1696 = vunpack.c.l.b16 %v891
        %v1697 = vunpack.c.l.b16 %v892
        %v1698 = vunpack.c.l.b16 %v893
        %v1699 = vpack.c.b16 %v1684, %v1683
        %v1700 = vpack.c.b16 %v1686, %v1685
        %v1701 = vpack.c.b16 %v1688, %v1687
        %v1702 = vpack.c.b16 %v1690, %v1689
        %v1703 = vpack.c.b16 %v1692, %v1691
        %v1704 = vpack.c.b16 %v1694, %v1693
        %v1705 = vpack.c.b16 %v1696, %v1695
        %v1706 = vpack.c.b16 %v1698, %v1697
        %1715 = vmatprep.subr.bf16.mxu0 0
        %1716 = vmatpush1.bf16.msra.mxu0 %v1666
        %1717 = vmatprep.subr.bf16.mxu0 0
        %1718 = vmatpush1.bf16.msra.mxu0 %v1665
        %1719 = vmatprep.subr.bf16.mxu0 0
        %1720 = vmatpush1.bf16.msra.mxu0 %v1664
        %1721 = vmatprep.subr.bf16.mxu0 0
        %1722 = vmatpush1.bf16.msra.mxu0 %v1663
        %1723 = vmatprep.subr.bf16.mxu0 0
        %1724 = vmatpush1.bf16.msra.mxu0 %v1662
        %1725 = vmatprep.subr.bf16.mxu0 0
        %1726 = vmatpush1.bf16.msra.mxu0 %v1661
        %1727 = vmatprep.subr.bf16.mxu0 0
        %1728 = vmatpush1.bf16.msra.mxu0 %v1660
        %1729 = vmatprep.subr.bf16.mxu0 0
        %1730 = vmatpush1.bf16.msra.mxu0 %v1659
        %1731 = vmatprep.subr.bf16.mxu0 0
        %1732 = vmatpush2.bf16.msra.mxu0 0
        %1733 = vmatprep.subr.bf16.mxu0 0
        %1734 = vmatpush2.bf16.msra.mxu0 0
        %1735 = vmatprep.subr.bf16.mxu0 0
        %1736 = vmatpush2.bf16.msra.mxu0 0
        %1737 = vmatprep.subr.bf16.mxu0 0
        %1738 = vmatpush2.bf16.msra.mxu0 0
        %1739 = vmatprep.subr.bf16.mxu0 0
        %1740 = vmatpush2.bf16.msra.mxu0 0
        %1741 = vmatprep.subr.bf16.mxu0 0
        %1742 = vmatpush2.bf16.msra.mxu0 0
        %1743 = vmatprep.subr.bf16.mxu0 0
        %1744 = vmatpush2.bf16.msra.mxu0 0
        %1745 = vmatprep.subr.bf16.mxu0 0
        %1746 = vmatpush2.bf16.msra.mxu0 0
        %1747 = vmatprep.mubr.bf16.mxu0 0
        %1748 = vmatmul.mubr.bf16.gmra.mxu0 %v1699
        %v1749 = vpop.f32.mrf.mxu0
        %v1750 = vadd.f32 %v1643, %v1749
        %v1751 = vpop.f32.mrf.mxu0
        %v1752 = vpop.f32.mrf.mxu0
        %v1753 = vadd.f32 %v1644, %v1752
        %v1754 = vpop.f32.mrf.mxu0
        %1755 = vmatprep.mubr.bf16.mxu0 0
        %1756 = vmatmul.mubr.bf16.gmra.mxu0 %v1700
        %v1757 = vpop.f32.mrf.mxu0
        %v1758 = vadd.f32 %v1645, %v1757
        %v1759 = vpop.f32.mrf.mxu0
        %v1760 = vpop.f32.mrf.mxu0
        %v1761 = vadd.f32 %v1646, %v1760
        %v1762 = vpop.f32.mrf.mxu0
        %1763 = vmatprep.mubr.bf16.mxu0 0
        %1764 = vmatmul.mubr.bf16.gmra.mxu0 %v1701
        %v1765 = vpop.f32.mrf.mxu0
        %v1766 = vadd.f32 %v1647, %v1765
        %v1767 = vpop.f32.mrf.mxu0
        %v1768 = vpop.f32.mrf.mxu0
        %v1769 = vadd.f32 %v1648, %v1768
        %v1770 = vpop.f32.mrf.mxu0
        %1771 = vmatprep.mubr.bf16.mxu0 0
        %1772 = vmatmul.mubr.bf16.gmra.mxu0 %v1702
        %v1773 = vpop.f32.mrf.mxu0
        %v1774 = vadd.f32 %v1649, %v1773
        %v1775 = vpop.f32.mrf.mxu0
        %v1776 = vpop.f32.mrf.mxu0
        %v1777 = vadd.f32 %v1650, %v1776
        %v1778 = vpop.f32.mrf.mxu0
        %1779 = vmatprep.mubr.bf16.mxu0 0
        %1780 = vmatmul.mubr.bf16.gmra.mxu0 %v1703
        %v1781 = vpop.f32.mrf.mxu0
        %v1782 = vadd.f32 %v1651, %v1781
        %v1783 = vpop.f32.mrf.mxu0
        %v1784 = vpop.f32.mrf.mxu0
        %v1785 = vadd.f32 %v1652, %v1784
        %v1786 = vpop.f32.mrf.mxu0
        %1787 = vmatprep.mubr.bf16.mxu0 0
        %1788 = vmatmul.mubr.bf16.gmra.mxu0 %v1704
        %v1789 = vpop.f32.mrf.mxu0
        %v1790 = vadd.f32 %v1653, %v1789
        %v1791 = vpop.f32.mrf.mxu0
        %v1792 = vpop.f32.mrf.mxu0
        %v1793 = vadd.f32 %v1654, %v1792
        %v1794 = vpop.f32.mrf.mxu0
        %1795 = vmatprep.mubr.bf16.mxu0 0
        %1796 = vmatmul.mubr.bf16.gmra.mxu0 %v1705
        %v1797 = vpop.f32.mrf.mxu0
        %v1798 = vadd.f32 %v1655, %v1797
        %v1799 = vpop.f32.mrf.mxu0
        %v1800 = vpop.f32.mrf.mxu0
        %v1801 = vadd.f32 %v1656, %v1800
        %v1802 = vpop.f32.mrf.mxu0
        %1803 = vmatprep.mubr.bf16.mxu0 0
        %1804 = vmatmul.mubr.bf16.gmra.mxu0 %v1706
        %v1805 = vpop.f32.mrf.mxu0
        %v1806 = vadd.f32 %v1657, %v1805
        %v1807 = vpop.f32.mrf.mxu0
        %v1808 = vpop.f32.mrf.mxu0
        %v1809 = vadd.f32 %v1658, %v1808
        %v1810 = vpop.f32.mrf.mxu0
        %1811 = vdwg.mxu0
        %v1812 = vpack.c.bf16 %v1753, %v1750
        %v1813 = vpack.c.bf16 %v1761, %v1758
        %v1814 = vpack.c.bf16 %v1769, %v1766
        %v1815 = vpack.c.bf16 %v1777, %v1774
        %v1816 = vpack.c.bf16 %v1785, %v1782
        %v1817 = vpack.c.bf16 %v1793, %v1790
        %v1818 = vpack.c.bf16 %v1801, %v1798
        %v1819 = vpack.c.bf16 %v1809, %v1806
        %v1820 = vld [vmem:[%s8] sm:$0xf]
        %v1821 = vld [vmem:[%s8 + $0x4] sm:$0xf]
        %v1822 = vld [vmem:[%s8 + $0x8] sm:$0xf]
        %v1823 = vld [vmem:[%s8 + $0xc] sm:$0xf]
        %v1824 = vld [vmem:[%s9] sm:$0x1]
        %v1826 = vlaneseq
        %v1827 = vshrl.u32 %v1826, 7
        %v1828 = vsub.s32 0, %v1827
        %v1829 = vrot.slane %v1824, %v1828
        %v1835 = vunpack.c.l.b16 %v1820
        %v1836 = vunpack.c.l.b16 %v1821
        %v1837 = vunpack.c.l.b16 %v1822
        %v1838 = vunpack.c.l.b16 %v1823
        %v1839 = vpack.c.b16 %v1836, %v1835
        %v1840 = vpack.c.b16 %v1838, %v1837
        %vm1843 = vcmask 261120
        %v1845 = vsel %vm1843, %v1812, 0
        %v1848 = vsel %vm1843, %v1813, 0
        %v1851 = vsel %vm1843, %v1814, 0
        %v1854 = vsel %vm1843, %v1815, 0
        %v1857 = vsel %vm1843, %v1816, 0
        %v1860 = vsel %vm1843, %v1817, 0
        %v1863 = vsel %vm1843, %v1818, 0
        %v1866 = vsel %vm1843, %v1819, 0
        %1868 = vmatprep.subr.bf16.mxu0 0
        %1869 = vmatpush1.bf16.msra.mxu0 0
        %1870 = vmatprep.subr.bf16.mxu0 0
        %1871 = vmatpush1.bf16.msra.mxu0 0
        %1872 = vmatprep.subr.bf16.mxu0 0
        %1873 = vmatpush1.bf16.msra.mxu0 0
        %1874 = vmatprep.subr.bf16.mxu0 0
        %1875 = vmatpush1.bf16.msra.mxu0 0
        %1876 = vmatprep.subr.bf16.mxu0 0
        %1877 = vmatpush1.bf16.msra.mxu0 0
        %1878 = vmatprep.subr.bf16.mxu0 0
        %1879 = vmatpush1.bf16.msra.mxu0 0
        %1880 = vmatprep.subr.bf16.mxu0 0
        %1881 = vmatpush1.bf16.msra.mxu0 %v1840
        %1882 = vmatprep.subr.bf16.mxu0 0
        %1883 = vmatpush1.bf16.msra.mxu0 %v1839
        %1884 = vmatprep.subr.bf16.mxu0 0
        %1885 = vmatpush2.bf16.msra.mxu0 0
        %1886 = vmatprep.subr.bf16.mxu0 0
        %1887 = vmatpush2.bf16.msra.mxu0 0
        %1888 = vmatprep.subr.bf16.mxu0 0
        %1889 = vmatpush2.bf16.msra.mxu0 0
        %1890 = vmatprep.subr.bf16.mxu0 0
        %1891 = vmatpush2.bf16.msra.mxu0 0
        %1892 = vmatprep.subr.bf16.mxu0 0
        %1893 = vmatpush2.bf16.msra.mxu0 0
        %1894 = vmatprep.subr.bf16.mxu0 0
        %1895 = vmatpush2.bf16.msra.mxu0 0
        %1896 = vmatprep.subr.bf16.mxu0 0
        %1897 = vmatpush2.bf16.msra.mxu0 0
        %1898 = vmatprep.subr.bf16.mxu0 0
        %1899 = vmatpush2.bf16.msra.mxu0 0
        %1900 = vmatprep.mubr.bf16.mxu0 0
        %1901 = vmatmul.mubr.bf16.gmra.mxu0 %v1845
        %v1902 = vpop.f32.mrf.mxu0
        %v1903 = vadd.f32 %v1829, %v1902
        %v1904 = vpop.f32.mrf.mxu0
        %v1905 = vpop.f32.mrf.mxu0
        %v1906 = vadd.f32 %v1829, %v1905
        %v1907 = vpop.f32.mrf.mxu0
        %1908 = vmatprep.mubr.bf16.mxu0 0
        %1909 = vmatmul.mubr.bf16.gmra.mxu0 %v1848
        %v1910 = vpop.f32.mrf.mxu0
        %v1911 = vadd.f32 %v1829, %v1910
        %v1912 = vpop.f32.mrf.mxu0
        %v1913 = vpop.f32.mrf.mxu0
        %v1914 = vadd.f32 %v1829, %v1913
        %v1915 = vpop.f32.mrf.mxu0
        %1916 = vmatprep.mubr.bf16.mxu0 0
        %1917 = vmatmul.mubr.bf16.gmra.mxu0 %v1851
        %v1918 = vpop.f32.mrf.mxu0
        %v1919 = vadd.f32 %v1829, %v1918
        %v1920 = vpop.f32.mrf.mxu0
        %v1921 = vpop.f32.mrf.mxu0
        %v1922 = vadd.f32 %v1829, %v1921
        %v1923 = vpop.f32.mrf.mxu0
        %1924 = vmatprep.mubr.bf16.mxu0 0
        %1925 = vmatmul.mubr.bf16.gmra.mxu0 %v1854
        %v1926 = vpop.f32.mrf.mxu0
        %v1927 = vadd.f32 %v1829, %v1926
        %v1928 = vpop.f32.mrf.mxu0
        %v1929 = vpop.f32.mrf.mxu0
        %v1930 = vadd.f32 %v1829, %v1929
        %v1931 = vpop.f32.mrf.mxu0
        %1932 = vmatprep.mubr.bf16.mxu0 0
        %1933 = vmatmul.mubr.bf16.gmra.mxu0 %v1857
        %v1934 = vpop.f32.mrf.mxu0
        %v1935 = vadd.f32 %v1829, %v1934
        %v1936 = vpop.f32.mrf.mxu0
        %v1937 = vpop.f32.mrf.mxu0
        %v1938 = vadd.f32 %v1829, %v1937
        %v1939 = vpop.f32.mrf.mxu0
        %1940 = vmatprep.mubr.bf16.mxu0 0
        %1941 = vmatmul.mubr.bf16.gmra.mxu0 %v1860
        %v1942 = vpop.f32.mrf.mxu0
        %v1943 = vadd.f32 %v1829, %v1942
        %v1944 = vpop.f32.mrf.mxu0
        %v1945 = vpop.f32.mrf.mxu0
        %v1946 = vadd.f32 %v1829, %v1945
        %v1947 = vpop.f32.mrf.mxu0
        %1948 = vmatprep.mubr.bf16.mxu0 0
        %1949 = vmatmul.mubr.bf16.gmra.mxu0 %v1863
        %v1950 = vpop.f32.mrf.mxu0
        %v1951 = vadd.f32 %v1829, %v1950
        %v1952 = vpop.f32.mrf.mxu0
        %v1953 = vpop.f32.mrf.mxu0
        %v1954 = vadd.f32 %v1829, %v1953
        %v1955 = vpop.f32.mrf.mxu0
        %1956 = vmatprep.mubr.bf16.mxu0 0
        %1957 = vmatmul.mubr.bf16.gmra.mxu0 %v1866
        %v1958 = vpop.f32.mrf.mxu0
        %v1959 = vadd.f32 %v1829, %v1958
        %v1960 = vpop.f32.mrf.mxu0
        %v1961 = vpop.f32.mrf.mxu0
        %v1962 = vadd.f32 %v1829, %v1961
        %v1963 = vpop.f32.mrf.mxu0
        %1964 = vdwg.mxu0
        %v1965 = vpack.c.bf16 %v1906, %v1903
        %v1966 = vpack.c.bf16 %v1914, %v1911
        %v1967 = vpack.c.bf16 %v1922, %v1919
        %v1968 = vpack.c.bf16 %v1930, %v1927
        %v1969 = vpack.c.bf16 %v1938, %v1935
        %v1970 = vpack.c.bf16 %v1946, %v1943
        %v1971 = vpack.c.bf16 %v1954, %v1951
        %v1972 = vpack.c.bf16 %v1962, %v1959
        %v1973 = vadd.f32 %v1903, 0.0
        %v1974 = vadd.f32 %v1906, 0.0
        %v1975 = vadd.f32 %v1911, 0.0
        %v1976 = vadd.f32 %v1914, 0.0
        %v1977 = vadd.f32 %v1919, 0.0
        %v1978 = vadd.f32 %v1922, 0.0
        %v1979 = vadd.f32 %v1927, 0.0
        %v1980 = vadd.f32 %v1930, 0.0
        %v1981 = vadd.f32 %v1935, 0.0
        %v1982 = vadd.f32 %v1938, 0.0
        %v1983 = vadd.f32 %v1943, 0.0
        %v1984 = vadd.f32 %v1946, 0.0
        %v1985 = vadd.f32 %v1951, 0.0
        %v1986 = vadd.f32 %v1954, 0.0
        %v1987 = vadd.f32 %v1959, 0.0
        %v1988 = vadd.f32 %v1962, 0.0
        %1989 = vmatprep.subr.bf16.mxu0 0
        %1990 = vmatpush1.bf16.msra.mxu0 %v1972
        %1991 = vmatprep.subr.bf16.mxu0 0
        %1992 = vmatpush1.bf16.msra.mxu0 %v1971
        %1993 = vmatprep.subr.bf16.mxu0 0
        %1994 = vmatpush1.bf16.msra.mxu0 %v1970
        %1995 = vmatprep.subr.bf16.mxu0 0
        %1996 = vmatpush1.bf16.msra.mxu0 %v1969
        %1997 = vmatprep.subr.bf16.mxu0 0
        %1998 = vmatpush1.bf16.msra.mxu0 %v1968
        %1999 = vmatprep.subr.bf16.mxu0 0
        %2000 = vmatpush1.bf16.msra.mxu0 %v1967
        %2001 = vmatprep.subr.bf16.mxu0 0
        %2002 = vmatpush1.bf16.msra.mxu0 %v1966
        %2003 = vmatprep.subr.bf16.mxu0 0
        %2004 = vmatpush1.bf16.msra.mxu0 %v1965
        %2005 = vmatprep.subr.bf16.mxu0 0
        %2006 = vmatpush2.bf16.msra.mxu0 0
        %2007 = vmatprep.subr.bf16.mxu0 0
        %2008 = vmatpush2.bf16.msra.mxu0 0
        %2009 = vmatprep.subr.bf16.mxu0 0
        %2010 = vmatpush2.bf16.msra.mxu0 0
        %2011 = vmatprep.subr.bf16.mxu0 0
        %2012 = vmatpush2.bf16.msra.mxu0 0
        %2013 = vmatprep.subr.bf16.mxu0 0
        %2014 = vmatpush2.bf16.msra.mxu0 0
        %2015 = vmatprep.subr.bf16.mxu0 0
        %2016 = vmatpush2.bf16.msra.mxu0 0
        %2017 = vmatprep.subr.bf16.mxu0 0
        %2018 = vmatpush2.bf16.msra.mxu0 0
        %2019 = vmatprep.subr.bf16.mxu0 0
        %2020 = vmatpush2.bf16.msra.mxu0 0
        %2021 = vmatprep.mubr.bf16.mxu0 0
        %2022 = vmatmul.mubr.bf16.gmra.mxu0 %v1699
        %v2023 = vpop.f32.mrf.mxu0
        %v2024 = vadd.f32 %v1643, %v2023
        %v2025 = vpop.f32.mrf.mxu0
        %v2026 = vpop.f32.mrf.mxu0
        %v2027 = vadd.f32 %v1644, %v2026
        %v2028 = vpop.f32.mrf.mxu0
        %2029 = vmatprep.mubr.bf16.mxu0 0
        %2030 = vmatmul.mubr.bf16.gmra.mxu0 %v1700
        %v2031 = vpop.f32.mrf.mxu0
        %v2032 = vadd.f32 %v1645, %v2031
        %v2033 = vpop.f32.mrf.mxu0
        %v2034 = vpop.f32.mrf.mxu0
        %v2035 = vadd.f32 %v1646, %v2034
        %v2036 = vpop.f32.mrf.mxu0
        %2037 = vmatprep.mubr.bf16.mxu0 0
        %2038 = vmatmul.mubr.bf16.gmra.mxu0 %v1701
        %v2039 = vpop.f32.mrf.mxu0
        %v2040 = vadd.f32 %v1647, %v2039
        %v2041 = vpop.f32.mrf.mxu0
        %v2042 = vpop.f32.mrf.mxu0
        %v2043 = vadd.f32 %v1648, %v2042
        %v2044 = vpop.f32.mrf.mxu0
        %2045 = vmatprep.mubr.bf16.mxu0 0
        %2046 = vmatmul.mubr.bf16.gmra.mxu0 %v1702
        %v2047 = vpop.f32.mrf.mxu0
        %v2048 = vadd.f32 %v1649, %v2047
        %v2049 = vpop.f32.mrf.mxu0
        %v2050 = vpop.f32.mrf.mxu0
        %v2051 = vadd.f32 %v1650, %v2050
        %v2052 = vpop.f32.mrf.mxu0
        %2053 = vmatprep.mubr.bf16.mxu0 0
        %2054 = vmatmul.mubr.bf16.gmra.mxu0 %v1703
        %v2055 = vpop.f32.mrf.mxu0
        %v2056 = vadd.f32 %v1651, %v2055
        %v2057 = vpop.f32.mrf.mxu0
        %v2058 = vpop.f32.mrf.mxu0
        %v2059 = vadd.f32 %v1652, %v2058
        %v2060 = vpop.f32.mrf.mxu0
        %2061 = vmatprep.mubr.bf16.mxu0 0
        %2062 = vmatmul.mubr.bf16.gmra.mxu0 %v1704
        %v2063 = vpop.f32.mrf.mxu0
        %v2064 = vadd.f32 %v1653, %v2063
        %v2065 = vpop.f32.mrf.mxu0
        %v2066 = vpop.f32.mrf.mxu0
        %v2067 = vadd.f32 %v1654, %v2066
        %v2068 = vpop.f32.mrf.mxu0
        %2069 = vmatprep.mubr.bf16.mxu0 0
        %2070 = vmatmul.mubr.bf16.gmra.mxu0 %v1705
        %v2071 = vpop.f32.mrf.mxu0
        %v2072 = vadd.f32 %v1655, %v2071
        %v2073 = vpop.f32.mrf.mxu0
        %v2074 = vpop.f32.mrf.mxu0
        %v2075 = vadd.f32 %v1656, %v2074
        %v2076 = vpop.f32.mrf.mxu0
        %2077 = vmatprep.mubr.bf16.mxu0 0
        %2078 = vmatmul.mubr.bf16.gmra.mxu0 %v1706
        %v2079 = vpop.f32.mrf.mxu0
        %v2080 = vadd.f32 %v1657, %v2079
        %v2081 = vpop.f32.mrf.mxu0
        %v2082 = vpop.f32.mrf.mxu0
        %v2083 = vadd.f32 %v1658, %v2082
        %v2084 = vpop.f32.mrf.mxu0
        %2085 = vdwg.mxu0
        %v2086 = vpack.c.bf16 %v2027, %v2024
        %v2087 = vpack.c.bf16 %v2035, %v2032
        %v2088 = vpack.c.bf16 %v2043, %v2040
        %v2089 = vpack.c.bf16 %v2051, %v2048
        %v2090 = vpack.c.bf16 %v2059, %v2056
        %v2091 = vpack.c.bf16 %v2067, %v2064
        %v2092 = vpack.c.bf16 %v2075, %v2072
        %v2093 = vpack.c.bf16 %v2083, %v2080
        %s2094 = scalar_lea.vmem %s8, 16
        %v2095 = vld [vmem:[%s2094] sm:$0xf]
        %v2096 = vld [vmem:[%s2094 + $0x4] sm:$0xf]
        %v2097 = vld [vmem:[%s2094 + $0x8] sm:$0xf]
        %v2098 = vld [vmem:[%s2094 + $0xc] sm:$0xf]
        %s2099 = scalar_lea.vmem %s9, 1
        %v2100 = vld [vmem:[%s2099] sm:$0x1]
        %v2102 = vlaneseq
        %v2103 = vshrl.u32 %v2102, 7
        %v2104 = vsub.s32 0, %v2103
        %v2105 = vrot.slane %v2100, %v2104
        %v2111 = vunpack.c.l.b16 %v2095
        %v2112 = vunpack.c.l.b16 %v2096
        %v2113 = vunpack.c.l.b16 %v2097
        %v2114 = vunpack.c.l.b16 %v2098
        %v2115 = vpack.c.b16 %v2112, %v2111
        %v2116 = vpack.c.b16 %v2114, %v2113
        %v2120 = vsel %vm1843, %v2086, 0
        %v2123 = vsel %vm1843, %v2087, 0
        %v2126 = vsel %vm1843, %v2088, 0
        %v2129 = vsel %vm1843, %v2089, 0
        %v2132 = vsel %vm1843, %v2090, 0
        %v2135 = vsel %vm1843, %v2091, 0
        %v2138 = vsel %vm1843, %v2092, 0
        %v2141 = vsel %vm1843, %v2093, 0
        %2143 = vmatprep.subr.bf16.mxu0 0
        %2144 = vmatpush1.bf16.msra.mxu0 0
        %2145 = vmatprep.subr.bf16.mxu0 0
        %2146 = vmatpush1.bf16.msra.mxu0 0
        %2147 = vmatprep.subr.bf16.mxu0 0
        %2148 = vmatpush1.bf16.msra.mxu0 0
        %2149 = vmatprep.subr.bf16.mxu0 0
        %2150 = vmatpush1.bf16.msra.mxu0 0
        %2151 = vmatprep.subr.bf16.mxu0 0
        %2152 = vmatpush1.bf16.msra.mxu0 0
        %2153 = vmatprep.subr.bf16.mxu0 0
        %2154 = vmatpush1.bf16.msra.mxu0 0
        %2155 = vmatprep.subr.bf16.mxu0 0
        %2156 = vmatpush1.bf16.msra.mxu0 %v2116
        %2157 = vmatprep.subr.bf16.mxu0 0
        %2158 = vmatpush1.bf16.msra.mxu0 %v2115
        %2159 = vmatprep.subr.bf16.mxu0 0
        %2160 = vmatpush2.bf16.msra.mxu0 0
        %2161 = vmatprep.subr.bf16.mxu0 0
        %2162 = vmatpush2.bf16.msra.mxu0 0
        %2163 = vmatprep.subr.bf16.mxu0 0
        %2164 = vmatpush2.bf16.msra.mxu0 0
        %2165 = vmatprep.subr.bf16.mxu0 0
        %2166 = vmatpush2.bf16.msra.mxu0 0
        %2167 = vmatprep.subr.bf16.mxu0 0
        %2168 = vmatpush2.bf16.msra.mxu0 0
        %2169 = vmatprep.subr.bf16.mxu0 0
        %2170 = vmatpush2.bf16.msra.mxu0 0
        %2171 = vmatprep.subr.bf16.mxu0 0
        %2172 = vmatpush2.bf16.msra.mxu0 0
        %2173 = vmatprep.subr.bf16.mxu0 0
        %2174 = vmatpush2.bf16.msra.mxu0 0
        %2175 = vmatprep.mubr.bf16.mxu0 0
        %2176 = vmatmul.mubr.bf16.gmra.mxu0 %v2120
        %v2177 = vpop.f32.mrf.mxu0
        %v2178 = vadd.f32 %v2105, %v2177
        %v2179 = vpop.f32.mrf.mxu0
        %v2180 = vpop.f32.mrf.mxu0
        %v2181 = vadd.f32 %v2105, %v2180
        %v2182 = vpop.f32.mrf.mxu0
        %2183 = vmatprep.mubr.bf16.mxu0 0
        %2184 = vmatmul.mubr.bf16.gmra.mxu0 %v2123
        %v2185 = vpop.f32.mrf.mxu0
        %v2186 = vadd.f32 %v2105, %v2185
        %v2187 = vpop.f32.mrf.mxu0
        %v2188 = vpop.f32.mrf.mxu0
        %v2189 = vadd.f32 %v2105, %v2188
        %v2190 = vpop.f32.mrf.mxu0
        %2191 = vmatprep.mubr.bf16.mxu0 0
        %2192 = vmatmul.mubr.bf16.gmra.mxu0 %v2126
        %v2193 = vpop.f32.mrf.mxu0
        %v2194 = vadd.f32 %v2105, %v2193
        %v2195 = vpop.f32.mrf.mxu0
        %v2196 = vpop.f32.mrf.mxu0
        %v2197 = vadd.f32 %v2105, %v2196
        %v2198 = vpop.f32.mrf.mxu0
        %2199 = vmatprep.mubr.bf16.mxu0 0
        %2200 = vmatmul.mubr.bf16.gmra.mxu0 %v2129
        %v2201 = vpop.f32.mrf.mxu0
        %v2202 = vadd.f32 %v2105, %v2201
        %v2203 = vpop.f32.mrf.mxu0
        %v2204 = vpop.f32.mrf.mxu0
        %v2205 = vadd.f32 %v2105, %v2204
        %v2206 = vpop.f32.mrf.mxu0
        %2207 = vmatprep.mubr.bf16.mxu0 0
        %2208 = vmatmul.mubr.bf16.gmra.mxu0 %v2132
        %v2209 = vpop.f32.mrf.mxu0
        %v2210 = vadd.f32 %v2105, %v2209
        %v2211 = vpop.f32.mrf.mxu0
        %v2212 = vpop.f32.mrf.mxu0
        %v2213 = vadd.f32 %v2105, %v2212
        %v2214 = vpop.f32.mrf.mxu0
        %2215 = vmatprep.mubr.bf16.mxu0 0
        %2216 = vmatmul.mubr.bf16.gmra.mxu0 %v2135
        %v2217 = vpop.f32.mrf.mxu0
        %v2218 = vadd.f32 %v2105, %v2217
        %v2219 = vpop.f32.mrf.mxu0
        %v2220 = vpop.f32.mrf.mxu0
        %v2221 = vadd.f32 %v2105, %v2220
        %v2222 = vpop.f32.mrf.mxu0
        %2223 = vmatprep.mubr.bf16.mxu0 0
        %2224 = vmatmul.mubr.bf16.gmra.mxu0 %v2138
        %v2225 = vpop.f32.mrf.mxu0
        %v2226 = vadd.f32 %v2105, %v2225
        %v2227 = vpop.f32.mrf.mxu0
        %v2228 = vpop.f32.mrf.mxu0
        %v2229 = vadd.f32 %v2105, %v2228
        %v2230 = vpop.f32.mrf.mxu0
        %2231 = vmatprep.mubr.bf16.mxu0 0
        %2232 = vmatmul.mubr.bf16.gmra.mxu0 %v2141
        %v2233 = vpop.f32.mrf.mxu0
        %v2234 = vadd.f32 %v2105, %v2233
        %v2235 = vpop.f32.mrf.mxu0
        %v2236 = vpop.f32.mrf.mxu0
        %v2237 = vadd.f32 %v2105, %v2236
        %v2238 = vpop.f32.mrf.mxu0
        %2239 = vdwg.mxu0
        %v2240 = vpack.c.bf16 %v2181, %v2178
        %v2241 = vpack.c.bf16 %v2189, %v2186
        %v2242 = vpack.c.bf16 %v2197, %v2194
        %v2243 = vpack.c.bf16 %v2205, %v2202
        %v2244 = vpack.c.bf16 %v2213, %v2210
        %v2245 = vpack.c.bf16 %v2221, %v2218
        %v2246 = vpack.c.bf16 %v2229, %v2226
        %v2247 = vpack.c.bf16 %v2237, %v2234
        %v2248 = vadd.f32 %v1973, %v2178
        %v2249 = vadd.f32 %v1974, %v2181
        %v2250 = vadd.f32 %v1975, %v2186
        %v2251 = vadd.f32 %v1976, %v2189
        %v2252 = vadd.f32 %v1977, %v2194
        %v2253 = vadd.f32 %v1978, %v2197
        %v2254 = vadd.f32 %v1979, %v2202
        %v2255 = vadd.f32 %v1980, %v2205
        %v2256 = vadd.f32 %v1981, %v2210
        %v2257 = vadd.f32 %v1982, %v2213
        %v2258 = vadd.f32 %v1983, %v2218
        %v2259 = vadd.f32 %v1984, %v2221
        %v2260 = vadd.f32 %v1985, %v2226
        %v2261 = vadd.f32 %v1986, %v2229
        %v2262 = vadd.f32 %v1987, %v2234
        %v2263 = vadd.f32 %v1988, %v2237
        %2264 = vmatprep.subr.bf16.mxu0 0
        %2265 = vmatpush1.bf16.msra.mxu0 %v2247
        %2266 = vmatprep.subr.bf16.mxu0 0
        %2267 = vmatpush1.bf16.msra.mxu0 %v2246
        %2268 = vmatprep.subr.bf16.mxu0 0
        %2269 = vmatpush1.bf16.msra.mxu0 %v2245
        %2270 = vmatprep.subr.bf16.mxu0 0
        %2271 = vmatpush1.bf16.msra.mxu0 %v2244
        %2272 = vmatprep.subr.bf16.mxu0 0
        %2273 = vmatpush1.bf16.msra.mxu0 %v2243
        %2274 = vmatprep.subr.bf16.mxu0 0
        %2275 = vmatpush1.bf16.msra.mxu0 %v2242
        %2276 = vmatprep.subr.bf16.mxu0 0
        %2277 = vmatpush1.bf16.msra.mxu0 %v2241
        %2278 = vmatprep.subr.bf16.mxu0 0
        %2279 = vmatpush1.bf16.msra.mxu0 %v2240
        %2280 = vmatprep.subr.bf16.mxu0 0
        %2281 = vmatpush2.bf16.msra.mxu0 0
        %2282 = vmatprep.subr.bf16.mxu0 0
        %2283 = vmatpush2.bf16.msra.mxu0 0
        %2284 = vmatprep.subr.bf16.mxu0 0
        %2285 = vmatpush2.bf16.msra.mxu0 0
        %2286 = vmatprep.subr.bf16.mxu0 0
        %2287 = vmatpush2.bf16.msra.mxu0 0
        %2288 = vmatprep.subr.bf16.mxu0 0
        %2289 = vmatpush2.bf16.msra.mxu0 0
        %2290 = vmatprep.subr.bf16.mxu0 0
        %2291 = vmatpush2.bf16.msra.mxu0 0
        %2292 = vmatprep.subr.bf16.mxu0 0
        %2293 = vmatpush2.bf16.msra.mxu0 0
        %2294 = vmatprep.subr.bf16.mxu0 0
        %2295 = vmatpush2.bf16.msra.mxu0 0
        %2296 = vmatprep.mubr.bf16.mxu0 0
        %2297 = vmatmul.mubr.bf16.gmra.mxu0 %v1699
        %v2298 = vpop.f32.mrf.mxu0
        %v2299 = vadd.f32 %v1643, %v2298
        %v2300 = vpop.f32.mrf.mxu0
        %v2301 = vpop.f32.mrf.mxu0
        %v2302 = vadd.f32 %v1644, %v2301
        %v2303 = vpop.f32.mrf.mxu0
        %2304 = vmatprep.mubr.bf16.mxu0 0
        %2305 = vmatmul.mubr.bf16.gmra.mxu0 %v1700
        %v2306 = vpop.f32.mrf.mxu0
        %v2307 = vadd.f32 %v1645, %v2306
        %v2308 = vpop.f32.mrf.mxu0
        %v2309 = vpop.f32.mrf.mxu0
        %v2310 = vadd.f32 %v1646, %v2309
        %v2311 = vpop.f32.mrf.mxu0
        %2312 = vmatprep.mubr.bf16.mxu0 0
        %2313 = vmatmul.mubr.bf16.gmra.mxu0 %v1701
        %v2314 = vpop.f32.mrf.mxu0
        %v2315 = vadd.f32 %v1647, %v2314
        %v2316 = vpop.f32.mrf.mxu0
        %v2317 = vpop.f32.mrf.mxu0
        %v2318 = vadd.f32 %v1648, %v2317
        %v2319 = vpop.f32.mrf.mxu0
        %2320 = vmatprep.mubr.bf16.mxu0 0
        %2321 = vmatmul.mubr.bf16.gmra.mxu0 %v1702
        %v2322 = vpop.f32.mrf.mxu0
        %v2323 = vadd.f32 %v1649, %v2322
        %v2324 = vpop.f32.mrf.mxu0
        %v2325 = vpop.f32.mrf.mxu0
        %v2326 = vadd.f32 %v1650, %v2325
        %v2327 = vpop.f32.mrf.mxu0
        %2328 = vmatprep.mubr.bf16.mxu0 0
        %2329 = vmatmul.mubr.bf16.gmra.mxu0 %v1703
        %v2330 = vpop.f32.mrf.mxu0
        %v2331 = vadd.f32 %v1651, %v2330
        %v2332 = vpop.f32.mrf.mxu0
        %v2333 = vpop.f32.mrf.mxu0
        %v2334 = vadd.f32 %v1652, %v2333
        %v2335 = vpop.f32.mrf.mxu0
        %2336 = vmatprep.mubr.bf16.mxu0 0
        %2337 = vmatmul.mubr.bf16.gmra.mxu0 %v1704
        %v2338 = vpop.f32.mrf.mxu0
        %v2339 = vadd.f32 %v1653, %v2338
        %v2340 = vpop.f32.mrf.mxu0
        %v2341 = vpop.f32.mrf.mxu0
        %v2342 = vadd.f32 %v1654, %v2341
        %v2343 = vpop.f32.mrf.mxu0
        %2344 = vmatprep.mubr.bf16.mxu0 0
        %2345 = vmatmul.mubr.bf16.gmra.mxu0 %v1705
        %v2346 = vpop.f32.mrf.mxu0
        %v2347 = vadd.f32 %v1655, %v2346
        %v2348 = vpop.f32.mrf.mxu0
        %v2349 = vpop.f32.mrf.mxu0
        %v2350 = vadd.f32 %v1656, %v2349
        %v2351 = vpop.f32.mrf.mxu0
        %2352 = vmatprep.mubr.bf16.mxu0 0
        %2353 = vmatmul.mubr.bf16.gmra.mxu0 %v1706
        %v2354 = vpop.f32.mrf.mxu0
        %v2355 = vadd.f32 %v1657, %v2354
        %v2356 = vpop.f32.mrf.mxu0
        %v2357 = vpop.f32.mrf.mxu0
        %v2358 = vadd.f32 %v1658, %v2357
        %v2359 = vpop.f32.mrf.mxu0
        %2360 = vdwg.mxu0
        %v2361 = vpack.c.bf16 %v2302, %v2299
        %v2362 = vpack.c.bf16 %v2310, %v2307
        %v2363 = vpack.c.bf16 %v2318, %v2315
        %v2364 = vpack.c.bf16 %v2326, %v2323
        %v2365 = vpack.c.bf16 %v2334, %v2331
        %v2366 = vpack.c.bf16 %v2342, %v2339
        %v2367 = vpack.c.bf16 %v2350, %v2347
        %v2368 = vpack.c.bf16 %v2358, %v2355
        %s2369 = scalar_lea.vmem %s8, 32
        %v2370 = vld [vmem:[%s2369] sm:$0xf]
        %v2371 = vld [vmem:[%s2369 + $0x4] sm:$0xf]
        %v2372 = vld [vmem:[%s2369 + $0x8] sm:$0xf]
        %v2373 = vld [vmem:[%s2369 + $0xc] sm:$0xf]
        %s2374 = scalar_lea.vmem %s9, 2
        %v2375 = vld [vmem:[%s2374] sm:$0x1]
        %v2377 = vlaneseq
        %v2378 = vshrl.u32 %v2377, 7
        %v2379 = vsub.s32 0, %v2378
        %v2380 = vrot.slane %v2375, %v2379
        %v2386 = vunpack.c.l.b16 %v2370
        %v2387 = vunpack.c.l.b16 %v2371
        %v2388 = vunpack.c.l.b16 %v2372
        %v2389 = vunpack.c.l.b16 %v2373
        %v2390 = vpack.c.b16 %v2387, %v2386
        %v2391 = vpack.c.b16 %v2389, %v2388
        %v2395 = vsel %vm1843, %v2361, 0
        %v2398 = vsel %vm1843, %v2362, 0
        %v2401 = vsel %vm1843, %v2363, 0
        %v2404 = vsel %vm1843, %v2364, 0
        %v2407 = vsel %vm1843, %v2365, 0
        %v2410 = vsel %vm1843, %v2366, 0
        %v2413 = vsel %vm1843, %v2367, 0
        %v2416 = vsel %vm1843, %v2368, 0
        %2418 = vmatprep.subr.bf16.mxu0 0
        %2419 = vmatpush1.bf16.msra.mxu0 0
        %2420 = vmatprep.subr.bf16.mxu0 0
        %2421 = vmatpush1.bf16.msra.mxu0 0
        %2422 = vmatprep.subr.bf16.mxu0 0
        %2423 = vmatpush1.bf16.msra.mxu0 0
        %2424 = vmatprep.subr.bf16.mxu0 0
        %2425 = vmatpush1.bf16.msra.mxu0 0
        %2426 = vmatprep.subr.bf16.mxu0 0
        %2427 = vmatpush1.bf16.msra.mxu0 0
        %2428 = vmatprep.subr.bf16.mxu0 0
        %2429 = vmatpush1.bf16.msra.mxu0 0
        %2430 = vmatprep.subr.bf16.mxu0 0
        %2431 = vmatpush1.bf16.msra.mxu0 %v2391
        %2432 = vmatprep.subr.bf16.mxu0 0
        %2433 = vmatpush1.bf16.msra.mxu0 %v2390
        %2434 = vmatprep.subr.bf16.mxu0 0
        %2435 = vmatpush2.bf16.msra.mxu0 0
        %2436 = vmatprep.subr.bf16.mxu0 0
        %2437 = vmatpush2.bf16.msra.mxu0 0
        %2438 = vmatprep.subr.bf16.mxu0 0
        %2439 = vmatpush2.bf16.msra.mxu0 0
        %2440 = vmatprep.subr.bf16.mxu0 0
        %2441 = vmatpush2.bf16.msra.mxu0 0
        %2442 = vmatprep.subr.bf16.mxu0 0
        %2443 = vmatpush2.bf16.msra.mxu0 0
        %2444 = vmatprep.subr.bf16.mxu0 0
        %2445 = vmatpush2.bf16.msra.mxu0 0
        %2446 = vmatprep.subr.bf16.mxu0 0
        %2447 = vmatpush2.bf16.msra.mxu0 0
        %2448 = vmatprep.subr.bf16.mxu0 0
        %2449 = vmatpush2.bf16.msra.mxu0 0
        %2450 = vmatprep.mubr.bf16.mxu0 0
        %2451 = vmatmul.mubr.bf16.gmra.mxu0 %v2395
        %v2452 = vpop.f32.mrf.mxu0
        %v2453 = vadd.f32 %v2380, %v2452
        %v2454 = vpop.f32.mrf.mxu0
        %v2455 = vpop.f32.mrf.mxu0
        %v2456 = vadd.f32 %v2380, %v2455
        %v2457 = vpop.f32.mrf.mxu0
        %2458 = vmatprep.mubr.bf16.mxu0 0
        %2459 = vmatmul.mubr.bf16.gmra.mxu0 %v2398
        %v2460 = vpop.f32.mrf.mxu0
        %v2461 = vadd.f32 %v2380, %v2460
        %v2462 = vpop.f32.mrf.mxu0
        %v2463 = vpop.f32.mrf.mxu0
        %v2464 = vadd.f32 %v2380, %v2463
        %v2465 = vpop.f32.mrf.mxu0
        %2466 = vmatprep.mubr.bf16.mxu0 0
        %2467 = vmatmul.mubr.bf16.gmra.mxu0 %v2401
        %v2468 = vpop.f32.mrf.mxu0
        %v2469 = vadd.f32 %v2380, %v2468
        %v2470 = vpop.f32.mrf.mxu0
        %v2471 = vpop.f32.mrf.mxu0
        %v2472 = vadd.f32 %v2380, %v2471
        %v2473 = vpop.f32.mrf.mxu0
        %2474 = vmatprep.mubr.bf16.mxu0 0
        %2475 = vmatmul.mubr.bf16.gmra.mxu0 %v2404
        %v2476 = vpop.f32.mrf.mxu0
        %v2477 = vadd.f32 %v2380, %v2476
        %v2478 = vpop.f32.mrf.mxu0
        %v2479 = vpop.f32.mrf.mxu0
        %v2480 = vadd.f32 %v2380, %v2479
        %v2481 = vpop.f32.mrf.mxu0
        %2482 = vmatprep.mubr.bf16.mxu0 0
        %2483 = vmatmul.mubr.bf16.gmra.mxu0 %v2407
        %v2484 = vpop.f32.mrf.mxu0
        %v2485 = vadd.f32 %v2380, %v2484
        %v2486 = vpop.f32.mrf.mxu0
        %v2487 = vpop.f32.mrf.mxu0
        %v2488 = vadd.f32 %v2380, %v2487
        %v2489 = vpop.f32.mrf.mxu0
        %2490 = vmatprep.mubr.bf16.mxu0 0
        %2491 = vmatmul.mubr.bf16.gmra.mxu0 %v2410
        %v2492 = vpop.f32.mrf.mxu0
        %v2493 = vadd.f32 %v2380, %v2492
        %v2494 = vpop.f32.mrf.mxu0
        %v2495 = vpop.f32.mrf.mxu0
        %v2496 = vadd.f32 %v2380, %v2495
        %v2497 = vpop.f32.mrf.mxu0
        %2498 = vmatprep.mubr.bf16.mxu0 0
        %2499 = vmatmul.mubr.bf16.gmra.mxu0 %v2413
        %v2500 = vpop.f32.mrf.mxu0
        %v2501 = vadd.f32 %v2380, %v2500
        %v2502 = vpop.f32.mrf.mxu0
        %v2503 = vpop.f32.mrf.mxu0
        %v2504 = vadd.f32 %v2380, %v2503
        %v2505 = vpop.f32.mrf.mxu0
        %2506 = vmatprep.mubr.bf16.mxu0 0
        %2507 = vmatmul.mubr.bf16.gmra.mxu0 %v2416
        %v2508 = vpop.f32.mrf.mxu0
        %v2509 = vadd.f32 %v2380, %v2508
        %v2510 = vpop.f32.mrf.mxu0
        %v2511 = vpop.f32.mrf.mxu0
        %v2512 = vadd.f32 %v2380, %v2511
        %v2513 = vpop.f32.mrf.mxu0
        %2514 = vdwg.mxu0
        %v2515 = vadd.f32 %v2248, %v2453
        %v2516 = vadd.f32 %v2249, %v2456
        %v2517 = vadd.f32 %v2250, %v2461
        %v2518 = vadd.f32 %v2251, %v2464
        %v2519 = vadd.f32 %v2252, %v2469
        %v2520 = vadd.f32 %v2253, %v2472
        %v2521 = vadd.f32 %v2254, %v2477
        %v2522 = vadd.f32 %v2255, %v2480
        %v2523 = vadd.f32 %v2256, %v2485
        %v2524 = vadd.f32 %v2257, %v2488
        %v2525 = vadd.f32 %v2258, %v2493
        %v2526 = vadd.f32 %v2259, %v2496
        %v2527 = vadd.f32 %v2260, %v2501
        %v2528 = vadd.f32 %v2261, %v2504
        %v2529 = vadd.f32 %v2262, %v2509
        %v2530 = vadd.f32 %v2263, %v2512
        %v2531 = vld [vmem:[%s10] sm:$0x1]
        %v2533 = vlaneseq
        %v2534 = vshrl.u32 %v2533, 7
        %v2535 = vsub.s32 0, %v2534
        %v2536 = vrot.slane %v2531, %v2535
        %2537 = vrot.lane.b32.xlu0 %v2536, 32
        %v2538 = vpop.permute.xlu0 %2537
        %v2540 = vadd.f32 %v2515, %v2538
        %v2541 = vadd.f32 %v2516, %v2538
        %v2542 = vadd.f32 %v2517, %v2538
        %v2543 = vadd.f32 %v2518, %v2538
        %v2544 = vadd.f32 %v2519, %v2538
        %v2545 = vadd.f32 %v2520, %v2538
        %v2546 = vadd.f32 %v2521, %v2538
        %v2547 = vadd.f32 %v2522, %v2538
        %v2548 = vadd.f32 %v2523, %v2538
        %v2549 = vadd.f32 %v2524, %v2538
        %v2550 = vadd.f32 %v2525, %v2538
        %v2551 = vadd.f32 %v2526, %v2538
        %v2552 = vadd.f32 %v2527, %v2538
        %v2553 = vadd.f32 %v2528, %v2538
        %v2554 = vadd.f32 %v2529, %v2538
        %v2555 = vadd.f32 %v2530, %v2538
        %v2556 = vmax.f32 %v2540, 0.0
        %v2557 = vmax.f32 %v2541, 0.0
        %v2558 = vmax.f32 %v2542, 0.0
        %v2559 = vmax.f32 %v2543, 0.0
        %v2560 = vmax.f32 %v2544, 0.0
        %v2561 = vmax.f32 %v2545, 0.0
        %v2562 = vmax.f32 %v2546, 0.0
        %v2563 = vmax.f32 %v2547, 0.0
        %v2564 = vmax.f32 %v2548, 0.0
        %v2565 = vmax.f32 %v2549, 0.0
        %v2566 = vmax.f32 %v2550, 0.0
        %v2567 = vmax.f32 %v2551, 0.0
        %v2568 = vmax.f32 %v2552, 0.0
        %v2569 = vmax.f32 %v2553, 0.0
        %v2570 = vmax.f32 %v2554, 0.0
        %v2571 = vmax.f32 %v2555, 0.0
        %2588 = vrot.lane.b32.xlu0 %v1643, 32
        %v2589 = vpop.permute.xlu0 %2588
        %2590 = vrot.lane.b32.xlu0 %v1644, 32
        %v2591 = vpop.permute.xlu0 %2590
        %2592 = vrot.lane.b32.xlu0 %v1645, 32
        %v2593 = vpop.permute.xlu0 %2592
        %2594 = vrot.lane.b32.xlu0 %v1646, 32
        %v2595 = vpop.permute.xlu0 %2594
        %2596 = vrot.lane.b32.xlu0 %v1647, 32
        %v2597 = vpop.permute.xlu0 %2596
        %2598 = vrot.lane.b32.xlu0 %v1648, 32
        %v2599 = vpop.permute.xlu0 %2598
        %2600 = vrot.lane.b32.xlu0 %v1649, 32
        %v2601 = vpop.permute.xlu0 %2600
        %2602 = vrot.lane.b32.xlu0 %v1650, 32
        %v2603 = vpop.permute.xlu0 %2602
        %2604 = vrot.lane.b32.xlu0 %v1651, 32
        %v2605 = vpop.permute.xlu0 %2604
        %2606 = vrot.lane.b32.xlu0 %v1652, 32
        %v2607 = vpop.permute.xlu0 %2606
        %2608 = vrot.lane.b32.xlu0 %v1653, 32
        %v2609 = vpop.permute.xlu0 %2608
        %2610 = vrot.lane.b32.xlu0 %v1654, 32
        %v2611 = vpop.permute.xlu0 %2610
        %2612 = vrot.lane.b32.xlu0 %v1655, 32
        %v2613 = vpop.permute.xlu0 %2612
        %2614 = vrot.lane.b32.xlu0 %v1656, 32
        %v2615 = vpop.permute.xlu0 %2614
        %2616 = vrot.lane.b32.xlu0 %v1657, 32
        %v2617 = vpop.permute.xlu0 %2616
        %2618 = vrot.lane.b32.xlu0 %v1658, 32
        %v2619 = vpop.permute.xlu0 %2618
        %v2636 = vadd.f32 %v2556, %v2589
        %v2637 = vadd.f32 %v2557, %v2591
        %v2638 = vadd.f32 %v2558, %v2593
        %v2639 = vadd.f32 %v2559, %v2595
        %v2640 = vadd.f32 %v2560, %v2597
        %v2641 = vadd.f32 %v2561, %v2599
        %v2642 = vadd.f32 %v2562, %v2601
        %v2643 = vadd.f32 %v2563, %v2603
        %v2644 = vadd.f32 %v2564, %v2605
        %v2645 = vadd.f32 %v2565, %v2607
        %v2646 = vadd.f32 %v2566, %v2609
        %v2647 = vadd.f32 %v2567, %v2611
        %v2648 = vadd.f32 %v2568, %v2613
        %v2649 = vadd.f32 %v2569, %v2615
        %v2650 = vadd.f32 %v2570, %v2617
        %v2651 = vadd.f32 %v2571, %v2619
        %v2652 = vpack.c.bf16 %v2637, %v2636
        %v2653 = vpack.c.bf16 %v2639, %v2638
        %v2654 = vpack.c.bf16 %v2641, %v2640
        %v2655 = vpack.c.bf16 %v2643, %v2642
        %v2656 = vpack.c.bf16 %v2645, %v2644
        %v2657 = vpack.c.bf16 %v2647, %v2646
        %v2658 = vpack.c.bf16 %v2649, %v2648
        %v2659 = vpack.c.bf16 %v2651, %v2650
        %2668 = vrot.lane.b32.xlu0 %v2652, 96
        %v2669 = vpop.permute.xlu0 %2668
        %2670 = vrot.lane.b32.xlu0 %v2653, 96
        %v2671 = vpop.permute.xlu0 %2670
        %2672 = vrot.lane.b32.xlu0 %v2654, 96
        %v2673 = vpop.permute.xlu0 %2672
        %2674 = vrot.lane.b32.xlu0 %v2655, 96
        %v2675 = vpop.permute.xlu0 %2674
        %2676 = vrot.lane.b32.xlu0 %v2656, 96
        %v2677 = vpop.permute.xlu0 %2676
        %2678 = vrot.lane.b32.xlu0 %v2657, 96
        %v2679 = vpop.permute.xlu0 %2678
        %2680 = vrot.lane.b32.xlu0 %v2658, 96
        %v2681 = vpop.permute.xlu0 %2680
        %2682 = vrot.lane.b32.xlu0 %v2659, 96
        %v2683 = vpop.permute.xlu0 %2682
        %2708 = vrot.lane.b32.xlu0 %v2636, 96
        %v2709 = vpop.permute.xlu0 %2708
        %2710 = vrot.lane.b32.xlu0 %v2637, 96
        %v2711 = vpop.permute.xlu0 %2710
        %2712 = vrot.lane.b32.xlu0 %v2638, 96
        %v2713 = vpop.permute.xlu0 %2712
        %2714 = vrot.lane.b32.xlu0 %v2639, 96
        %v2715 = vpop.permute.xlu0 %2714
        %2716 = vrot.lane.b32.xlu0 %v2640, 96
        %v2717 = vpop.permute.xlu0 %2716
        %2718 = vrot.lane.b32.xlu0 %v2641, 96
        %v2719 = vpop.permute.xlu0 %2718
        %2720 = vrot.lane.b32.xlu0 %v2642, 96
        %v2721 = vpop.permute.xlu0 %2720
        %2722 = vrot.lane.b32.xlu0 %v2643, 96
        %v2723 = vpop.permute.xlu0 %2722
        %2724 = vrot.lane.b32.xlu0 %v2644, 96
        %v2725 = vpop.permute.xlu0 %2724
        %2726 = vrot.lane.b32.xlu0 %v2645, 96
        %v2727 = vpop.permute.xlu0 %2726
        %2728 = vrot.lane.b32.xlu0 %v2646, 96
        %v2729 = vpop.permute.xlu0 %2728
        %2730 = vrot.lane.b32.xlu0 %v2647, 96
        %v2731 = vpop.permute.xlu0 %2730
        %2732 = vrot.lane.b32.xlu0 %v2648, 96
        %v2733 = vpop.permute.xlu0 %2732
        %2734 = vrot.lane.b32.xlu0 %v2649, 96
        %v2735 = vpop.permute.xlu0 %2734
        %2736 = vrot.lane.b32.xlu0 %v2650, 96
        %v2737 = vpop.permute.xlu0 %2736
        %2738 = vrot.lane.b32.xlu0 %v2651, 96
        %v2739 = vpop.permute.xlu0 %2738
        %2756 = vmatprep.subr.bf16.mxu0 0
        %2757 = vmatpush1.bf16.msra.mxu0 %v2683
        %2758 = vmatprep.subr.bf16.mxu0 0
        %2759 = vmatpush1.bf16.msra.mxu0 %v2681
        %2760 = vmatprep.subr.bf16.mxu0 0
        %2761 = vmatpush1.bf16.msra.mxu0 %v2679
        %2762 = vmatprep.subr.bf16.mxu0 0
        %2763 = vmatpush1.bf16.msra.mxu0 %v2677
        %2764 = vmatprep.subr.bf16.mxu0 0
        %2765 = vmatpush1.bf16.msra.mxu0 %v2675
        %2766 = vmatprep.subr.bf16.mxu0 0
        %2767 = vmatpush1.bf16.msra.mxu0 %v2673
        %2768 = vmatprep.subr.bf16.mxu0 0
        %2769 = vmatpush1.bf16.msra.mxu0 %v2671
        %2770 = vmatprep.subr.bf16.mxu0 0
        %2771 = vmatpush1.bf16.msra.mxu0 %v2669
        %2772 = vmatprep.subr.bf16.mxu0 0
        %2773 = vmatpush2.bf16.msra.mxu0 0
        %2774 = vmatprep.subr.bf16.mxu0 0
        %2775 = vmatpush2.bf16.msra.mxu0 0
        %2776 = vmatprep.subr.bf16.mxu0 0
        %2777 = vmatpush2.bf16.msra.mxu0 0
        %2778 = vmatprep.subr.bf16.mxu0 0
        %2779 = vmatpush2.bf16.msra.mxu0 0
        %2780 = vmatprep.subr.bf16.mxu0 0
        %2781 = vmatpush2.bf16.msra.mxu0 0
        %2782 = vmatprep.subr.bf16.mxu0 0
        %2783 = vmatpush2.bf16.msra.mxu0 0
        %2784 = vmatprep.subr.bf16.mxu0 0
        %2785 = vmatpush2.bf16.msra.mxu0 0
        %2786 = vmatprep.subr.bf16.mxu0 0
        %2787 = vmatpush2.bf16.msra.mxu0 0
        %2788 = vmatprep.mubr.bf16.mxu0 0
        %2789 = vmatmul.mubr.bf16.gmra.mxu0 %v1699
        %v2790 = vpop.f32.mrf.mxu0
        %v2791 = vadd.f32 %v2709, %v2790
        %v2792 = vpop.f32.mrf.mxu0
        %v2793 = vpop.f32.mrf.mxu0
        %v2794 = vadd.f32 %v2711, %v2793
        %v2795 = vpop.f32.mrf.mxu0
        %2796 = vmatprep.mubr.bf16.mxu0 0
        %2797 = vmatmul.mubr.bf16.gmra.mxu0 %v1700
        %v2798 = vpop.f32.mrf.mxu0
        %v2799 = vadd.f32 %v2713, %v2798
        %v2800 = vpop.f32.mrf.mxu0
        %v2801 = vpop.f32.mrf.mxu0
        %v2802 = vadd.f32 %v2715, %v2801
        %v2803 = vpop.f32.mrf.mxu0
        %2804 = vmatprep.mubr.bf16.mxu0 0
        %2805 = vmatmul.mubr.bf16.gmra.mxu0 %v1701
        %v2806 = vpop.f32.mrf.mxu0
        %v2807 = vadd.f32 %v2717, %v2806
        %v2808 = vpop.f32.mrf.mxu0
        %v2809 = vpop.f32.mrf.mxu0
        %v2810 = vadd.f32 %v2719, %v2809
        %v2811 = vpop.f32.mrf.mxu0
        %2812 = vmatprep.mubr.bf16.mxu0 0
        %2813 = vmatmul.mubr.bf16.gmra.mxu0 %v1702
        %v2814 = vpop.f32.mrf.mxu0
        %v2815 = vadd.f32 %v2721, %v2814
        %v2816 = vpop.f32.mrf.mxu0
        %v2817 = vpop.f32.mrf.mxu0
        %v2818 = vadd.f32 %v2723, %v2817
        %v2819 = vpop.f32.mrf.mxu0
        %2820 = vmatprep.mubr.bf16.mxu0 0
        %2821 = vmatmul.mubr.bf16.gmra.mxu0 %v1703
        %v2822 = vpop.f32.mrf.mxu0
        %v2823 = vadd.f32 %v2725, %v2822
        %v2824 = vpop.f32.mrf.mxu0
        %v2825 = vpop.f32.mrf.mxu0
        %v2826 = vadd.f32 %v2727, %v2825
        %v2827 = vpop.f32.mrf.mxu0
        %2828 = vmatprep.mubr.bf16.mxu0 0
        %2829 = vmatmul.mubr.bf16.gmra.mxu0 %v1704
        %v2830 = vpop.f32.mrf.mxu0
        %v2831 = vadd.f32 %v2729, %v2830
        %v2832 = vpop.f32.mrf.mxu0
        %v2833 = vpop.f32.mrf.mxu0
        %v2834 = vadd.f32 %v2731, %v2833
        %v2835 = vpop.f32.mrf.mxu0
        %2836 = vmatprep.mubr.bf16.mxu0 0
        %2837 = vmatmul.mubr.bf16.gmra.mxu0 %v1705
        %v2838 = vpop.f32.mrf.mxu0
        %v2839 = vadd.f32 %v2733, %v2838
        %v2840 = vpop.f32.mrf.mxu0
        %v2841 = vpop.f32.mrf.mxu0
        %v2842 = vadd.f32 %v2735, %v2841
        %v2843 = vpop.f32.mrf.mxu0
        %2844 = vmatprep.mubr.bf16.mxu0 0
        %2845 = vmatmul.mubr.bf16.gmra.mxu0 %v1706
        %v2846 = vpop.f32.mrf.mxu0
        %v2847 = vadd.f32 %v2737, %v2846
        %v2848 = vpop.f32.mrf.mxu0
        %v2849 = vpop.f32.mrf.mxu0
        %v2850 = vadd.f32 %v2739, %v2849
        %v2851 = vpop.f32.mrf.mxu0
        %2852 = vdwg.mxu0
        %v2853 = vpack.c.bf16 %v2794, %v2791
        %v2854 = vpack.c.bf16 %v2802, %v2799
        %v2855 = vpack.c.bf16 %v2810, %v2807
        %v2856 = vpack.c.bf16 %v2818, %v2815
        %v2857 = vpack.c.bf16 %v2826, %v2823
        %v2858 = vpack.c.bf16 %v2834, %v2831
        %v2859 = vpack.c.bf16 %v2842, %v2839
        %v2860 = vpack.c.bf16 %v2850, %v2847
        %v2862 = vsel %vm1843, %v2853, 0
        %v2865 = vsel %vm1843, %v2854, 0
        %v2868 = vsel %vm1843, %v2855, 0
        %v2871 = vsel %vm1843, %v2856, 0
        %v2874 = vsel %vm1843, %v2857, 0
        %v2877 = vsel %vm1843, %v2858, 0
        %v2880 = vsel %vm1843, %v2859, 0
        %v2883 = vsel %vm1843, %v2860, 0
        %2885 = vmatprep.subr.bf16.mxu0 0
        %2886 = vmatpush1.bf16.msra.mxu0 0
        %2887 = vmatprep.subr.bf16.mxu0 0
        %2888 = vmatpush1.bf16.msra.mxu0 0
        %2889 = vmatprep.subr.bf16.mxu0 0
        %2890 = vmatpush1.bf16.msra.mxu0 0
        %2891 = vmatprep.subr.bf16.mxu0 0
        %2892 = vmatpush1.bf16.msra.mxu0 0
        %2893 = vmatprep.subr.bf16.mxu0 0
        %2894 = vmatpush1.bf16.msra.mxu0 0
        %2895 = vmatprep.subr.bf16.mxu0 0
        %2896 = vmatpush1.bf16.msra.mxu0 0
        %2897 = vmatprep.subr.bf16.mxu0 0
        %2898 = vmatpush1.bf16.msra.mxu0 %v1840
        %2899 = vmatprep.subr.bf16.mxu0 0
        %2900 = vmatpush1.bf16.msra.mxu0 %v1839
        %2901 = vmatprep.subr.bf16.mxu0 0
        %2902 = vmatpush2.bf16.msra.mxu0 0
        %2903 = vmatprep.subr.bf16.mxu0 0
        %2904 = vmatpush2.bf16.msra.mxu0 0
        %2905 = vmatprep.subr.bf16.mxu0 0
        %2906 = vmatpush2.bf16.msra.mxu0 0
        %2907 = vmatprep.subr.bf16.mxu0 0
        %2908 = vmatpush2.bf16.msra.mxu0 0
        %2909 = vmatprep.subr.bf16.mxu0 0
        %2910 = vmatpush2.bf16.msra.mxu0 0
        %2911 = vmatprep.subr.bf16.mxu0 0
        %2912 = vmatpush2.bf16.msra.mxu0 0
        %2913 = vmatprep.subr.bf16.mxu0 0
        %2914 = vmatpush2.bf16.msra.mxu0 0
        %2915 = vmatprep.subr.bf16.mxu0 0
        %2916 = vmatpush2.bf16.msra.mxu0 0
        %2917 = vmatprep.mubr.bf16.mxu0 0
        %2918 = vmatmul.mubr.bf16.gmra.mxu0 %v2862
        %v2919 = vpop.f32.mrf.mxu0
        %v2920 = vadd.f32 %v1829, %v2919
        %v2921 = vpop.f32.mrf.mxu0
        %v2922 = vpop.f32.mrf.mxu0
        %v2923 = vadd.f32 %v1829, %v2922
        %v2924 = vpop.f32.mrf.mxu0
        %2925 = vmatprep.mubr.bf16.mxu0 0
        %2926 = vmatmul.mubr.bf16.gmra.mxu0 %v2865
        %v2927 = vpop.f32.mrf.mxu0
        %v2928 = vadd.f32 %v1829, %v2927
        %v2929 = vpop.f32.mrf.mxu0
        %v2930 = vpop.f32.mrf.mxu0
        %v2931 = vadd.f32 %v1829, %v2930
        %v2932 = vpop.f32.mrf.mxu0
        %2933 = vmatprep.mubr.bf16.mxu0 0
        %2934 = vmatmul.mubr.bf16.gmra.mxu0 %v2868
        %v2935 = vpop.f32.mrf.mxu0
        %v2936 = vadd.f32 %v1829, %v2935
        %v2937 = vpop.f32.mrf.mxu0
        %v2938 = vpop.f32.mrf.mxu0
        %v2939 = vadd.f32 %v1829, %v2938
        %v2940 = vpop.f32.mrf.mxu0
        %2941 = vmatprep.mubr.bf16.mxu0 0
        %2942 = vmatmul.mubr.bf16.gmra.mxu0 %v2871
        %v2943 = vpop.f32.mrf.mxu0
        %v2944 = vadd.f32 %v1829, %v2943
        %v2945 = vpop.f32.mrf.mxu0
        %v2946 = vpop.f32.mrf.mxu0
        %v2947 = vadd.f32 %v1829, %v2946
        %v2948 = vpop.f32.mrf.mxu0
        %2949 = vmatprep.mubr.bf16.mxu0 0
        %2950 = vmatmul.mubr.bf16.gmra.mxu0 %v2874
        %v2951 = vpop.f32.mrf.mxu0
        %v2952 = vadd.f32 %v1829, %v2951
        %v2953 = vpop.f32.mrf.mxu0
        %v2954 = vpop.f32.mrf.mxu0
        %v2955 = vadd.f32 %v1829, %v2954
        %v2956 = vpop.f32.mrf.mxu0
        %2957 = vmatprep.mubr.bf16.mxu0 0
        %2958 = vmatmul.mubr.bf16.gmra.mxu0 %v2877
        %v2959 = vpop.f32.mrf.mxu0
        %v2960 = vadd.f32 %v1829, %v2959
        %v2961 = vpop.f32.mrf.mxu0
        %v2962 = vpop.f32.mrf.mxu0
        %v2963 = vadd.f32 %v1829, %v2962
        %v2964 = vpop.f32.mrf.mxu0
        %2965 = vmatprep.mubr.bf16.mxu0 0
        %2966 = vmatmul.mubr.bf16.gmra.mxu0 %v2880
        %v2967 = vpop.f32.mrf.mxu0
        %v2968 = vadd.f32 %v1829, %v2967
        %v2969 = vpop.f32.mrf.mxu0
        %v2970 = vpop.f32.mrf.mxu0
        %v2971 = vadd.f32 %v1829, %v2970
        %v2972 = vpop.f32.mrf.mxu0
        %2973 = vmatprep.mubr.bf16.mxu0 0
        %2974 = vmatmul.mubr.bf16.gmra.mxu0 %v2883
        %v2975 = vpop.f32.mrf.mxu0
        %v2976 = vadd.f32 %v1829, %v2975
        %v2977 = vpop.f32.mrf.mxu0
        %v2978 = vpop.f32.mrf.mxu0
        %v2979 = vadd.f32 %v1829, %v2978
        %v2980 = vpop.f32.mrf.mxu0
        %2981 = vdwg.mxu0
        %v2982 = vpack.c.bf16 %v2923, %v2920
        %v2983 = vpack.c.bf16 %v2931, %v2928
        %v2984 = vpack.c.bf16 %v2939, %v2936
        %v2985 = vpack.c.bf16 %v2947, %v2944
        %v2986 = vpack.c.bf16 %v2955, %v2952
        %v2987 = vpack.c.bf16 %v2963, %v2960
        %v2988 = vpack.c.bf16 %v2971, %v2968
        %v2989 = vpack.c.bf16 %v2979, %v2976
        %v2990 = vadd.f32 %v2920, 0.0
        %v2991 = vadd.f32 %v2923, 0.0
        %v2992 = vadd.f32 %v2928, 0.0
        %v2993 = vadd.f32 %v2931, 0.0
        %v2994 = vadd.f32 %v2936, 0.0
        %v2995 = vadd.f32 %v2939, 0.0
        %v2996 = vadd.f32 %v2944, 0.0
        %v2997 = vadd.f32 %v2947, 0.0
        %v2998 = vadd.f32 %v2952, 0.0
        %v2999 = vadd.f32 %v2955, 0.0
        %v3000 = vadd.f32 %v2960, 0.0
        %v3001 = vadd.f32 %v2963, 0.0
        %v3002 = vadd.f32 %v2968, 0.0
        %v3003 = vadd.f32 %v2971, 0.0
        %v3004 = vadd.f32 %v2976, 0.0
        %v3005 = vadd.f32 %v2979, 0.0
        %3006 = vmatprep.subr.bf16.mxu0 0
        %3007 = vmatpush1.bf16.msra.mxu0 %v2989
        %3008 = vmatprep.subr.bf16.mxu0 0
        %3009 = vmatpush1.bf16.msra.mxu0 %v2988
        %3010 = vmatprep.subr.bf16.mxu0 0
        %3011 = vmatpush1.bf16.msra.mxu0 %v2987
        %3012 = vmatprep.subr.bf16.mxu0 0
        %3013 = vmatpush1.bf16.msra.mxu0 %v2986
        %3014 = vmatprep.subr.bf16.mxu0 0
        %3015 = vmatpush1.bf16.msra.mxu0 %v2985
        %3016 = vmatprep.subr.bf16.mxu0 0
        %3017 = vmatpush1.bf16.msra.mxu0 %v2984
        %3018 = vmatprep.subr.bf16.mxu0 0
        %3019 = vmatpush1.bf16.msra.mxu0 %v2983
        %3020 = vmatprep.subr.bf16.mxu0 0
        %3021 = vmatpush1.bf16.msra.mxu0 %v2982
        %3022 = vmatprep.subr.bf16.mxu0 0
        %3023 = vmatpush2.bf16.msra.mxu0 0
        %3024 = vmatprep.subr.bf16.mxu0 0
        %3025 = vmatpush2.bf16.msra.mxu0 0
        %3026 = vmatprep.subr.bf16.mxu0 0
        %3027 = vmatpush2.bf16.msra.mxu0 0
        %3028 = vmatprep.subr.bf16.mxu0 0
        %3029 = vmatpush2.bf16.msra.mxu0 0
        %3030 = vmatprep.subr.bf16.mxu0 0
        %3031 = vmatpush2.bf16.msra.mxu0 0
        %3032 = vmatprep.subr.bf16.mxu0 0
        %3033 = vmatpush2.bf16.msra.mxu0 0
        %3034 = vmatprep.subr.bf16.mxu0 0
        %3035 = vmatpush2.bf16.msra.mxu0 0
        %3036 = vmatprep.subr.bf16.mxu0 0
        %3037 = vmatpush2.bf16.msra.mxu0 0
        %3038 = vmatprep.mubr.bf16.mxu0 0
        %3039 = vmatmul.mubr.bf16.gmra.mxu0 %v1699
        %v3040 = vpop.f32.mrf.mxu0
        %v3041 = vadd.f32 %v2709, %v3040
        %v3042 = vpop.f32.mrf.mxu0
        %v3043 = vpop.f32.mrf.mxu0
        %v3044 = vadd.f32 %v2711, %v3043
        %v3045 = vpop.f32.mrf.mxu0
        %3046 = vmatprep.mubr.bf16.mxu0 0
        %3047 = vmatmul.mubr.bf16.gmra.mxu0 %v1700
        %v3048 = vpop.f32.mrf.mxu0
        %v3049 = vadd.f32 %v2713, %v3048
        %v3050 = vpop.f32.mrf.mxu0
        %v3051 = vpop.f32.mrf.mxu0
        %v3052 = vadd.f32 %v2715, %v3051
        %v3053 = vpop.f32.mrf.mxu0
        %3054 = vmatprep.mubr.bf16.mxu0 0
        %3055 = vmatmul.mubr.bf16.gmra.mxu0 %v1701
        %v3056 = vpop.f32.mrf.mxu0
        %v3057 = vadd.f32 %v2717, %v3056
        %v3058 = vpop.f32.mrf.mxu0
        %v3059 = vpop.f32.mrf.mxu0
        %v3060 = vadd.f32 %v2719, %v3059
        %v3061 = vpop.f32.mrf.mxu0
        %3062 = vmatprep.mubr.bf16.mxu0 0
        %3063 = vmatmul.mubr.bf16.gmra.mxu0 %v1702
        %v3064 = vpop.f32.mrf.mxu0
        %v3065 = vadd.f32 %v2721, %v3064
        %v3066 = vpop.f32.mrf.mxu0
        %v3067 = vpop.f32.mrf.mxu0
        %v3068 = vadd.f32 %v2723, %v3067
        %v3069 = vpop.f32.mrf.mxu0
        %3070 = vmatprep.mubr.bf16.mxu0 0
        %3071 = vmatmul.mubr.bf16.gmra.mxu0 %v1703
        %v3072 = vpop.f32.mrf.mxu0
        %v3073 = vadd.f32 %v2725, %v3072
        %v3074 = vpop.f32.mrf.mxu0
        %v3075 = vpop.f32.mrf.mxu0
        %v3076 = vadd.f32 %v2727, %v3075
        %v3077 = vpop.f32.mrf.mxu0
        %3078 = vmatprep.mubr.bf16.mxu0 0
        %3079 = vmatmul.mubr.bf16.gmra.mxu0 %v1704
        %v3080 = vpop.f32.mrf.mxu0
        %v3081 = vadd.f32 %v2729, %v3080
        %v3082 = vpop.f32.mrf.mxu0
        %v3083 = vpop.f32.mrf.mxu0
        %v3084 = vadd.f32 %v2731, %v3083
        %v3085 = vpop.f32.mrf.mxu0
        %3086 = vmatprep.mubr.bf16.mxu0 0
        %3087 = vmatmul.mubr.bf16.gmra.mxu0 %v1705
        %v3088 = vpop.f32.mrf.mxu0
        %v3089 = vadd.f32 %v2733, %v3088
        %v3090 = vpop.f32.mrf.mxu0
        %v3091 = vpop.f32.mrf.mxu0
        %v3092 = vadd.f32 %v2735, %v3091
        %v3093 = vpop.f32.mrf.mxu0
        %3094 = vmatprep.mubr.bf16.mxu0 0
        %3095 = vmatmul.mubr.bf16.gmra.mxu0 %v1706
        %v3096 = vpop.f32.mrf.mxu0
        %v3097 = vadd.f32 %v2737, %v3096
        %v3098 = vpop.f32.mrf.mxu0
        %v3099 = vpop.f32.mrf.mxu0
        %v3100 = vadd.f32 %v2739, %v3099
        %v3101 = vpop.f32.mrf.mxu0
        %3102 = vdwg.mxu0
        %v3103 = vpack.c.bf16 %v3044, %v3041
        %v3104 = vpack.c.bf16 %v3052, %v3049
        %v3105 = vpack.c.bf16 %v3060, %v3057
        %v3106 = vpack.c.bf16 %v3068, %v3065
        %v3107 = vpack.c.bf16 %v3076, %v3073
        %v3108 = vpack.c.bf16 %v3084, %v3081
        %v3109 = vpack.c.bf16 %v3092, %v3089
        %v3110 = vpack.c.bf16 %v3100, %v3097
        %v3112 = vsel %vm1843, %v3103, 0
        %v3115 = vsel %vm1843, %v3104, 0
        %v3118 = vsel %vm1843, %v3105, 0
        %v3121 = vsel %vm1843, %v3106, 0
        %v3124 = vsel %vm1843, %v3107, 0
        %v3127 = vsel %vm1843, %v3108, 0
        %v3130 = vsel %vm1843, %v3109, 0
        %v3133 = vsel %vm1843, %v3110, 0
        %3135 = vmatprep.subr.bf16.mxu0 0
        %3136 = vmatpush1.bf16.msra.mxu0 0
        %3137 = vmatprep.subr.bf16.mxu0 0
        %3138 = vmatpush1.bf16.msra.mxu0 0
        %3139 = vmatprep.subr.bf16.mxu0 0
        %3140 = vmatpush1.bf16.msra.mxu0 0
        %3141 = vmatprep.subr.bf16.mxu0 0
        %3142 = vmatpush1.bf16.msra.mxu0 0
        %3143 = vmatprep.subr.bf16.mxu0 0
        %3144 = vmatpush1.bf16.msra.mxu0 0
        %3145 = vmatprep.subr.bf16.mxu0 0
        %3146 = vmatpush1.bf16.msra.mxu0 0
        %3147 = vmatprep.subr.bf16.mxu0 0
        %3148 = vmatpush1.bf16.msra.mxu0 %v2116
        %3149 = vmatprep.subr.bf16.mxu0 0
        %3150 = vmatpush1.bf16.msra.mxu0 %v2115
        %3151 = vmatprep.subr.bf16.mxu0 0
        %3152 = vmatpush2.bf16.msra.mxu0 0
        %3153 = vmatprep.subr.bf16.mxu0 0
        %3154 = vmatpush2.bf16.msra.mxu0 0
        %3155 = vmatprep.subr.bf16.mxu0 0
        %3156 = vmatpush2.bf16.msra.mxu0 0
        %3157 = vmatprep.subr.bf16.mxu0 0
        %3158 = vmatpush2.bf16.msra.mxu0 0
        %3159 = vmatprep.subr.bf16.mxu0 0
        %3160 = vmatpush2.bf16.msra.mxu0 0
        %3161 = vmatprep.subr.bf16.mxu0 0
        %3162 = vmatpush2.bf16.msra.mxu0 0
        %3163 = vmatprep.subr.bf16.mxu0 0
        %3164 = vmatpush2.bf16.msra.mxu0 0
        %3165 = vmatprep.subr.bf16.mxu0 0
        %3166 = vmatpush2.bf16.msra.mxu0 0
        %3167 = vmatprep.mubr.bf16.mxu0 0
        %3168 = vmatmul.mubr.bf16.gmra.mxu0 %v3112
        %v3169 = vpop.f32.mrf.mxu0
        %v3170 = vadd.f32 %v2105, %v3169
        %v3171 = vpop.f32.mrf.mxu0
        %v3172 = vpop.f32.mrf.mxu0
        %v3173 = vadd.f32 %v2105, %v3172
        %v3174 = vpop.f32.mrf.mxu0
        %3175 = vmatprep.mubr.bf16.mxu0 0
        %3176 = vmatmul.mubr.bf16.gmra.mxu0 %v3115
        %v3177 = vpop.f32.mrf.mxu0
        %v3178 = vadd.f32 %v2105, %v3177
        %v3179 = vpop.f32.mrf.mxu0
        %v3180 = vpop.f32.mrf.mxu0
        %v3181 = vadd.f32 %v2105, %v3180
        %v3182 = vpop.f32.mrf.mxu0
        %3183 = vmatprep.mubr.bf16.mxu0 0
        %3184 = vmatmul.mubr.bf16.gmra.mxu0 %v3118
        %v3185 = vpop.f32.mrf.mxu0
        %v3186 = vadd.f32 %v2105, %v3185
        %v3187 = vpop.f32.mrf.mxu0
        %v3188 = vpop.f32.mrf.mxu0
        %v3189 = vadd.f32 %v2105, %v3188
        %v3190 = vpop.f32.mrf.mxu0
        %3191 = vmatprep.mubr.bf16.mxu0 0
        %3192 = vmatmul.mubr.bf16.gmra.mxu0 %v3121
        %v3193 = vpop.f32.mrf.mxu0
        %v3194 = vadd.f32 %v2105, %v3193
        %v3195 = vpop.f32.mrf.mxu0
        %v3196 = vpop.f32.mrf.mxu0
        %v3197 = vadd.f32 %v2105, %v3196
        %v3198 = vpop.f32.mrf.mxu0
        %3199 = vmatprep.mubr.bf16.mxu0 0
        %3200 = vmatmul.mubr.bf16.gmra.mxu0 %v3124
        %v3201 = vpop.f32.mrf.mxu0
        %v3202 = vadd.f32 %v2105, %v3201
        %v3203 = vpop.f32.mrf.mxu0
        %v3204 = vpop.f32.mrf.mxu0
        %v3205 = vadd.f32 %v2105, %v3204
        %v3206 = vpop.f32.mrf.mxu0
        %3207 = vmatprep.mubr.bf16.mxu0 0
        %3208 = vmatmul.mubr.bf16.gmra.mxu0 %v3127
        %v3209 = vpop.f32.mrf.mxu0
        %v3210 = vadd.f32 %v2105, %v3209
        %v3211 = vpop.f32.mrf.mxu0
        %v3212 = vpop.f32.mrf.mxu0
        %v3213 = vadd.f32 %v2105, %v3212
        %v3214 = vpop.f32.mrf.mxu0
        %3215 = vmatprep.mubr.bf16.mxu0 0
        %3216 = vmatmul.mubr.bf16.gmra.mxu0 %v3130
        %v3217 = vpop.f32.mrf.mxu0
        %v3218 = vadd.f32 %v2105, %v3217
        %v3219 = vpop.f32.mrf.mxu0
        %v3220 = vpop.f32.mrf.mxu0
        %v3221 = vadd.f32 %v2105, %v3220
        %v3222 = vpop.f32.mrf.mxu0
        %3223 = vmatprep.mubr.bf16.mxu0 0
        %3224 = vmatmul.mubr.bf16.gmra.mxu0 %v3133
        %v3225 = vpop.f32.mrf.mxu0
        %v3226 = vadd.f32 %v2105, %v3225
        %v3227 = vpop.f32.mrf.mxu0
        %v3228 = vpop.f32.mrf.mxu0
        %v3229 = vadd.f32 %v2105, %v3228
        %v3230 = vpop.f32.mrf.mxu0
        %3231 = vdwg.mxu0
        %v3232 = vpack.c.bf16 %v3173, %v3170
        %v3233 = vpack.c.bf16 %v3181, %v3178
        %v3234 = vpack.c.bf16 %v3189, %v3186
        %v3235 = vpack.c.bf16 %v3197, %v3194
        %v3236 = vpack.c.bf16 %v3205, %v3202
        %v3237 = vpack.c.bf16 %v3213, %v3210
        %v3238 = vpack.c.bf16 %v3221, %v3218
        %v3239 = vpack.c.bf16 %v3229, %v3226
        %v3240 = vadd.f32 %v2990, %v3170
        %v3241 = vadd.f32 %v2991, %v3173
        %v3242 = vadd.f32 %v2992, %v3178
        %v3243 = vadd.f32 %v2993, %v3181
        %v3244 = vadd.f32 %v2994, %v3186
        %v3245 = vadd.f32 %v2995, %v3189
        %v3246 = vadd.f32 %v2996, %v3194
        %v3247 = vadd.f32 %v2997, %v3197
        %v3248 = vadd.f32 %v2998, %v3202
        %v3249 = vadd.f32 %v2999, %v3205
        %v3250 = vadd.f32 %v3000, %v3210
        %v3251 = vadd.f32 %v3001, %v3213
        %v3252 = vadd.f32 %v3002, %v3218
        %v3253 = vadd.f32 %v3003, %v3221
        %v3254 = vadd.f32 %v3004, %v3226
        %v3255 = vadd.f32 %v3005, %v3229
        %3256 = vmatprep.subr.bf16.mxu0 0
        %3257 = vmatpush1.bf16.msra.mxu0 %v3239
        %3258 = vmatprep.subr.bf16.mxu0 0
        %3259 = vmatpush1.bf16.msra.mxu0 %v3238
        %3260 = vmatprep.subr.bf16.mxu0 0
        %3261 = vmatpush1.bf16.msra.mxu0 %v3237
        %3262 = vmatprep.subr.bf16.mxu0 0
        %3263 = vmatpush1.bf16.msra.mxu0 %v3236
        %3264 = vmatprep.subr.bf16.mxu0 0
        %3265 = vmatpush1.bf16.msra.mxu0 %v3235
        %3266 = vmatprep.subr.bf16.mxu0 0
        %3267 = vmatpush1.bf16.msra.mxu0 %v3234
        %3268 = vmatprep.subr.bf16.mxu0 0
        %3269 = vmatpush1.bf16.msra.mxu0 %v3233
        %3270 = vmatprep.subr.bf16.mxu0 0
        %3271 = vmatpush1.bf16.msra.mxu0 %v3232
        %3272 = vmatprep.subr.bf16.mxu0 0
        %3273 = vmatpush2.bf16.msra.mxu0 0
        %3274 = vmatprep.subr.bf16.mxu0 0
        %3275 = vmatpush2.bf16.msra.mxu0 0
        %3276 = vmatprep.subr.bf16.mxu0 0
        %3277 = vmatpush2.bf16.msra.mxu0 0
        %3278 = vmatprep.subr.bf16.mxu0 0
        %3279 = vmatpush2.bf16.msra.mxu0 0
        %3280 = vmatprep.subr.bf16.mxu0 0
        %3281 = vmatpush2.bf16.msra.mxu0 0
        %3282 = vmatprep.subr.bf16.mxu0 0
        %3283 = vmatpush2.bf16.msra.mxu0 0
        %3284 = vmatprep.subr.bf16.mxu0 0
        %3285 = vmatpush2.bf16.msra.mxu0 0
        %3286 = vmatprep.subr.bf16.mxu0 0
        %3287 = vmatpush2.bf16.msra.mxu0 0
        %3288 = vmatprep.mubr.bf16.mxu0 0
        %3289 = vmatmul.mubr.bf16.gmra.mxu0 %v1699
        %v3290 = vpop.f32.mrf.mxu0
        %v3291 = vadd.f32 %v2709, %v3290
        %v3292 = vpop.f32.mrf.mxu0
        %v3293 = vpop.f32.mrf.mxu0
        %v3294 = vadd.f32 %v2711, %v3293
        %v3295 = vpop.f32.mrf.mxu0
        %3296 = vmatprep.mubr.bf16.mxu0 0
        %3297 = vmatmul.mubr.bf16.gmra.mxu0 %v1700
        %v3298 = vpop.f32.mrf.mxu0
        %v3299 = vadd.f32 %v2713, %v3298
        %v3300 = vpop.f32.mrf.mxu0
        %v3301 = vpop.f32.mrf.mxu0
        %v3302 = vadd.f32 %v2715, %v3301
        %v3303 = vpop.f32.mrf.mxu0
        %3304 = vmatprep.mubr.bf16.mxu0 0
        %3305 = vmatmul.mubr.bf16.gmra.mxu0 %v1701
        %v3306 = vpop.f32.mrf.mxu0
        %v3307 = vadd.f32 %v2717, %v3306
        %v3308 = vpop.f32.mrf.mxu0
        %v3309 = vpop.f32.mrf.mxu0
        %v3310 = vadd.f32 %v2719, %v3309
        %v3311 = vpop.f32.mrf.mxu0
        %3312 = vmatprep.mubr.bf16.mxu0 0
        %3313 = vmatmul.mubr.bf16.gmra.mxu0 %v1702
        %v3314 = vpop.f32.mrf.mxu0
        %v3315 = vadd.f32 %v2721, %v3314
        %v3316 = vpop.f32.mrf.mxu0
        %v3317 = vpop.f32.mrf.mxu0
        %v3318 = vadd.f32 %v2723, %v3317
        %v3319 = vpop.f32.mrf.mxu0
        %3320 = vmatprep.mubr.bf16.mxu0 0
        %3321 = vmatmul.mubr.bf16.gmra.mxu0 %v1703
        %v3322 = vpop.f32.mrf.mxu0
        %v3323 = vadd.f32 %v2725, %v3322
        %v3324 = vpop.f32.mrf.mxu0
        %v3325 = vpop.f32.mrf.mxu0
        %v3326 = vadd.f32 %v2727, %v3325
        %v3327 = vpop.f32.mrf.mxu0
        %3328 = vmatprep.mubr.bf16.mxu0 0
        %3329 = vmatmul.mubr.bf16.gmra.mxu0 %v1704
        %v3330 = vpop.f32.mrf.mxu0
        %v3331 = vadd.f32 %v2729, %v3330
        %v3332 = vpop.f32.mrf.mxu0
        %v3333 = vpop.f32.mrf.mxu0
        %v3334 = vadd.f32 %v2731, %v3333
        %v3335 = vpop.f32.mrf.mxu0
        %3336 = vmatprep.mubr.bf16.mxu0 0
        %3337 = vmatmul.mubr.bf16.gmra.mxu0 %v1705
        %v3338 = vpop.f32.mrf.mxu0
        %v3339 = vadd.f32 %v2733, %v3338
        %v3340 = vpop.f32.mrf.mxu0
        %v3341 = vpop.f32.mrf.mxu0
        %v3342 = vadd.f32 %v2735, %v3341
        %v3343 = vpop.f32.mrf.mxu0
        %3344 = vmatprep.mubr.bf16.mxu0 0
        %3345 = vmatmul.mubr.bf16.gmra.mxu0 %v1706
        %v3346 = vpop.f32.mrf.mxu0
        %v3347 = vadd.f32 %v2737, %v3346
        %v3348 = vpop.f32.mrf.mxu0
        %v3349 = vpop.f32.mrf.mxu0
        %v3350 = vadd.f32 %v2739, %v3349
        %v3351 = vpop.f32.mrf.mxu0
        %3352 = vdwg.mxu0
        %v3353 = vpack.c.bf16 %v3294, %v3291
        %v3354 = vpack.c.bf16 %v3302, %v3299
        %v3355 = vpack.c.bf16 %v3310, %v3307
        %v3356 = vpack.c.bf16 %v3318, %v3315
        %v3357 = vpack.c.bf16 %v3326, %v3323
        %v3358 = vpack.c.bf16 %v3334, %v3331
        %v3359 = vpack.c.bf16 %v3342, %v3339
        %v3360 = vpack.c.bf16 %v3350, %v3347
        %v3362 = vsel %vm1843, %v3353, 0
        %v3365 = vsel %vm1843, %v3354, 0
        %v3368 = vsel %vm1843, %v3355, 0
        %v3371 = vsel %vm1843, %v3356, 0
        %v3374 = vsel %vm1843, %v3357, 0
        %v3377 = vsel %vm1843, %v3358, 0
        %v3380 = vsel %vm1843, %v3359, 0
        %v3383 = vsel %vm1843, %v3360, 0
        %3385 = vmatprep.subr.bf16.mxu0 0
        %3386 = vmatpush1.bf16.msra.mxu0 0
        %3387 = vmatprep.subr.bf16.mxu0 0
        %3388 = vmatpush1.bf16.msra.mxu0 0
        %3389 = vmatprep.subr.bf16.mxu0 0
        %3390 = vmatpush1.bf16.msra.mxu0 0
        %3391 = vmatprep.subr.bf16.mxu0 0
        %3392 = vmatpush1.bf16.msra.mxu0 0
        %3393 = vmatprep.subr.bf16.mxu0 0
        %3394 = vmatpush1.bf16.msra.mxu0 0
        %3395 = vmatprep.subr.bf16.mxu0 0
        %3396 = vmatpush1.bf16.msra.mxu0 0
        %3397 = vmatprep.subr.bf16.mxu0 0
        %3398 = vmatpush1.bf16.msra.mxu0 %v2391
        %3399 = vmatprep.subr.bf16.mxu0 0
        %3400 = vmatpush1.bf16.msra.mxu0 %v2390
        %3401 = vmatprep.subr.bf16.mxu0 0
        %3402 = vmatpush2.bf16.msra.mxu0 0
        %3403 = vmatprep.subr.bf16.mxu0 0
        %3404 = vmatpush2.bf16.msra.mxu0 0
        %3405 = vmatprep.subr.bf16.mxu0 0
        %3406 = vmatpush2.bf16.msra.mxu0 0
        %3407 = vmatprep.subr.bf16.mxu0 0
        %3408 = vmatpush2.bf16.msra.mxu0 0
        %3409 = vmatprep.subr.bf16.mxu0 0
        %3410 = vmatpush2.bf16.msra.mxu0 0
        %3411 = vmatprep.subr.bf16.mxu0 0
        %3412 = vmatpush2.bf16.msra.mxu0 0
        %3413 = vmatprep.subr.bf16.mxu0 0
        %3414 = vmatpush2.bf16.msra.mxu0 0
        %3415 = vmatprep.subr.bf16.mxu0 0
        %3416 = vmatpush2.bf16.msra.mxu0 0
        %3417 = vmatprep.mubr.bf16.mxu0 0
        %3418 = vmatmul.mubr.bf16.gmra.mxu0 %v3362
        %v3419 = vpop.f32.mrf.mxu0
        %v3420 = vadd.f32 %v2380, %v3419
        %v3421 = vpop.f32.mrf.mxu0
        %v3422 = vpop.f32.mrf.mxu0
        %v3423 = vadd.f32 %v2380, %v3422
        %v3424 = vpop.f32.mrf.mxu0
        %3425 = vmatprep.mubr.bf16.mxu0 0
        %3426 = vmatmul.mubr.bf16.gmra.mxu0 %v3365
        %v3427 = vpop.f32.mrf.mxu0
        %v3428 = vadd.f32 %v2380, %v3427
        %v3429 = vpop.f32.mrf.mxu0
        %v3430 = vpop.f32.mrf.mxu0
        %v3431 = vadd.f32 %v2380, %v3430
        %v3432 = vpop.f32.mrf.mxu0
        %3433 = vmatprep.mubr.bf16.mxu0 0
        %3434 = vmatmul.mubr.bf16.gmra.mxu0 %v3368
        %v3435 = vpop.f32.mrf.mxu0
        %v3436 = vadd.f32 %v2380, %v3435
        %v3437 = vpop.f32.mrf.mxu0
        %v3438 = vpop.f32.mrf.mxu0
        %v3439 = vadd.f32 %v2380, %v3438
        %v3440 = vpop.f32.mrf.mxu0
        %3441 = vmatprep.mubr.bf16.mxu0 0
        %3442 = vmatmul.mubr.bf16.gmra.mxu0 %v3371
        %v3443 = vpop.f32.mrf.mxu0
        %v3444 = vadd.f32 %v2380, %v3443
        %v3445 = vpop.f32.mrf.mxu0
        %v3446 = vpop.f32.mrf.mxu0
        %v3447 = vadd.f32 %v2380, %v3446
        %v3448 = vpop.f32.mrf.mxu0
        %3449 = vmatprep.mubr.bf16.mxu0 0
        %3450 = vmatmul.mubr.bf16.gmra.mxu0 %v3374
        %v3451 = vpop.f32.mrf.mxu0
        %v3452 = vadd.f32 %v2380, %v3451
        %v3453 = vpop.f32.mrf.mxu0
        %v3454 = vpop.f32.mrf.mxu0
        %v3455 = vadd.f32 %v2380, %v3454
        %v3456 = vpop.f32.mrf.mxu0
        %3457 = vmatprep.mubr.bf16.mxu0 0
        %3458 = vmatmul.mubr.bf16.gmra.mxu0 %v3377
        %v3459 = vpop.f32.mrf.mxu0
        %v3460 = vadd.f32 %v2380, %v3459
        %v3461 = vpop.f32.mrf.mxu0
        %v3462 = vpop.f32.mrf.mxu0
        %v3463 = vadd.f32 %v2380, %v3462
        %v3464 = vpop.f32.mrf.mxu0
        %3465 = vmatprep.mubr.bf16.mxu0 0
        %3466 = vmatmul.mubr.bf16.gmra.mxu0 %v3380
        %v3467 = vpop.f32.mrf.mxu0
        %v3468 = vadd.f32 %v2380, %v3467
        %v3469 = vpop.f32.mrf.mxu0
        %v3470 = vpop.f32.mrf.mxu0
        %v3471 = vadd.f32 %v2380, %v3470
        %v3472 = vpop.f32.mrf.mxu0
        %3473 = vmatprep.mubr.bf16.mxu0 0
        %3474 = vmatmul.mubr.bf16.gmra.mxu0 %v3383
        %v3475 = vpop.f32.mrf.mxu0
        %v3476 = vadd.f32 %v2380, %v3475
        %v3477 = vpop.f32.mrf.mxu0
        %v3478 = vpop.f32.mrf.mxu0
        %v3479 = vadd.f32 %v2380, %v3478
        %v3480 = vpop.f32.mrf.mxu0
        %3481 = vdwg.mxu0
        %v3482 = vadd.f32 %v3240, %v3420
        %v3483 = vadd.f32 %v3241, %v3423
        %v3484 = vadd.f32 %v3242, %v3428
        %v3485 = vadd.f32 %v3243, %v3431
        %v3486 = vadd.f32 %v3244, %v3436
        %v3487 = vadd.f32 %v3245, %v3439
        %v3488 = vadd.f32 %v3246, %v3444
        %v3489 = vadd.f32 %v3247, %v3447
        %v3490 = vadd.f32 %v3248, %v3452
        %v3491 = vadd.f32 %v3249, %v3455
        %v3492 = vadd.f32 %v3250, %v3460
        %v3493 = vadd.f32 %v3251, %v3463
        %v3494 = vadd.f32 %v3252, %v3468
        %v3495 = vadd.f32 %v3253, %v3471
        %v3496 = vadd.f32 %v3254, %v3476
        %v3497 = vadd.f32 %v3255, %v3479
        %v3498 = vadd.f32 %v3482, %v2538
        %v3499 = vadd.f32 %v3483, %v2538
        %v3500 = vadd.f32 %v3484, %v2538
        %v3501 = vadd.f32 %v3485, %v2538
        %v3502 = vadd.f32 %v3486, %v2538
        %v3503 = vadd.f32 %v3487, %v2538
        %v3504 = vadd.f32 %v3488, %v2538
        %v3505 = vadd.f32 %v3489, %v2538
        %v3506 = vadd.f32 %v3490, %v2538
        %v3507 = vadd.f32 %v3491, %v2538
        %v3508 = vadd.f32 %v3492, %v2538
        %v3509 = vadd.f32 %v3493, %v2538
        %v3510 = vadd.f32 %v3494, %v2538
        %v3511 = vadd.f32 %v3495, %v2538
        %v3512 = vadd.f32 %v3496, %v2538
        %v3513 = vadd.f32 %v3497, %v2538
        %v3514 = vmax.f32 %v3498, 0.0
        %v3515 = vmax.f32 %v3499, 0.0
        %v3516 = vmax.f32 %v3500, 0.0
        %v3517 = vmax.f32 %v3501, 0.0
        %v3518 = vmax.f32 %v3502, 0.0
        %v3519 = vmax.f32 %v3503, 0.0
        %v3520 = vmax.f32 %v3504, 0.0
        %v3521 = vmax.f32 %v3505, 0.0
        %v3522 = vmax.f32 %v3506, 0.0
        %v3523 = vmax.f32 %v3507, 0.0
        %v3524 = vmax.f32 %v3508, 0.0
        %v3525 = vmax.f32 %v3509, 0.0
        %v3526 = vmax.f32 %v3510, 0.0
        %v3527 = vmax.f32 %v3511, 0.0
        %v3528 = vmax.f32 %v3512, 0.0
        %v3529 = vmax.f32 %v3513, 0.0
        %v3530 = vadd.f32 %v3514, %v2589
        %v3531 = vadd.f32 %v3515, %v2591
        %v3532 = vadd.f32 %v3516, %v2593
        %v3533 = vadd.f32 %v3517, %v2595
        %v3534 = vadd.f32 %v3518, %v2597
        %v3535 = vadd.f32 %v3519, %v2599
        %v3536 = vadd.f32 %v3520, %v2601
        %v3537 = vadd.f32 %v3521, %v2603
        %v3538 = vadd.f32 %v3522, %v2605
        %v3539 = vadd.f32 %v3523, %v2607
        %v3540 = vadd.f32 %v3524, %v2609
        %v3541 = vadd.f32 %v3525, %v2611
        %v3542 = vadd.f32 %v3526, %v2613
        %v3543 = vadd.f32 %v3527, %v2615
        %v3544 = vadd.f32 %v3528, %v2617
        %v3545 = vadd.f32 %v3529, %v2619
        %v3546 = vpack.c.bf16 %v3531, %v3530
        %v3547 = vpack.c.bf16 %v3533, %v3532
        %v3548 = vpack.c.bf16 %v3535, %v3534
        %v3549 = vpack.c.bf16 %v3537, %v3536
        %v3550 = vpack.c.bf16 %v3539, %v3538
        %v3551 = vpack.c.bf16 %v3541, %v3540
        %v3552 = vpack.c.bf16 %v3543, %v3542
        %v3553 = vpack.c.bf16 %v3545, %v3544
        %3562 = vrot.lane.b32.xlu0 %v3546, 96
        %v3563 = vpop.permute.xlu0 %3562
        %3564 = vrot.lane.b32.xlu0 %v3547, 96
        %v3565 = vpop.permute.xlu0 %3564
        %3566 = vrot.lane.b32.xlu0 %v3548, 96
        %v3567 = vpop.permute.xlu0 %3566
        %3568 = vrot.lane.b32.xlu0 %v3549, 96
        %v3569 = vpop.permute.xlu0 %3568
        %3570 = vrot.lane.b32.xlu0 %v3550, 96
        %v3571 = vpop.permute.xlu0 %3570
        %3572 = vrot.lane.b32.xlu0 %v3551, 96
        %v3573 = vpop.permute.xlu0 %3572
        %3574 = vrot.lane.b32.xlu0 %v3552, 96
        %v3575 = vpop.permute.xlu0 %3574
        %3576 = vrot.lane.b32.xlu0 %v3553, 96
        %v3577 = vpop.permute.xlu0 %3576
        %3602 = vrot.lane.b32.xlu0 %v3530, 96
        %v3603 = vpop.permute.xlu0 %3602
        %3604 = vrot.lane.b32.xlu0 %v3531, 96
        %v3605 = vpop.permute.xlu0 %3604
        %3606 = vrot.lane.b32.xlu0 %v3532, 96
        %v3607 = vpop.permute.xlu0 %3606
        %3608 = vrot.lane.b32.xlu0 %v3533, 96
        %v3609 = vpop.permute.xlu0 %3608
        %3610 = vrot.lane.b32.xlu0 %v3534, 96
        %v3611 = vpop.permute.xlu0 %3610
        %3612 = vrot.lane.b32.xlu0 %v3535, 96
        %v3613 = vpop.permute.xlu0 %3612
        %3614 = vrot.lane.b32.xlu0 %v3536, 96
        %v3615 = vpop.permute.xlu0 %3614
        %3616 = vrot.lane.b32.xlu0 %v3537, 96
        %v3617 = vpop.permute.xlu0 %3616
        %3618 = vrot.lane.b32.xlu0 %v3538, 96
        %v3619 = vpop.permute.xlu0 %3618
        %3620 = vrot.lane.b32.xlu0 %v3539, 96
        %v3621 = vpop.permute.xlu0 %3620
        %3622 = vrot.lane.b32.xlu0 %v3540, 96
        %v3623 = vpop.permute.xlu0 %3622
        %3624 = vrot.lane.b32.xlu0 %v3541, 96
        %v3625 = vpop.permute.xlu0 %3624
        %3626 = vrot.lane.b32.xlu0 %v3542, 96
        %v3627 = vpop.permute.xlu0 %3626
        %3628 = vrot.lane.b32.xlu0 %v3543, 96
        %v3629 = vpop.permute.xlu0 %3628
        %3630 = vrot.lane.b32.xlu0 %v3544, 96
        %v3631 = vpop.permute.xlu0 %3630
        %3632 = vrot.lane.b32.xlu0 %v3545, 96
        %v3633 = vpop.permute.xlu0 %3632
        %3650 = vmatprep.subr.bf16.mxu0 0
        %3651 = vmatpush1.bf16.msra.mxu0 %v3577
        %3652 = vmatprep.subr.bf16.mxu0 0
        %3653 = vmatpush1.bf16.msra.mxu0 %v3575
        %3654 = vmatprep.subr.bf16.mxu0 0
        %3655 = vmatpush1.bf16.msra.mxu0 %v3573
        %3656 = vmatprep.subr.bf16.mxu0 0
        %3657 = vmatpush1.bf16.msra.mxu0 %v3571
        %3658 = vmatprep.subr.bf16.mxu0 0
        %3659 = vmatpush1.bf16.msra.mxu0 %v3569
        %3660 = vmatprep.subr.bf16.mxu0 0
        %3661 = vmatpush1.bf16.msra.mxu0 %v3567
        %3662 = vmatprep.subr.bf16.mxu0 0
        %3663 = vmatpush1.bf16.msra.mxu0 %v3565
        %3664 = vmatprep.subr.bf16.mxu0 0
        %3665 = vmatpush1.bf16.msra.mxu0 %v3563
        %3666 = vmatprep.subr.bf16.mxu0 0
        %3667 = vmatpush2.bf16.msra.mxu0 0
        %3668 = vmatprep.subr.bf16.mxu0 0
        %3669 = vmatpush2.bf16.msra.mxu0 0
        %3670 = vmatprep.subr.bf16.mxu0 0
        %3671 = vmatpush2.bf16.msra.mxu0 0
        %3672 = vmatprep.subr.bf16.mxu0 0
        %3673 = vmatpush2.bf16.msra.mxu0 0
        %3674 = vmatprep.subr.bf16.mxu0 0
        %3675 = vmatpush2.bf16.msra.mxu0 0
        %3676 = vmatprep.subr.bf16.mxu0 0
        %3677 = vmatpush2.bf16.msra.mxu0 0
        %3678 = vmatprep.subr.bf16.mxu0 0
        %3679 = vmatpush2.bf16.msra.mxu0 0
        %3680 = vmatprep.subr.bf16.mxu0 0
        %3681 = vmatpush2.bf16.msra.mxu0 0
        %3682 = vmatprep.mubr.bf16.mxu0 0
        %3683 = vmatmul.mubr.bf16.gmra.mxu0 %v1699
        %v3684 = vpop.f32.mrf.mxu0
        %v3685 = vadd.f32 %v3603, %v3684
        %v3686 = vpop.f32.mrf.mxu0
        %v3687 = vpop.f32.mrf.mxu0
        %v3688 = vadd.f32 %v3605, %v3687
        %v3689 = vpop.f32.mrf.mxu0
        %3690 = vmatprep.mubr.bf16.mxu0 0
        %3691 = vmatmul.mubr.bf16.gmra.mxu0 %v1700
        %v3692 = vpop.f32.mrf.mxu0
        %v3693 = vadd.f32 %v3607, %v3692
        %v3694 = vpop.f32.mrf.mxu0
        %v3695 = vpop.f32.mrf.mxu0
        %v3696 = vadd.f32 %v3609, %v3695
        %v3697 = vpop.f32.mrf.mxu0
        %3698 = vmatprep.mubr.bf16.mxu0 0
        %3699 = vmatmul.mubr.bf16.gmra.mxu0 %v1701
        %v3700 = vpop.f32.mrf.mxu0
        %v3701 = vadd.f32 %v3611, %v3700
        %v3702 = vpop.f32.mrf.mxu0
        %v3703 = vpop.f32.mrf.mxu0
        %v3704 = vadd.f32 %v3613, %v3703
        %v3705 = vpop.f32.mrf.mxu0
        %3706 = vmatprep.mubr.bf16.mxu0 0
        %3707 = vmatmul.mubr.bf16.gmra.mxu0 %v1702
        %v3708 = vpop.f32.mrf.mxu0
        %v3709 = vadd.f32 %v3615, %v3708
        %v3710 = vpop.f32.mrf.mxu0
        %v3711 = vpop.f32.mrf.mxu0
        %v3712 = vadd.f32 %v3617, %v3711
        %v3713 = vpop.f32.mrf.mxu0
        %3714 = vmatprep.mubr.bf16.mxu0 0
        %3715 = vmatmul.mubr.bf16.gmra.mxu0 %v1703
        %v3716 = vpop.f32.mrf.mxu0
        %v3717 = vadd.f32 %v3619, %v3716
        %v3718 = vpop.f32.mrf.mxu0
        %v3719 = vpop.f32.mrf.mxu0
        %v3720 = vadd.f32 %v3621, %v3719
        %v3721 = vpop.f32.mrf.mxu0
        %3722 = vmatprep.mubr.bf16.mxu0 0
        %3723 = vmatmul.mubr.bf16.gmra.mxu0 %v1704
        %v3724 = vpop.f32.mrf.mxu0
        %v3725 = vadd.f32 %v3623, %v3724
        %v3726 = vpop.f32.mrf.mxu0
        %v3727 = vpop.f32.mrf.mxu0
        %v3728 = vadd.f32 %v3625, %v3727
        %v3729 = vpop.f32.mrf.mxu0
        %3730 = vmatprep.mubr.bf16.mxu0 0
        %3731 = vmatmul.mubr.bf16.gmra.mxu0 %v1705
        %v3732 = vpop.f32.mrf.mxu0
        %v3733 = vadd.f32 %v3627, %v3732
        %v3734 = vpop.f32.mrf.mxu0
        %v3735 = vpop.f32.mrf.mxu0
        %v3736 = vadd.f32 %v3629, %v3735
        %v3737 = vpop.f32.mrf.mxu0
        %3738 = vmatprep.mubr.bf16.mxu0 0
        %3739 = vmatmul.mubr.bf16.gmra.mxu0 %v1706
        %v3740 = vpop.f32.mrf.mxu0
        %v3741 = vadd.f32 %v3631, %v3740
        %v3742 = vpop.f32.mrf.mxu0
        %v3743 = vpop.f32.mrf.mxu0
        %v3744 = vadd.f32 %v3633, %v3743
        %v3745 = vpop.f32.mrf.mxu0
        %3746 = vdwg.mxu0
        %v3747 = vpack.c.bf16 %v3688, %v3685
        %v3748 = vpack.c.bf16 %v3696, %v3693
        %v3749 = vpack.c.bf16 %v3704, %v3701
        %v3750 = vpack.c.bf16 %v3712, %v3709
        %v3751 = vpack.c.bf16 %v3720, %v3717
        %v3752 = vpack.c.bf16 %v3728, %v3725
        %v3753 = vpack.c.bf16 %v3736, %v3733
        %v3754 = vpack.c.bf16 %v3744, %v3741
        %v3756 = vsel %vm1843, %v3747, 0
        %v3759 = vsel %vm1843, %v3748, 0
        %v3762 = vsel %vm1843, %v3749, 0
        %v3765 = vsel %vm1843, %v3750, 0
        %v3768 = vsel %vm1843, %v3751, 0
        %v3771 = vsel %vm1843, %v3752, 0
        %v3774 = vsel %vm1843, %v3753, 0
        %v3777 = vsel %vm1843, %v3754, 0
        %3779 = vmatprep.subr.bf16.mxu0 0
        %3780 = vmatpush1.bf16.msra.mxu0 0
        %3781 = vmatprep.subr.bf16.mxu0 0
        %3782 = vmatpush1.bf16.msra.mxu0 0
        %3783 = vmatprep.subr.bf16.mxu0 0
        %3784 = vmatpush1.bf16.msra.mxu0 0
        %3785 = vmatprep.subr.bf16.mxu0 0
        %3786 = vmatpush1.bf16.msra.mxu0 0
        %3787 = vmatprep.subr.bf16.mxu0 0
        %3788 = vmatpush1.bf16.msra.mxu0 0
        %3789 = vmatprep.subr.bf16.mxu0 0
        %3790 = vmatpush1.bf16.msra.mxu0 0
        %3791 = vmatprep.subr.bf16.mxu0 0
        %3792 = vmatpush1.bf16.msra.mxu0 %v1840
        %3793 = vmatprep.subr.bf16.mxu0 0
        %3794 = vmatpush1.bf16.msra.mxu0 %v1839
        %3795 = vmatprep.subr.bf16.mxu0 0
        %3796 = vmatpush2.bf16.msra.mxu0 0
        %3797 = vmatprep.subr.bf16.mxu0 0
        %3798 = vmatpush2.bf16.msra.mxu0 0
        %3799 = vmatprep.subr.bf16.mxu0 0
        %3800 = vmatpush2.bf16.msra.mxu0 0
        %3801 = vmatprep.subr.bf16.mxu0 0
        %3802 = vmatpush2.bf16.msra.mxu0 0
        %3803 = vmatprep.subr.bf16.mxu0 0
        %3804 = vmatpush2.bf16.msra.mxu0 0
        %3805 = vmatprep.subr.bf16.mxu0 0
        %3806 = vmatpush2.bf16.msra.mxu0 0
        %3807 = vmatprep.subr.bf16.mxu0 0
        %3808 = vmatpush2.bf16.msra.mxu0 0
        %3809 = vmatprep.subr.bf16.mxu0 0
        %3810 = vmatpush2.bf16.msra.mxu0 0
        %3811 = vmatprep.mubr.bf16.mxu0 0
        %3812 = vmatmul.mubr.bf16.gmra.mxu0 %v3756
        %v3813 = vpop.f32.mrf.mxu0
        %v3814 = vadd.f32 %v1829, %v3813
        %v3815 = vpop.f32.mrf.mxu0
        %v3816 = vpop.f32.mrf.mxu0
        %v3817 = vadd.f32 %v1829, %v3816
        %v3818 = vpop.f32.mrf.mxu0
        %3819 = vmatprep.mubr.bf16.mxu0 0
        %3820 = vmatmul.mubr.bf16.gmra.mxu0 %v3759
        %v3821 = vpop.f32.mrf.mxu0
        %v3822 = vadd.f32 %v1829, %v3821
        %v3823 = vpop.f32.mrf.mxu0
        %v3824 = vpop.f32.mrf.mxu0
        %v3825 = vadd.f32 %v1829, %v3824
        %v3826 = vpop.f32.mrf.mxu0
        %3827 = vmatprep.mubr.bf16.mxu0 0
        %3828 = vmatmul.mubr.bf16.gmra.mxu0 %v3762
        %v3829 = vpop.f32.mrf.mxu0
        %v3830 = vadd.f32 %v1829, %v3829
        %v3831 = vpop.f32.mrf.mxu0
        %v3832 = vpop.f32.mrf.mxu0
        %v3833 = vadd.f32 %v1829, %v3832
        %v3834 = vpop.f32.mrf.mxu0
        %3835 = vmatprep.mubr.bf16.mxu0 0
        %3836 = vmatmul.mubr.bf16.gmra.mxu0 %v3765
        %v3837 = vpop.f32.mrf.mxu0
        %v3838 = vadd.f32 %v1829, %v3837
        %v3839 = vpop.f32.mrf.mxu0
        %v3840 = vpop.f32.mrf.mxu0
        %v3841 = vadd.f32 %v1829, %v3840
        %v3842 = vpop.f32.mrf.mxu0
        %3843 = vmatprep.mubr.bf16.mxu0 0
        %3844 = vmatmul.mubr.bf16.gmra.mxu0 %v3768
        %v3845 = vpop.f32.mrf.mxu0
        %v3846 = vadd.f32 %v1829, %v3845
        %v3847 = vpop.f32.mrf.mxu0
        %v3848 = vpop.f32.mrf.mxu0
        %v3849 = vadd.f32 %v1829, %v3848
        %v3850 = vpop.f32.mrf.mxu0
        %3851 = vmatprep.mubr.bf16.mxu0 0
        %3852 = vmatmul.mubr.bf16.gmra.mxu0 %v3771
        %v3853 = vpop.f32.mrf.mxu0
        %v3854 = vadd.f32 %v1829, %v3853
        %v3855 = vpop.f32.mrf.mxu0
        %v3856 = vpop.f32.mrf.mxu0
        %v3857 = vadd.f32 %v1829, %v3856
        %v3858 = vpop.f32.mrf.mxu0
        %3859 = vmatprep.mubr.bf16.mxu0 0
        %3860 = vmatmul.mubr.bf16.gmra.mxu0 %v3774
        %v3861 = vpop.f32.mrf.mxu0
        %v3862 = vadd.f32 %v1829, %v3861
        %v3863 = vpop.f32.mrf.mxu0
        %v3864 = vpop.f32.mrf.mxu0
        %v3865 = vadd.f32 %v1829, %v3864
        %v3866 = vpop.f32.mrf.mxu0
        %3867 = vmatprep.mubr.bf16.mxu0 0
        %3868 = vmatmul.mubr.bf16.gmra.mxu0 %v3777
        %v3869 = vpop.f32.mrf.mxu0
        %v3870 = vadd.f32 %v1829, %v3869
        %v3871 = vpop.f32.mrf.mxu0
        %v3872 = vpop.f32.mrf.mxu0
        %v3873 = vadd.f32 %v1829, %v3872
        %v3874 = vpop.f32.mrf.mxu0
        %3875 = vdwg.mxu0
        %v3876 = vpack.c.bf16 %v3817, %v3814
        %v3877 = vpack.c.bf16 %v3825, %v3822
        %v3878 = vpack.c.bf16 %v3833, %v3830
        %v3879 = vpack.c.bf16 %v3841, %v3838
        %v3880 = vpack.c.bf16 %v3849, %v3846
        %v3881 = vpack.c.bf16 %v3857, %v3854
        %v3882 = vpack.c.bf16 %v3865, %v3862
        %v3883 = vpack.c.bf16 %v3873, %v3870
        %v3884 = vadd.f32 %v3814, 0.0
        %v3885 = vadd.f32 %v3817, 0.0
        %v3886 = vadd.f32 %v3822, 0.0
        %v3887 = vadd.f32 %v3825, 0.0
        %v3888 = vadd.f32 %v3830, 0.0
        %v3889 = vadd.f32 %v3833, 0.0
        %v3890 = vadd.f32 %v3838, 0.0
        %v3891 = vadd.f32 %v3841, 0.0
        %v3892 = vadd.f32 %v3846, 0.0
        %v3893 = vadd.f32 %v3849, 0.0
        %v3894 = vadd.f32 %v3854, 0.0
        %v3895 = vadd.f32 %v3857, 0.0
        %v3896 = vadd.f32 %v3862, 0.0
        %v3897 = vadd.f32 %v3865, 0.0
        %v3898 = vadd.f32 %v3870, 0.0
        %v3899 = vadd.f32 %v3873, 0.0
        %3900 = vmatprep.subr.bf16.mxu0 0
        %3901 = vmatpush1.bf16.msra.mxu0 %v3883
        %3902 = vmatprep.subr.bf16.mxu0 0
        %3903 = vmatpush1.bf16.msra.mxu0 %v3882
        %3904 = vmatprep.subr.bf16.mxu0 0
        %3905 = vmatpush1.bf16.msra.mxu0 %v3881
        %3906 = vmatprep.subr.bf16.mxu0 0
        %3907 = vmatpush1.bf16.msra.mxu0 %v3880
        %3908 = vmatprep.subr.bf16.mxu0 0
        %3909 = vmatpush1.bf16.msra.mxu0 %v3879
        %3910 = vmatprep.subr.bf16.mxu0 0
        %3911 = vmatpush1.bf16.msra.mxu0 %v3878
        %3912 = vmatprep.subr.bf16.mxu0 0
        %3913 = vmatpush1.bf16.msra.mxu0 %v3877
        %3914 = vmatprep.subr.bf16.mxu0 0
        %3915 = vmatpush1.bf16.msra.mxu0 %v3876
        %3916 = vmatprep.subr.bf16.mxu0 0
        %3917 = vmatpush2.bf16.msra.mxu0 0
        %3918 = vmatprep.subr.bf16.mxu0 0
        %3919 = vmatpush2.bf16.msra.mxu0 0
        %3920 = vmatprep.subr.bf16.mxu0 0
        %3921 = vmatpush2.bf16.msra.mxu0 0
        %3922 = vmatprep.subr.bf16.mxu0 0
        %3923 = vmatpush2.bf16.msra.mxu0 0
        %3924 = vmatprep.subr.bf16.mxu0 0
        %3925 = vmatpush2.bf16.msra.mxu0 0
        %3926 = vmatprep.subr.bf16.mxu0 0
        %3927 = vmatpush2.bf16.msra.mxu0 0
        %3928 = vmatprep.subr.bf16.mxu0 0
        %3929 = vmatpush2.bf16.msra.mxu0 0
        %3930 = vmatprep.subr.bf16.mxu0 0
        %3931 = vmatpush2.bf16.msra.mxu0 0
        %3932 = vmatprep.mubr.bf16.mxu0 0
        %3933 = vmatmul.mubr.bf16.gmra.mxu0 %v1699
        %v3934 = vpop.f32.mrf.mxu0
        %v3935 = vadd.f32 %v3603, %v3934
        %v3936 = vpop.f32.mrf.mxu0
        %v3937 = vpop.f32.mrf.mxu0
        %v3938 = vadd.f32 %v3605, %v3937
        %v3939 = vpop.f32.mrf.mxu0
        %3940 = vmatprep.mubr.bf16.mxu0 0
        %3941 = vmatmul.mubr.bf16.gmra.mxu0 %v1700
        %v3942 = vpop.f32.mrf.mxu0
        %v3943 = vadd.f32 %v3607, %v3942
        %v3944 = vpop.f32.mrf.mxu0
        %v3945 = vpop.f32.mrf.mxu0
        %v3946 = vadd.f32 %v3609, %v3945
        %v3947 = vpop.f32.mrf.mxu0
        %3948 = vmatprep.mubr.bf16.mxu0 0
        %3949 = vmatmul.mubr.bf16.gmra.mxu0 %v1701
        %v3950 = vpop.f32.mrf.mxu0
        %v3951 = vadd.f32 %v3611, %v3950
        %v3952 = vpop.f32.mrf.mxu0
        %v3953 = vpop.f32.mrf.mxu0
        %v3954 = vadd.f32 %v3613, %v3953
        %v3955 = vpop.f32.mrf.mxu0
        %3956 = vmatprep.mubr.bf16.mxu0 0
        %3957 = vmatmul.mubr.bf16.gmra.mxu0 %v1702
        %v3958 = vpop.f32.mrf.mxu0
        %v3959 = vadd.f32 %v3615, %v3958
        %v3960 = vpop.f32.mrf.mxu0
        %v3961 = vpop.f32.mrf.mxu0
        %v3962 = vadd.f32 %v3617, %v3961
        %v3963 = vpop.f32.mrf.mxu0
        %3964 = vmatprep.mubr.bf16.mxu0 0
        %3965 = vmatmul.mubr.bf16.gmra.mxu0 %v1703
        %v3966 = vpop.f32.mrf.mxu0
        %v3967 = vadd.f32 %v3619, %v3966
        %v3968 = vpop.f32.mrf.mxu0
        %v3969 = vpop.f32.mrf.mxu0
        %v3970 = vadd.f32 %v3621, %v3969
        %v3971 = vpop.f32.mrf.mxu0
        %3972 = vmatprep.mubr.bf16.mxu0 0
        %3973 = vmatmul.mubr.bf16.gmra.mxu0 %v1704
        %v3974 = vpop.f32.mrf.mxu0
        %v3975 = vadd.f32 %v3623, %v3974
        %v3976 = vpop.f32.mrf.mxu0
        %v3977 = vpop.f32.mrf.mxu0
        %v3978 = vadd.f32 %v3625, %v3977
        %v3979 = vpop.f32.mrf.mxu0
        %3980 = vmatprep.mubr.bf16.mxu0 0
        %3981 = vmatmul.mubr.bf16.gmra.mxu0 %v1705
        %v3982 = vpop.f32.mrf.mxu0
        %v3983 = vadd.f32 %v3627, %v3982
        %v3984 = vpop.f32.mrf.mxu0
        %v3985 = vpop.f32.mrf.mxu0
        %v3986 = vadd.f32 %v3629, %v3985
        %v3987 = vpop.f32.mrf.mxu0
        %3988 = vmatprep.mubr.bf16.mxu0 0
        %3989 = vmatmul.mubr.bf16.gmra.mxu0 %v1706
        %v3990 = vpop.f32.mrf.mxu0
        %v3991 = vadd.f32 %v3631, %v3990
        %v3992 = vpop.f32.mrf.mxu0
        %v3993 = vpop.f32.mrf.mxu0
        %v3994 = vadd.f32 %v3633, %v3993
        %v3995 = vpop.f32.mrf.mxu0
        %3996 = vdwg.mxu0
        %v3997 = vpack.c.bf16 %v3938, %v3935
        %v3998 = vpack.c.bf16 %v3946, %v3943
        %v3999 = vpack.c.bf16 %v3954, %v3951
        %v4000 = vpack.c.bf16 %v3962, %v3959
        %v4001 = vpack.c.bf16 %v3970, %v3967
        %v4002 = vpack.c.bf16 %v3978, %v3975
        %v4003 = vpack.c.bf16 %v3986, %v3983
        %v4004 = vpack.c.bf16 %v3994, %v3991
        %v4006 = vsel %vm1843, %v3997, 0
        %v4009 = vsel %vm1843, %v3998, 0
        %v4012 = vsel %vm1843, %v3999, 0
        %v4015 = vsel %vm1843, %v4000, 0
        %v4018 = vsel %vm1843, %v4001, 0
        %v4021 = vsel %vm1843, %v4002, 0
        %v4024 = vsel %vm1843, %v4003, 0
        %v4027 = vsel %vm1843, %v4004, 0
        %4029 = vmatprep.subr.bf16.mxu0 0
        %4030 = vmatpush1.bf16.msra.mxu0 0
        %4031 = vmatprep.subr.bf16.mxu0 0
        %4032 = vmatpush1.bf16.msra.mxu0 0
        %4033 = vmatprep.subr.bf16.mxu0 0
        %4034 = vmatpush1.bf16.msra.mxu0 0
        %4035 = vmatprep.subr.bf16.mxu0 0
        %4036 = vmatpush1.bf16.msra.mxu0 0
        %4037 = vmatprep.subr.bf16.mxu0 0
        %4038 = vmatpush1.bf16.msra.mxu0 0
        %4039 = vmatprep.subr.bf16.mxu0 0
        %4040 = vmatpush1.bf16.msra.mxu0 0
        %4041 = vmatprep.subr.bf16.mxu0 0
        %4042 = vmatpush1.bf16.msra.mxu0 %v2116
        %4043 = vmatprep.subr.bf16.mxu0 0
        %4044 = vmatpush1.bf16.msra.mxu0 %v2115
        %4045 = vmatprep.subr.bf16.mxu0 0
        %4046 = vmatpush2.bf16.msra.mxu0 0
        %4047 = vmatprep.subr.bf16.mxu0 0
        %4048 = vmatpush2.bf16.msra.mxu0 0
        %4049 = vmatprep.subr.bf16.mxu0 0
        %4050 = vmatpush2.bf16.msra.mxu0 0
        %4051 = vmatprep.subr.bf16.mxu0 0
        %4052 = vmatpush2.bf16.msra.mxu0 0
        %4053 = vmatprep.subr.bf16.mxu0 0
        %4054 = vmatpush2.bf16.msra.mxu0 0
        %4055 = vmatprep.subr.bf16.mxu0 0
        %4056 = vmatpush2.bf16.msra.mxu0 0
        %4057 = vmatprep.subr.bf16.mxu0 0
        %4058 = vmatpush2.bf16.msra.mxu0 0
        %4059 = vmatprep.subr.bf16.mxu0 0
        %4060 = vmatpush2.bf16.msra.mxu0 0
        %4061 = vmatprep.mubr.bf16.mxu0 0
        %4062 = vmatmul.mubr.bf16.gmra.mxu0 %v4006
        %v4063 = vpop.f32.mrf.mxu0
        %v4064 = vadd.f32 %v2105, %v4063
        %v4065 = vpop.f32.mrf.mxu0
        %v4066 = vpop.f32.mrf.mxu0
        %v4067 = vadd.f32 %v2105, %v4066
        %v4068 = vpop.f32.mrf.mxu0
        %4069 = vmatprep.mubr.bf16.mxu0 0
        %4070 = vmatmul.mubr.bf16.gmra.mxu0 %v4009
        %v4071 = vpop.f32.mrf.mxu0
        %v4072 = vadd.f32 %v2105, %v4071
        %v4073 = vpop.f32.mrf.mxu0
        %v4074 = vpop.f32.mrf.mxu0
        %v4075 = vadd.f32 %v2105, %v4074
        %v4076 = vpop.f32.mrf.mxu0
        %4077 = vmatprep.mubr.bf16.mxu0 0
        %4078 = vmatmul.mubr.bf16.gmra.mxu0 %v4012
        %v4079 = vpop.f32.mrf.mxu0
        %v4080 = vadd.f32 %v2105, %v4079
        %v4081 = vpop.f32.mrf.mxu0
        %v4082 = vpop.f32.mrf.mxu0
        %v4083 = vadd.f32 %v2105, %v4082
        %v4084 = vpop.f32.mrf.mxu0
        %4085 = vmatprep.mubr.bf16.mxu0 0
        %4086 = vmatmul.mubr.bf16.gmra.mxu0 %v4015
        %v4087 = vpop.f32.mrf.mxu0
        %v4088 = vadd.f32 %v2105, %v4087
        %v4089 = vpop.f32.mrf.mxu0
        %v4090 = vpop.f32.mrf.mxu0
        %v4091 = vadd.f32 %v2105, %v4090
        %v4092 = vpop.f32.mrf.mxu0
        %4093 = vmatprep.mubr.bf16.mxu0 0
        %4094 = vmatmul.mubr.bf16.gmra.mxu0 %v4018
        %v4095 = vpop.f32.mrf.mxu0
        %v4096 = vadd.f32 %v2105, %v4095
        %v4097 = vpop.f32.mrf.mxu0
        %v4098 = vpop.f32.mrf.mxu0
        %v4099 = vadd.f32 %v2105, %v4098
        %v4100 = vpop.f32.mrf.mxu0
        %4101 = vmatprep.mubr.bf16.mxu0 0
        %4102 = vmatmul.mubr.bf16.gmra.mxu0 %v4021
        %v4103 = vpop.f32.mrf.mxu0
        %v4104 = vadd.f32 %v2105, %v4103
        %v4105 = vpop.f32.mrf.mxu0
        %v4106 = vpop.f32.mrf.mxu0
        %v4107 = vadd.f32 %v2105, %v4106
        %v4108 = vpop.f32.mrf.mxu0
        %4109 = vmatprep.mubr.bf16.mxu0 0
        %4110 = vmatmul.mubr.bf16.gmra.mxu0 %v4024
        %v4111 = vpop.f32.mrf.mxu0
        %v4112 = vadd.f32 %v2105, %v4111
        %v4113 = vpop.f32.mrf.mxu0
        %v4114 = vpop.f32.mrf.mxu0
        %v4115 = vadd.f32 %v2105, %v4114
        %v4116 = vpop.f32.mrf.mxu0
        %4117 = vmatprep.mubr.bf16.mxu0 0
        %4118 = vmatmul.mubr.bf16.gmra.mxu0 %v4027
        %v4119 = vpop.f32.mrf.mxu0
        %v4120 = vadd.f32 %v2105, %v4119
        %v4121 = vpop.f32.mrf.mxu0
        %v4122 = vpop.f32.mrf.mxu0
        %v4123 = vadd.f32 %v2105, %v4122
        %v4124 = vpop.f32.mrf.mxu0
        %4125 = vdwg.mxu0
        %v4126 = vpack.c.bf16 %v4067, %v4064
        %v4127 = vpack.c.bf16 %v4075, %v4072
        %v4128 = vpack.c.bf16 %v4083, %v4080
        %v4129 = vpack.c.bf16 %v4091, %v4088
        %v4130 = vpack.c.bf16 %v4099, %v4096
        %v4131 = vpack.c.bf16 %v4107, %v4104
        %v4132 = vpack.c.bf16 %v4115, %v4112
        %v4133 = vpack.c.bf16 %v4123, %v4120
        %v4134 = vadd.f32 %v3884, %v4064
        %v4135 = vadd.f32 %v3885, %v4067
        %v4136 = vadd.f32 %v3886, %v4072
        %v4137 = vadd.f32 %v3887, %v4075
        %v4138 = vadd.f32 %v3888, %v4080
        %v4139 = vadd.f32 %v3889, %v4083
        %v4140 = vadd.f32 %v3890, %v4088
        %v4141 = vadd.f32 %v3891, %v4091
        %v4142 = vadd.f32 %v3892, %v4096
        %v4143 = vadd.f32 %v3893, %v4099
        %v4144 = vadd.f32 %v3894, %v4104
        %v4145 = vadd.f32 %v3895, %v4107
        %v4146 = vadd.f32 %v3896, %v4112
        %v4147 = vadd.f32 %v3897, %v4115
        %v4148 = vadd.f32 %v3898, %v4120
        %v4149 = vadd.f32 %v3899, %v4123
        %4150 = vmatprep.subr.bf16.mxu0 0
        %4151 = vmatpush1.bf16.msra.mxu0 %v4133
        %4152 = vmatprep.subr.bf16.mxu0 0
        %4153 = vmatpush1.bf16.msra.mxu0 %v4132
        %4154 = vmatprep.subr.bf16.mxu0 0
        %4155 = vmatpush1.bf16.msra.mxu0 %v4131
        %4156 = vmatprep.subr.bf16.mxu0 0
        %4157 = vmatpush1.bf16.msra.mxu0 %v4130
        %4158 = vmatprep.subr.bf16.mxu0 0
        %4159 = vmatpush1.bf16.msra.mxu0 %v4129
        %4160 = vmatprep.subr.bf16.mxu0 0
        %4161 = vmatpush1.bf16.msra.mxu0 %v4128
        %4162 = vmatprep.subr.bf16.mxu0 0
        %4163 = vmatpush1.bf16.msra.mxu0 %v4127
        %4164 = vmatprep.subr.bf16.mxu0 0
        %4165 = vmatpush1.bf16.msra.mxu0 %v4126
        %4166 = vmatprep.subr.bf16.mxu0 0
        %4167 = vmatpush2.bf16.msra.mxu0 0
        %4168 = vmatprep.subr.bf16.mxu0 0
        %4169 = vmatpush2.bf16.msra.mxu0 0
        %4170 = vmatprep.subr.bf16.mxu0 0
        %4171 = vmatpush2.bf16.msra.mxu0 0
        %4172 = vmatprep.subr.bf16.mxu0 0
        %4173 = vmatpush2.bf16.msra.mxu0 0
        %4174 = vmatprep.subr.bf16.mxu0 0
        %4175 = vmatpush2.bf16.msra.mxu0 0
        %4176 = vmatprep.subr.bf16.mxu0 0
        %4177 = vmatpush2.bf16.msra.mxu0 0
        %4178 = vmatprep.subr.bf16.mxu0 0
        %4179 = vmatpush2.bf16.msra.mxu0 0
        %4180 = vmatprep.subr.bf16.mxu0 0
        %4181 = vmatpush2.bf16.msra.mxu0 0
        %4182 = vmatprep.mubr.bf16.mxu0 0
        %4183 = vmatmul.mubr.bf16.gmra.mxu0 %v1699
        %v4184 = vpop.f32.mrf.mxu0
        %v4185 = vadd.f32 %v3603, %v4184
        %v4186 = vpop.f32.mrf.mxu0
        %v4187 = vpop.f32.mrf.mxu0
        %v4188 = vadd.f32 %v3605, %v4187
        %v4189 = vpop.f32.mrf.mxu0
        %4190 = vmatprep.mubr.bf16.mxu0 0
        %4191 = vmatmul.mubr.bf16.gmra.mxu0 %v1700
        %v4192 = vpop.f32.mrf.mxu0
        %v4193 = vadd.f32 %v3607, %v4192
        %v4194 = vpop.f32.mrf.mxu0
        %v4195 = vpop.f32.mrf.mxu0
        %v4196 = vadd.f32 %v3609, %v4195
        %v4197 = vpop.f32.mrf.mxu0
        %4198 = vmatprep.mubr.bf16.mxu0 0
        %4199 = vmatmul.mubr.bf16.gmra.mxu0 %v1701
        %v4200 = vpop.f32.mrf.mxu0
        %v4201 = vadd.f32 %v3611, %v4200
        %v4202 = vpop.f32.mrf.mxu0
        %v4203 = vpop.f32.mrf.mxu0
        %v4204 = vadd.f32 %v3613, %v4203
        %v4205 = vpop.f32.mrf.mxu0
        %4206 = vmatprep.mubr.bf16.mxu0 0
        %4207 = vmatmul.mubr.bf16.gmra.mxu0 %v1702
        %v4208 = vpop.f32.mrf.mxu0
        %v4209 = vadd.f32 %v3615, %v4208
        %v4210 = vpop.f32.mrf.mxu0
        %v4211 = vpop.f32.mrf.mxu0
        %v4212 = vadd.f32 %v3617, %v4211
        %v4213 = vpop.f32.mrf.mxu0
        %4214 = vmatprep.mubr.bf16.mxu0 0
        %4215 = vmatmul.mubr.bf16.gmra.mxu0 %v1703
        %v4216 = vpop.f32.mrf.mxu0
        %v4217 = vadd.f32 %v3619, %v4216
        %v4218 = vpop.f32.mrf.mxu0
        %v4219 = vpop.f32.mrf.mxu0
        %v4220 = vadd.f32 %v3621, %v4219
        %v4221 = vpop.f32.mrf.mxu0
        %4222 = vmatprep.mubr.bf16.mxu0 0
        %4223 = vmatmul.mubr.bf16.gmra.mxu0 %v1704
        %v4224 = vpop.f32.mrf.mxu0
        %v4225 = vadd.f32 %v3623, %v4224
        %v4226 = vpop.f32.mrf.mxu0
        %v4227 = vpop.f32.mrf.mxu0
        %v4228 = vadd.f32 %v3625, %v4227
        %v4229 = vpop.f32.mrf.mxu0
        %4230 = vmatprep.mubr.bf16.mxu0 0
        %4231 = vmatmul.mubr.bf16.gmra.mxu0 %v1705
        %v4232 = vpop.f32.mrf.mxu0
        %v4233 = vadd.f32 %v3627, %v4232
        %v4234 = vpop.f32.mrf.mxu0
        %v4235 = vpop.f32.mrf.mxu0
        %v4236 = vadd.f32 %v3629, %v4235
        %v4237 = vpop.f32.mrf.mxu0
        %4238 = vmatprep.mubr.bf16.mxu0 0
        %4239 = vmatmul.mubr.bf16.gmra.mxu0 %v1706
        %v4240 = vpop.f32.mrf.mxu0
        %v4241 = vadd.f32 %v3631, %v4240
        %v4242 = vpop.f32.mrf.mxu0
        %v4243 = vpop.f32.mrf.mxu0
        %v4244 = vadd.f32 %v3633, %v4243
        %v4245 = vpop.f32.mrf.mxu0
        %4246 = vdwg.mxu0
        %v4247 = vpack.c.bf16 %v4188, %v4185
        %v4248 = vpack.c.bf16 %v4196, %v4193
        %v4249 = vpack.c.bf16 %v4204, %v4201
        %v4250 = vpack.c.bf16 %v4212, %v4209
        %v4251 = vpack.c.bf16 %v4220, %v4217
        %v4252 = vpack.c.bf16 %v4228, %v4225
        %v4253 = vpack.c.bf16 %v4236, %v4233
        %v4254 = vpack.c.bf16 %v4244, %v4241
        %v4256 = vsel %vm1843, %v4247, 0
        %v4259 = vsel %vm1843, %v4248, 0
        %v4262 = vsel %vm1843, %v4249, 0
        %v4265 = vsel %vm1843, %v4250, 0
        %v4268 = vsel %vm1843, %v4251, 0
        %v4271 = vsel %vm1843, %v4252, 0
        %v4274 = vsel %vm1843, %v4253, 0
        %v4277 = vsel %vm1843, %v4254, 0
        %4279 = vmatprep.subr.bf16.mxu0 0
        %4280 = vmatpush1.bf16.msra.mxu0 0
        %4281 = vmatprep.subr.bf16.mxu0 0
        %4282 = vmatpush1.bf16.msra.mxu0 0
        %4283 = vmatprep.subr.bf16.mxu0 0
        %4284 = vmatpush1.bf16.msra.mxu0 0
        %4285 = vmatprep.subr.bf16.mxu0 0
        %4286 = vmatpush1.bf16.msra.mxu0 0
        %4287 = vmatprep.subr.bf16.mxu0 0
        %4288 = vmatpush1.bf16.msra.mxu0 0
        %4289 = vmatprep.subr.bf16.mxu0 0
        %4290 = vmatpush1.bf16.msra.mxu0 0
        %4291 = vmatprep.subr.bf16.mxu0 0
        %4292 = vmatpush1.bf16.msra.mxu0 %v2391
        %4293 = vmatprep.subr.bf16.mxu0 0
        %4294 = vmatpush1.bf16.msra.mxu0 %v2390
        %4295 = vmatprep.subr.bf16.mxu0 0
        %4296 = vmatpush2.bf16.msra.mxu0 0
        %4297 = vmatprep.subr.bf16.mxu0 0
        %4298 = vmatpush2.bf16.msra.mxu0 0
        %4299 = vmatprep.subr.bf16.mxu0 0
        %4300 = vmatpush2.bf16.msra.mxu0 0
        %4301 = vmatprep.subr.bf16.mxu0 0
        %4302 = vmatpush2.bf16.msra.mxu0 0
        %4303 = vmatprep.subr.bf16.mxu0 0
        %4304 = vmatpush2.bf16.msra.mxu0 0
        %4305 = vmatprep.subr.bf16.mxu0 0
        %4306 = vmatpush2.bf16.msra.mxu0 0
        %4307 = vmatprep.subr.bf16.mxu0 0
        %4308 = vmatpush2.bf16.msra.mxu0 0
        %4309 = vmatprep.subr.bf16.mxu0 0
        %4310 = vmatpush2.bf16.msra.mxu0 0
        %4311 = vmatprep.mubr.bf16.mxu0 0
        %4312 = vmatmul.mubr.bf16.gmra.mxu0 %v4256
        %v4313 = vpop.f32.mrf.mxu0
        %v4314 = vadd.f32 %v2380, %v4313
        %v4315 = vpop.f32.mrf.mxu0
        %v4316 = vpop.f32.mrf.mxu0
        %v4317 = vadd.f32 %v2380, %v4316
        %v4318 = vpop.f32.mrf.mxu0
        %4319 = vmatprep.mubr.bf16.mxu0 0
        %4320 = vmatmul.mubr.bf16.gmra.mxu0 %v4259
        %v4321 = vpop.f32.mrf.mxu0
        %v4322 = vadd.f32 %v2380, %v4321
        %v4323 = vpop.f32.mrf.mxu0
        %v4324 = vpop.f32.mrf.mxu0
        %v4325 = vadd.f32 %v2380, %v4324
        %v4326 = vpop.f32.mrf.mxu0
        %4327 = vmatprep.mubr.bf16.mxu0 0
        %4328 = vmatmul.mubr.bf16.gmra.mxu0 %v4262
        %v4329 = vpop.f32.mrf.mxu0
        %v4330 = vadd.f32 %v2380, %v4329
        %v4331 = vpop.f32.mrf.mxu0
        %v4332 = vpop.f32.mrf.mxu0
        %v4333 = vadd.f32 %v2380, %v4332
        %v4334 = vpop.f32.mrf.mxu0
        %4335 = vmatprep.mubr.bf16.mxu0 0
        %4336 = vmatmul.mubr.bf16.gmra.mxu0 %v4265
        %v4337 = vpop.f32.mrf.mxu0
        %v4338 = vadd.f32 %v2380, %v4337
        %v4339 = vpop.f32.mrf.mxu0
        %v4340 = vpop.f32.mrf.mxu0
        %v4341 = vadd.f32 %v2380, %v4340
        %v4342 = vpop.f32.mrf.mxu0
        %4343 = vmatprep.mubr.bf16.mxu0 0
        %4344 = vmatmul.mubr.bf16.gmra.mxu0 %v4268
        %v4345 = vpop.f32.mrf.mxu0
        %v4346 = vadd.f32 %v2380, %v4345
        %v4347 = vpop.f32.mrf.mxu0
        %v4348 = vpop.f32.mrf.mxu0
        %v4349 = vadd.f32 %v2380, %v4348
        %v4350 = vpop.f32.mrf.mxu0
        %4351 = vmatprep.mubr.bf16.mxu0 0
        %4352 = vmatmul.mubr.bf16.gmra.mxu0 %v4271
        %v4353 = vpop.f32.mrf.mxu0
        %v4354 = vadd.f32 %v2380, %v4353
        %v4355 = vpop.f32.mrf.mxu0
        %v4356 = vpop.f32.mrf.mxu0
        %v4357 = vadd.f32 %v2380, %v4356
        %v4358 = vpop.f32.mrf.mxu0
        %4359 = vmatprep.mubr.bf16.mxu0 0
        %4360 = vmatmul.mubr.bf16.gmra.mxu0 %v4274
        %v4361 = vpop.f32.mrf.mxu0
        %v4362 = vadd.f32 %v2380, %v4361
        %v4363 = vpop.f32.mrf.mxu0
        %v4364 = vpop.f32.mrf.mxu0
        %v4365 = vadd.f32 %v2380, %v4364
        %v4366 = vpop.f32.mrf.mxu0
        %4367 = vmatprep.mubr.bf16.mxu0 0
        %4368 = vmatmul.mubr.bf16.gmra.mxu0 %v4277
        %v4369 = vpop.f32.mrf.mxu0
        %v4370 = vadd.f32 %v2380, %v4369
        %v4371 = vpop.f32.mrf.mxu0
        %v4372 = vpop.f32.mrf.mxu0
        %v4373 = vadd.f32 %v2380, %v4372
        %v4374 = vpop.f32.mrf.mxu0
        %4375 = vdwg.mxu0
        %v4376 = vadd.f32 %v4134, %v4314
        %v4377 = vadd.f32 %v4135, %v4317
        %v4378 = vadd.f32 %v4136, %v4322
        %v4379 = vadd.f32 %v4137, %v4325
        %v4380 = vadd.f32 %v4138, %v4330
        %v4381 = vadd.f32 %v4139, %v4333
        %v4382 = vadd.f32 %v4140, %v4338
        %v4383 = vadd.f32 %v4141, %v4341
        %v4384 = vadd.f32 %v4142, %v4346
        %v4385 = vadd.f32 %v4143, %v4349
        %v4386 = vadd.f32 %v4144, %v4354
        %v4387 = vadd.f32 %v4145, %v4357
        %v4388 = vadd.f32 %v4146, %v4362
        %v4389 = vadd.f32 %v4147, %v4365
        %v4390 = vadd.f32 %v4148, %v4370
        %v4391 = vadd.f32 %v4149, %v4373
        %v4392 = vadd.f32 %v4376, %v2538
        %v4393 = vadd.f32 %v4377, %v2538
        %v4394 = vadd.f32 %v4378, %v2538
        %v4395 = vadd.f32 %v4379, %v2538
        %v4396 = vadd.f32 %v4380, %v2538
        %v4397 = vadd.f32 %v4381, %v2538
        %v4398 = vadd.f32 %v4382, %v2538
        %v4399 = vadd.f32 %v4383, %v2538
        %v4400 = vadd.f32 %v4384, %v2538
        %v4401 = vadd.f32 %v4385, %v2538
        %v4402 = vadd.f32 %v4386, %v2538
        %v4403 = vadd.f32 %v4387, %v2538
        %v4404 = vadd.f32 %v4388, %v2538
        %v4405 = vadd.f32 %v4389, %v2538
        %v4406 = vadd.f32 %v4390, %v2538
        %v4407 = vadd.f32 %v4391, %v2538
        %v4408 = vmax.f32 %v4392, 0.0
        %v4409 = vmax.f32 %v4393, 0.0
        %v4410 = vmax.f32 %v4394, 0.0
        %v4411 = vmax.f32 %v4395, 0.0
        %v4412 = vmax.f32 %v4396, 0.0
        %v4413 = vmax.f32 %v4397, 0.0
        %v4414 = vmax.f32 %v4398, 0.0
        %v4415 = vmax.f32 %v4399, 0.0
        %v4416 = vmax.f32 %v4400, 0.0
        %v4417 = vmax.f32 %v4401, 0.0
        %v4418 = vmax.f32 %v4402, 0.0
        %v4419 = vmax.f32 %v4403, 0.0
        %v4420 = vmax.f32 %v4404, 0.0
        %v4421 = vmax.f32 %v4405, 0.0
        %v4422 = vmax.f32 %v4406, 0.0
        %v4423 = vmax.f32 %v4407, 0.0
        %v4424 = vpack.c.bf16 %v4409, %v4408
        %v4425 = vpack.c.bf16 %v4411, %v4410
        %v4426 = vpack.c.bf16 %v4413, %v4412
        %v4427 = vpack.c.bf16 %v4415, %v4414
        %v4428 = vpack.c.bf16 %v4417, %v4416
        %v4429 = vpack.c.bf16 %v4419, %v4418
        %v4430 = vpack.c.bf16 %v4421, %v4420
        %v4431 = vpack.c.bf16 %v4423, %v4422
        %v4432 = vld [vmem:[%s11] sm:$0xf]
        %v4433 = vld [vmem:[%s11 + $0x4] sm:$0xf]
        %v4434 = vld [vmem:[%s11 + $0x8] sm:$0xf]
        %v4435 = vld [vmem:[%s11 + $0xc] sm:$0xf]
        %v4436 = vld [vmem:[%s12] sm:$0x1]
        %v4438 = vlaneseq
        %v4439 = vshrl.u32 %v4438, 7
        %v4440 = vsub.s32 0, %v4439
        %v4441 = vrot.slane %v4436, %v4440
        %4451 = vrot.lane.b32.xlu0 %v4424, 96
        %v4452 = vpop.permute.xlu0 %4451
        %4453 = vrot.lane.b32.xlu0 %v4425, 96
        %v4454 = vpop.permute.xlu0 %4453
        %4455 = vrot.lane.b32.xlu0 %v4426, 96
        %v4456 = vpop.permute.xlu0 %4455
        %4457 = vrot.lane.b32.xlu0 %v4427, 96
        %v4458 = vpop.permute.xlu0 %4457
        %4459 = vrot.lane.b32.xlu0 %v4428, 96
        %v4460 = vpop.permute.xlu0 %4459
        %4461 = vrot.lane.b32.xlu0 %v4429, 96
        %v4462 = vpop.permute.xlu0 %4461
        %4463 = vrot.lane.b32.xlu0 %v4430, 96
        %v4464 = vpop.permute.xlu0 %4463
        %4465 = vrot.lane.b32.xlu0 %v4431, 96
        %v4466 = vpop.permute.xlu0 %4465
        %v4471 = vunpack.c.l.b16 %v4432
        %v4472 = vunpack.c.l.b16 %v4433
        %v4473 = vunpack.c.l.b16 %v4434
        %v4474 = vunpack.c.l.b16 %v4435
        %v4475 = vpack.c.b16 %v4472, %v4471
        %v4476 = vpack.c.b16 %v4474, %v4473
        %v4480 = vsel %vm1843, %v4452, 0
        %v4483 = vsel %vm1843, %v4454, 0
        %v4486 = vsel %vm1843, %v4456, 0
        %v4489 = vsel %vm1843, %v4458, 0
        %v4492 = vsel %vm1843, %v4460, 0
        %v4495 = vsel %vm1843, %v4462, 0
        %v4498 = vsel %vm1843, %v4464, 0
        %v4501 = vsel %vm1843, %v4466, 0
        %4503 = vmatprep.subr.bf16.mxu0 0
        %4504 = vmatpush1.bf16.msra.mxu0 0
        %4505 = vmatprep.subr.bf16.mxu0 0
        %4506 = vmatpush1.bf16.msra.mxu0 0
        %4507 = vmatprep.subr.bf16.mxu0 0
        %4508 = vmatpush1.bf16.msra.mxu0 0
        %4509 = vmatprep.subr.bf16.mxu0 0
        %4510 = vmatpush1.bf16.msra.mxu0 0
        %4511 = vmatprep.subr.bf16.mxu0 0
        %4512 = vmatpush1.bf16.msra.mxu0 0
        %4513 = vmatprep.subr.bf16.mxu0 0
        %4514 = vmatpush1.bf16.msra.mxu0 0
        %4515 = vmatprep.subr.bf16.mxu0 0
        %4516 = vmatpush1.bf16.msra.mxu0 %v4476
        %4517 = vmatprep.subr.bf16.mxu0 0
        %4518 = vmatpush1.bf16.msra.mxu0 %v4475
        %4519 = vmatprep.subr.bf16.mxu0 0
        %4520 = vmatpush2.bf16.msra.mxu0 0
        %4521 = vmatprep.subr.bf16.mxu0 0
        %4522 = vmatpush2.bf16.msra.mxu0 0
        %4523 = vmatprep.subr.bf16.mxu0 0
        %4524 = vmatpush2.bf16.msra.mxu0 0
        %4525 = vmatprep.subr.bf16.mxu0 0
        %4526 = vmatpush2.bf16.msra.mxu0 0
        %4527 = vmatprep.subr.bf16.mxu0 0
        %4528 = vmatpush2.bf16.msra.mxu0 0
        %4529 = vmatprep.subr.bf16.mxu0 0
        %4530 = vmatpush2.bf16.msra.mxu0 0
        %4531 = vmatprep.subr.bf16.mxu0 0
        %4532 = vmatpush2.bf16.msra.mxu0 0
        %4533 = vmatprep.subr.bf16.mxu0 0
        %4534 = vmatpush2.bf16.msra.mxu0 0
        %4535 = vmatprep.mubr.bf16.mxu0 0
        %4536 = vmatmul.mubr.bf16.gmra.mxu0 %v4480
        %v4537 = vpop.f32.mrf.mxu0
        %v4538 = vadd.f32 %v4441, %v4537
        %v4539 = vpop.f32.mrf.mxu0
        %v4540 = vpop.f32.mrf.mxu0
        %v4541 = vadd.f32 %v4441, %v4540
        %v4542 = vpop.f32.mrf.mxu0
        %4543 = vmatprep.mubr.bf16.mxu0 0
        %4544 = vmatmul.mubr.bf16.gmra.mxu0 %v4483
        %v4545 = vpop.f32.mrf.mxu0
        %v4546 = vadd.f32 %v4441, %v4545
        %v4547 = vpop.f32.mrf.mxu0
        %v4548 = vpop.f32.mrf.mxu0
        %v4549 = vadd.f32 %v4441, %v4548
        %v4550 = vpop.f32.mrf.mxu0
        %4551 = vmatprep.mubr.bf16.mxu0 0
        %4552 = vmatmul.mubr.bf16.gmra.mxu0 %v4486
        %v4553 = vpop.f32.mrf.mxu0
        %v4554 = vadd.f32 %v4441, %v4553
        %v4555 = vpop.f32.mrf.mxu0
        %v4556 = vpop.f32.mrf.mxu0
        %v4557 = vadd.f32 %v4441, %v4556
        %v4558 = vpop.f32.mrf.mxu0
        %4559 = vmatprep.mubr.bf16.mxu0 0
        %4560 = vmatmul.mubr.bf16.gmra.mxu0 %v4489
        %v4561 = vpop.f32.mrf.mxu0
        %v4562 = vadd.f32 %v4441, %v4561
        %v4563 = vpop.f32.mrf.mxu0
        %v4564 = vpop.f32.mrf.mxu0
        %v4565 = vadd.f32 %v4441, %v4564
        %v4566 = vpop.f32.mrf.mxu0
        %4567 = vmatprep.mubr.bf16.mxu0 0
        %4568 = vmatmul.mubr.bf16.gmra.mxu0 %v4492
        %v4569 = vpop.f32.mrf.mxu0
        %v4570 = vadd.f32 %v4441, %v4569
        %v4571 = vpop.f32.mrf.mxu0
        %v4572 = vpop.f32.mrf.mxu0
        %v4573 = vadd.f32 %v4441, %v4572
        %v4574 = vpop.f32.mrf.mxu0
        %4575 = vmatprep.mubr.bf16.mxu0 0
        %4576 = vmatmul.mubr.bf16.gmra.mxu0 %v4495
        %v4577 = vpop.f32.mrf.mxu0
        %v4578 = vadd.f32 %v4441, %v4577
        %v4579 = vpop.f32.mrf.mxu0
        %v4580 = vpop.f32.mrf.mxu0
        %v4581 = vadd.f32 %v4441, %v4580
        %v4582 = vpop.f32.mrf.mxu0
        %4583 = vmatprep.mubr.bf16.mxu0 0
        %4584 = vmatmul.mubr.bf16.gmra.mxu0 %v4498
        %v4585 = vpop.f32.mrf.mxu0
        %v4586 = vadd.f32 %v4441, %v4585
        %v4587 = vpop.f32.mrf.mxu0
        %v4588 = vpop.f32.mrf.mxu0
        %v4589 = vadd.f32 %v4441, %v4588
        %v4590 = vpop.f32.mrf.mxu0
        %4591 = vmatprep.mubr.bf16.mxu0 0
        %4592 = vmatmul.mubr.bf16.gmra.mxu0 %v4501
        %v4593 = vpop.f32.mrf.mxu0
        %v4594 = vadd.f32 %v4441, %v4593
        %v4595 = vpop.f32.mrf.mxu0
        %v4596 = vpop.f32.mrf.mxu0
        %v4597 = vadd.f32 %v4441, %v4596
        %v4598 = vpop.f32.mrf.mxu0
        %4599 = vdwg.mxu0
        %v4600 = vtanh.pop %v4538
        %v4601 = vtanh.pop %v4541
        %v4602 = vtanh.pop %v4546
        %v4603 = vtanh.pop %v4549
        %v4604 = vtanh.pop %v4554
        %v4605 = vtanh.pop %v4557
        %v4606 = vtanh.pop %v4562
        %v4607 = vtanh.pop %v4565
        %v4608 = vtanh.pop %v4570
        %v4609 = vtanh.pop %v4573
        %v4610 = vtanh.pop %v4578
        %v4611 = vtanh.pop %v4581
        %v4612 = vtanh.pop %v4586
        %v4613 = vtanh.pop %v4589
        %v4614 = vtanh.pop %v4594
        %v4615 = vtanh.pop %v4597
        %v4616 = vld [vmem:[%s13] sm:$0x1]
        %v4618 = vlaneseq
        %v4619 = vshrl.u32 %v4618, 7
        %v4620 = vsub.s32 0, %v4619
        %v4621 = vrot.slane %v4616, %v4620
        %v4623 = vmul.f32 %v4600, %v4621
        %v4624 = vmul.f32 %v4601, %v4621
        %v4625 = vmul.f32 %v4602, %v4621
        %v4626 = vmul.f32 %v4603, %v4621
        %v4627 = vmul.f32 %v4604, %v4621
        %v4628 = vmul.f32 %v4605, %v4621
        %v4629 = vmul.f32 %v4606, %v4621
        %v4630 = vmul.f32 %v4607, %v4621
        %v4631 = vmul.f32 %v4608, %v4621
        %v4632 = vmul.f32 %v4609, %v4621
        %v4633 = vmul.f32 %v4610, %v4621
        %v4634 = vmul.f32 %v4611, %v4621
        %v4635 = vmul.f32 %v4612, %v4621
        %v4636 = vmul.f32 %v4613, %v4621
        %v4637 = vmul.f32 %v4614, %v4621
        %v4638 = vmul.f32 %v4615, %v4621
        %v4639 = vld [vmem:[%s14] sm:$0x1]
        %v4641 = vlaneseq
        %v4642 = vshrl.u32 %v4641, 7
        %v4643 = vsub.s32 0, %v4642
        %v4644 = vrot.slane %v4639, %v4643
        %v4646 = vadd.f32 %v4623, %v4644
        %v4647 = vadd.f32 %v4624, %v4644
        %v4648 = vadd.f32 %v4625, %v4644
        %v4649 = vadd.f32 %v4626, %v4644
        %v4650 = vadd.f32 %v4627, %v4644
        %v4651 = vadd.f32 %v4628, %v4644
        %v4652 = vadd.f32 %v4629, %v4644
        %v4653 = vadd.f32 %v4630, %v4644
        %v4654 = vadd.f32 %v4631, %v4644
        %v4655 = vadd.f32 %v4632, %v4644
        %v4656 = vadd.f32 %v4633, %v4644
        %v4657 = vadd.f32 %v4634, %v4644
        %v4658 = vadd.f32 %v4635, %v4644
        %v4659 = vadd.f32 %v4636, %v4644
        %v4660 = vadd.f32 %v4637, %v4644
        %v4661 = vadd.f32 %v4638, %v4644
        %v4662 = vpack.c.bf16 %v4647, %v4646
        %v4663 = vpack.c.bf16 %v4649, %v4648
        %v4664 = vpack.c.bf16 %v4651, %v4650
        %v4665 = vpack.c.bf16 %v4653, %v4652
        %v4666 = vpack.c.bf16 %v4655, %v4654
        %v4667 = vpack.c.bf16 %v4657, %v4656
        %v4668 = vpack.c.bf16 %v4659, %v4658
        %v4669 = vpack.c.bf16 %v4661, %v4660
        %v4670 = vld [vmem:[%s15] sm:$0xf]
        %v4671 = vld [vmem:[%s15 + $0x4] sm:$0xf]
        %v4672 = vld [vmem:[%s15 + $0x8] sm:$0xf]
        %v4673 = vld [vmem:[%s15 + $0xc] sm:$0xf]
        %v4674 = vld [vmem:[%s16] sm:$0x1]
        %v4676 = vlaneseq
        %v4677 = vshrl.u32 %v4676, 7
        %v4678 = vsub.s32 0, %v4677
        %v4679 = vrot.slane %v4674, %v4678
        %v4685 = vunpack.c.l.b16 %v4670
        %v4686 = vunpack.c.l.b16 %v4671
        %v4687 = vunpack.c.l.b16 %v4672
        %v4688 = vunpack.c.l.b16 %v4673
        %v4689 = vpack.c.b16 %v4686, %v4685
        %v4690 = vpack.c.b16 %v4688, %v4687
        %v4694 = vsel %vm1843, %v4662, 0
        %v4697 = vsel %vm1843, %v4663, 0
        %v4700 = vsel %vm1843, %v4664, 0
        %v4703 = vsel %vm1843, %v4665, 0
        %v4706 = vsel %vm1843, %v4666, 0
        %v4709 = vsel %vm1843, %v4667, 0
        %v4712 = vsel %vm1843, %v4668, 0
        %v4715 = vsel %vm1843, %v4669, 0
        %4717 = vmatprep.subr.bf16.mxu0 0
        %4718 = vmatpush1.bf16.msra.mxu0 0
        %4719 = vmatprep.subr.bf16.mxu0 0
        %4720 = vmatpush1.bf16.msra.mxu0 0
        %4721 = vmatprep.subr.bf16.mxu0 0
        %4722 = vmatpush1.bf16.msra.mxu0 0
        %4723 = vmatprep.subr.bf16.mxu0 0
        %4724 = vmatpush1.bf16.msra.mxu0 0
        %4725 = vmatprep.subr.bf16.mxu0 0
        %4726 = vmatpush1.bf16.msra.mxu0 0
        %4727 = vmatprep.subr.bf16.mxu0 0
        %4728 = vmatpush1.bf16.msra.mxu0 0
        %4729 = vmatprep.subr.bf16.mxu0 0
        %4730 = vmatpush1.bf16.msra.mxu0 %v4690
        %4731 = vmatprep.subr.bf16.mxu0 0
        %4732 = vmatpush1.bf16.msra.mxu0 %v4689
        %4733 = vmatprep.subr.bf16.mxu0 0
        %4734 = vmatpush2.bf16.msra.mxu0 0
        %4735 = vmatprep.subr.bf16.mxu0 0
        %4736 = vmatpush2.bf16.msra.mxu0 0
        %4737 = vmatprep.subr.bf16.mxu0 0
        %4738 = vmatpush2.bf16.msra.mxu0 0
        %4739 = vmatprep.subr.bf16.mxu0 0
        %4740 = vmatpush2.bf16.msra.mxu0 0
        %4741 = vmatprep.subr.bf16.mxu0 0
        %4742 = vmatpush2.bf16.msra.mxu0 0
        %4743 = vmatprep.subr.bf16.mxu0 0
        %4744 = vmatpush2.bf16.msra.mxu0 0
        %4745 = vmatprep.subr.bf16.mxu0 0
        %4746 = vmatpush2.bf16.msra.mxu0 0
        %4747 = vmatprep.subr.bf16.mxu0 0
        %4748 = vmatpush2.bf16.msra.mxu0 0
        %4749 = vmatprep.mubr.bf16.mxu0 0
        %4750 = vmatmul.mubr.bf16.gmra.mxu0 %v4694
        %v4751 = vpop.f32.mrf.mxu0
        %v4752 = vadd.f32 %v4679, %v4751
        %v4753 = vpop.f32.mrf.mxu0
        %v4754 = vpop.f32.mrf.mxu0
        %v4755 = vadd.f32 %v4679, %v4754
        %v4756 = vpop.f32.mrf.mxu0
        %4757 = vmatprep.mubr.bf16.mxu0 0
        %4758 = vmatmul.mubr.bf16.gmra.mxu0 %v4697
        %v4759 = vpop.f32.mrf.mxu0
        %v4760 = vadd.f32 %v4679, %v4759
        %v4761 = vpop.f32.mrf.mxu0
        %v4762 = vpop.f32.mrf.mxu0
        %v4763 = vadd.f32 %v4679, %v4762
        %v4764 = vpop.f32.mrf.mxu0
        %4765 = vmatprep.mubr.bf16.mxu0 0
        %4766 = vmatmul.mubr.bf16.gmra.mxu0 %v4700
        %v4767 = vpop.f32.mrf.mxu0
        %v4768 = vadd.f32 %v4679, %v4767
        %v4769 = vpop.f32.mrf.mxu0
        %v4770 = vpop.f32.mrf.mxu0
        %v4771 = vadd.f32 %v4679, %v4770
        %v4772 = vpop.f32.mrf.mxu0
        %4773 = vmatprep.mubr.bf16.mxu0 0
        %4774 = vmatmul.mubr.bf16.gmra.mxu0 %v4703
        %v4775 = vpop.f32.mrf.mxu0
        %v4776 = vadd.f32 %v4679, %v4775
        %v4777 = vpop.f32.mrf.mxu0
        %v4778 = vpop.f32.mrf.mxu0
        %v4779 = vadd.f32 %v4679, %v4778
        %v4780 = vpop.f32.mrf.mxu0
        %4781 = vmatprep.mubr.bf16.mxu0 0
        %4782 = vmatmul.mubr.bf16.gmra.mxu0 %v4706
        %v4783 = vpop.f32.mrf.mxu0
        %v4784 = vadd.f32 %v4679, %v4783
        %v4785 = vpop.f32.mrf.mxu0
        %v4786 = vpop.f32.mrf.mxu0
        %v4787 = vadd.f32 %v4679, %v4786
        %v4788 = vpop.f32.mrf.mxu0
        %4789 = vmatprep.mubr.bf16.mxu0 0
        %4790 = vmatmul.mubr.bf16.gmra.mxu0 %v4709
        %v4791 = vpop.f32.mrf.mxu0
        %v4792 = vadd.f32 %v4679, %v4791
        %v4793 = vpop.f32.mrf.mxu0
        %v4794 = vpop.f32.mrf.mxu0
        %v4795 = vadd.f32 %v4679, %v4794
        %v4796 = vpop.f32.mrf.mxu0
        %4797 = vmatprep.mubr.bf16.mxu0 0
        %4798 = vmatmul.mubr.bf16.gmra.mxu0 %v4712
        %v4799 = vpop.f32.mrf.mxu0
        %v4800 = vadd.f32 %v4679, %v4799
        %v4801 = vpop.f32.mrf.mxu0
        %v4802 = vpop.f32.mrf.mxu0
        %v4803 = vadd.f32 %v4679, %v4802
        %v4804 = vpop.f32.mrf.mxu0
        %4805 = vmatprep.mubr.bf16.mxu0 0
        %4806 = vmatmul.mubr.bf16.gmra.mxu0 %v4715
        %v4807 = vpop.f32.mrf.mxu0
        %v4808 = vadd.f32 %v4679, %v4807
        %v4809 = vpop.f32.mrf.mxu0
        %v4810 = vpop.f32.mrf.mxu0
        %v4811 = vadd.f32 %v4679, %v4810
        %v4812 = vpop.f32.mrf.mxu0
        %4813 = vdwg.mxu0
        %4814 = vmax.xlane.f32.xlu0 %v4752
        %v4815 = vpop.xlane.xlu0 %4814
        %4816 = vmax.xlane.f32.xlu0 %v4755
        %v4817 = vpop.xlane.xlu0 %4816
        %4818 = vmax.xlane.f32.xlu0 %v4760
        %v4819 = vpop.xlane.xlu0 %4818
        %4820 = vmax.xlane.f32.xlu0 %v4763
        %v4821 = vpop.xlane.xlu0 %4820
        %4822 = vmax.xlane.f32.xlu0 %v4768
        %v4823 = vpop.xlane.xlu0 %4822
        %4824 = vmax.xlane.f32.xlu0 %v4771
        %v4825 = vpop.xlane.xlu0 %4824
        %4826 = vmax.xlane.f32.xlu0 %v4776
        %v4827 = vpop.xlane.xlu0 %4826
        %4828 = vmax.xlane.f32.xlu0 %v4779
        %v4829 = vpop.xlane.xlu0 %4828
        %4830 = vmax.xlane.f32.xlu0 %v4784
        %v4831 = vpop.xlane.xlu0 %4830
        %4832 = vmax.xlane.f32.xlu0 %v4787
        %v4833 = vpop.xlane.xlu0 %4832
        %4834 = vmax.xlane.f32.xlu0 %v4792
        %v4835 = vpop.xlane.xlu0 %4834
        %4836 = vmax.xlane.f32.xlu0 %v4795
        %v4837 = vpop.xlane.xlu0 %4836
        %4838 = vmax.xlane.f32.xlu0 %v4800
        %v4839 = vpop.xlane.xlu0 %4838
        %4840 = vmax.xlane.f32.xlu0 %v4803
        %v4841 = vpop.xlane.xlu0 %4840
        %4842 = vmax.xlane.f32.xlu0 %v4808
        %v4843 = vpop.xlane.xlu0 %4842
        %4844 = vmax.xlane.f32.xlu0 %v4811
        %v4845 = vpop.xlane.xlu0 %4844
        %v4846 = vsub.f32 %v4752, %v4815
        %v4847 = vsub.f32 %v4755, %v4817
        %v4848 = vsub.f32 %v4760, %v4819
        %v4849 = vsub.f32 %v4763, %v4821
        %v4850 = vsub.f32 %v4768, %v4823
        %v4851 = vsub.f32 %v4771, %v4825
        %v4852 = vsub.f32 %v4776, %v4827
        %v4853 = vsub.f32 %v4779, %v4829
        %v4854 = vsub.f32 %v4784, %v4831
        %v4855 = vsub.f32 %v4787, %v4833
        %v4856 = vsub.f32 %v4792, %v4835
        %v4857 = vsub.f32 %v4795, %v4837
        %v4858 = vsub.f32 %v4800, %v4839
        %v4859 = vsub.f32 %v4803, %v4841
        %v4860 = vsub.f32 %v4808, %v4843
        %v4861 = vsub.f32 %v4811, %v4845
        %v4862 = vmul.f32 %v4846, 1.442695
        %v4863 = vpow.pop %v4862
        %v4864 = vmul.f32 %v4847, 1.442695
        %v4865 = vpow.pop %v4864
        %v4866 = vmul.f32 %v4848, 1.442695
        %v4867 = vpow.pop %v4866
        %v4868 = vmul.f32 %v4849, 1.442695
        %v4869 = vpow.pop %v4868
        %v4870 = vmul.f32 %v4850, 1.442695
        %v4871 = vpow.pop %v4870
        %v4872 = vmul.f32 %v4851, 1.442695
        %v4873 = vpow.pop %v4872
        %v4874 = vmul.f32 %v4852, 1.442695
        %v4875 = vpow.pop %v4874
        %v4876 = vmul.f32 %v4853, 1.442695
        %v4877 = vpow.pop %v4876
        %v4878 = vmul.f32 %v4854, 1.442695
        %v4879 = vpow.pop %v4878
        %v4880 = vmul.f32 %v4855, 1.442695
        %v4881 = vpow.pop %v4880
        %v4882 = vmul.f32 %v4856, 1.442695
        %v4883 = vpow.pop %v4882
        %v4884 = vmul.f32 %v4857, 1.442695
        %v4885 = vpow.pop %v4884
        %v4886 = vmul.f32 %v4858, 1.442695
        %v4887 = vpow.pop %v4886
        %v4888 = vmul.f32 %v4859, 1.442695
        %v4889 = vpow.pop %v4888
        %v4890 = vmul.f32 %v4860, 1.442695
        %v4891 = vpow.pop %v4890
        %v4892 = vmul.f32 %v4861, 1.442695
        %v4893 = vpow.pop %v4892
        %4894 = vadd.xlane.f32.xlu0 %v4863
        %v4895 = vpop.xlane.xlu0 %4894
        %4896 = vadd.xlane.f32.xlu0 %v4865
        %v4897 = vpop.xlane.xlu0 %4896
        %4898 = vadd.xlane.f32.xlu0 %v4867
        %v4899 = vpop.xlane.xlu0 %4898
        %4900 = vadd.xlane.f32.xlu0 %v4869
        %v4901 = vpop.xlane.xlu0 %4900
        %4902 = vadd.xlane.f32.xlu0 %v4871
        %v4903 = vpop.xlane.xlu0 %4902
        %4904 = vadd.xlane.f32.xlu0 %v4873
        %v4905 = vpop.xlane.xlu0 %4904
        %4906 = vadd.xlane.f32.xlu0 %v4875
        %v4907 = vpop.xlane.xlu0 %4906
        %4908 = vadd.xlane.f32.xlu0 %v4877
        %v4909 = vpop.xlane.xlu0 %4908
        %4910 = vadd.xlane.f32.xlu0 %v4879
        %v4911 = vpop.xlane.xlu0 %4910
        %4912 = vadd.xlane.f32.xlu0 %v4881
        %v4913 = vpop.xlane.xlu0 %4912
        %4914 = vadd.xlane.f32.xlu0 %v4883
        %v4915 = vpop.xlane.xlu0 %4914
        %4916 = vadd.xlane.f32.xlu0 %v4885
        %v4917 = vpop.xlane.xlu0 %4916
        %4918 = vadd.xlane.f32.xlu0 %v4887
        %v4919 = vpop.xlane.xlu0 %4918
        %4920 = vadd.xlane.f32.xlu0 %v4889
        %v4921 = vpop.xlane.xlu0 %4920
        %4922 = vadd.xlane.f32.xlu0 %v4891
        %v4923 = vpop.xlane.xlu0 %4922
        %4924 = vadd.xlane.f32.xlu0 %v4893
        %v4925 = vpop.xlane.xlu0 %4924
        %v4926 = vrcp.pop %v4895
        %v4927 = vrcp.pop %v4897
        %v4928 = vrcp.pop %v4899
        %v4929 = vrcp.pop %v4901
        %v4930 = vrcp.pop %v4903
        %v4931 = vrcp.pop %v4905
        %v4932 = vrcp.pop %v4907
        %v4933 = vrcp.pop %v4909
        %v4934 = vrcp.pop %v4911
        %v4935 = vrcp.pop %v4913
        %v4936 = vrcp.pop %v4915
        %v4937 = vrcp.pop %v4917
        %v4938 = vrcp.pop %v4919
        %v4939 = vrcp.pop %v4921
        %v4940 = vrcp.pop %v4923
        %v4941 = vrcp.pop %v4925
        %v4942 = vmul.f32 %v4926, 32.0
        %v4943 = vmul.f32 %v4927, 32.0
        %v4944 = vmul.f32 %v4928, 32.0
        %v4945 = vmul.f32 %v4929, 32.0
        %v4946 = vmul.f32 %v4930, 32.0
        %v4947 = vmul.f32 %v4931, 32.0
        %v4948 = vmul.f32 %v4932, 32.0
        %v4949 = vmul.f32 %v4933, 32.0
        %v4950 = vmul.f32 %v4934, 32.0
        %v4951 = vmul.f32 %v4935, 32.0
        %v4952 = vmul.f32 %v4936, 32.0
        %v4953 = vmul.f32 %v4937, 32.0
        %v4954 = vmul.f32 %v4938, 32.0
        %v4955 = vmul.f32 %v4939, 32.0
        %v4956 = vmul.f32 %v4940, 32.0
        %v4957 = vmul.f32 %v4941, 32.0
        %v4958 = vmul.f32 %v4863, %v4942
        %v4959 = vmul.f32 %v4865, %v4943
        %v4960 = vmul.f32 %v4867, %v4944
        %v4961 = vmul.f32 %v4869, %v4945
        %v4962 = vmul.f32 %v4871, %v4946
        %v4963 = vmul.f32 %v4873, %v4947
        %v4964 = vmul.f32 %v4875, %v4948
        %v4965 = vmul.f32 %v4877, %v4949
        %v4966 = vmul.f32 %v4879, %v4950
        %v4967 = vmul.f32 %v4881, %v4951
        %v4968 = vmul.f32 %v4883, %v4952
        %v4969 = vmul.f32 %v4885, %v4953
        %v4970 = vmul.f32 %v4887, %v4954
        %v4971 = vmul.f32 %v4889, %v4955
        %v4972 = vmul.f32 %v4891, %v4956
        %v4973 = vmul.f32 %v4893, %v4957
        %v4974 = vld [vmem:[%s17] sm:$0xf]
        %v4975 = vld [vmem:[%s17 + $0x4] sm:$0xf]
        %v4976 = vld [vmem:[%s17 + $0x8] sm:$0xf]
        %v4977 = vld [vmem:[%s17 + $0xc] sm:$0xf]
        %v4982 = vunpack.c.l.b16 %v4974
        %v4983 = vunpack.c.l.b16 %v4975
        %v4984 = vunpack.c.l.b16 %v4976
        %v4985 = vunpack.c.l.b16 %v4977
        %v4986 = vpack.c.b16 %v4983, %v4982
        %v4987 = vpack.c.b16 %v4985, %v4984
        %4990 = vmatprep.subr.bf16.mxu0 0
        %4991 = vmatpush1.bf16.msra.mxu0 0
        %4992 = vmatprep.subr.bf16.mxu0 0
        %4993 = vmatpush1.bf16.msra.mxu0 0
        %4994 = vmatprep.subr.bf16.mxu0 0
        %4995 = vmatpush1.bf16.msra.mxu0 0
        %4996 = vmatprep.subr.bf16.mxu0 0
        %4997 = vmatpush1.bf16.msra.mxu0 0
        %4998 = vmatprep.subr.bf16.mxu0 0
        %4999 = vmatpush1.bf16.msra.mxu0 0
        %5000 = vmatprep.subr.bf16.mxu0 0
        %5001 = vmatpush1.bf16.msra.mxu0 0
        %5002 = vmatprep.subr.bf16.mxu0 0
        %5003 = vmatpush1.bf16.msra.mxu0 %v4987
        %5004 = vmatprep.subr.bf16.mxu0 0
        %5005 = vmatpush1.bf16.msra.mxu0 %v4986
        %5006 = vmatprep.subr.bf16.mxu0 0
        %5007 = vmatpush2.bf16.msra.mxu0 0
        %5008 = vmatprep.subr.bf16.mxu0 0
        %5009 = vmatpush2.bf16.msra.mxu0 0
        %5010 = vmatprep.subr.bf16.mxu0 0
        %5011 = vmatpush2.bf16.msra.mxu0 0
        %5012 = vmatprep.subr.bf16.mxu0 0
        %5013 = vmatpush2.bf16.msra.mxu0 0
        %5014 = vmatprep.subr.bf16.mxu0 0
        %5015 = vmatpush2.bf16.msra.mxu0 0
        %5016 = vmatprep.subr.bf16.mxu0 0
        %5017 = vmatpush2.bf16.msra.mxu0 0
        %5018 = vmatprep.subr.bf16.mxu0 0
        %5019 = vmatpush2.bf16.msra.mxu0 0
        %5020 = vmatprep.subr.bf16.mxu0 0
        %5021 = vmatpush2.bf16.msra.mxu0 0
        %5022 = vmatprep.mubr.bf16.mxu0 0
        %5023 = vmatmul.mubr.bf16.gmra.mxu0 %v4480
        %v5024 = vpop.f32.mrf.mxu0
        %v5025 = vadd.f32 0.0, %v5024
        %v5026 = vpop.f32.mrf.mxu0
        %v5027 = vpop.f32.mrf.mxu0
        %v5028 = vadd.f32 0.0, %v5027
        %v5029 = vpop.f32.mrf.mxu0
        %5030 = vmatprep.mubr.bf16.mxu0 0
        %5031 = vmatmul.mubr.bf16.gmra.mxu0 %v4483
        %v5032 = vpop.f32.mrf.mxu0
        %v5033 = vadd.f32 0.0, %v5032
        %v5034 = vpop.f32.mrf.mxu0
        %v5035 = vpop.f32.mrf.mxu0
        %v5036 = vadd.f32 0.0, %v5035
        %v5037 = vpop.f32.mrf.mxu0
        %5038 = vmatprep.mubr.bf16.mxu0 0
        %5039 = vmatmul.mubr.bf16.gmra.mxu0 %v4486
        %v5040 = vpop.f32.mrf.mxu0
        %v5041 = vadd.f32 0.0, %v5040
        %v5042 = vpop.f32.mrf.mxu0
        %v5043 = vpop.f32.mrf.mxu0
        %v5044 = vadd.f32 0.0, %v5043
        %v5045 = vpop.f32.mrf.mxu0
        %5046 = vmatprep.mubr.bf16.mxu0 0
        %5047 = vmatmul.mubr.bf16.gmra.mxu0 %v4489
        %v5048 = vpop.f32.mrf.mxu0
        %v5049 = vadd.f32 0.0, %v5048
        %v5050 = vpop.f32.mrf.mxu0
        %v5051 = vpop.f32.mrf.mxu0
        %v5052 = vadd.f32 0.0, %v5051
        %v5053 = vpop.f32.mrf.mxu0
        %5054 = vmatprep.mubr.bf16.mxu0 0
        %5055 = vmatmul.mubr.bf16.gmra.mxu0 %v4492
        %v5056 = vpop.f32.mrf.mxu0
        %v5057 = vadd.f32 0.0, %v5056
        %v5058 = vpop.f32.mrf.mxu0
        %v5059 = vpop.f32.mrf.mxu0
        %v5060 = vadd.f32 0.0, %v5059
        %v5061 = vpop.f32.mrf.mxu0
        %5062 = vmatprep.mubr.bf16.mxu0 0
        %5063 = vmatmul.mubr.bf16.gmra.mxu0 %v4495
        %v5064 = vpop.f32.mrf.mxu0
        %v5065 = vadd.f32 0.0, %v5064
        %v5066 = vpop.f32.mrf.mxu0
        %v5067 = vpop.f32.mrf.mxu0
        %v5068 = vadd.f32 0.0, %v5067
        %v5069 = vpop.f32.mrf.mxu0
        %5070 = vmatprep.mubr.bf16.mxu0 0
        %5071 = vmatmul.mubr.bf16.gmra.mxu0 %v4498
        %v5072 = vpop.f32.mrf.mxu0
        %v5073 = vadd.f32 0.0, %v5072
        %v5074 = vpop.f32.mrf.mxu0
        %v5075 = vpop.f32.mrf.mxu0
        %v5076 = vadd.f32 0.0, %v5075
        %v5077 = vpop.f32.mrf.mxu0
        %5078 = vmatprep.mubr.bf16.mxu0 0
        %5079 = vmatmul.mubr.bf16.gmra.mxu0 %v4501
        %v5080 = vpop.f32.mrf.mxu0
        %v5081 = vadd.f32 0.0, %v5080
        %v5082 = vpop.f32.mrf.mxu0
        %v5083 = vpop.f32.mrf.mxu0
        %v5084 = vadd.f32 0.0, %v5083
        %v5085 = vpop.f32.mrf.mxu0
        %5086 = vdwg.mxu0
        %v5087 = vmul.f32 %v4958, %v5025
        %v5088 = vmul.f32 %v4959, %v5028
        %v5089 = vmul.f32 %v4960, %v5033
        %v5090 = vmul.f32 %v4961, %v5036
        %v5091 = vmul.f32 %v4962, %v5041
        %v5092 = vmul.f32 %v4963, %v5044
        %v5093 = vmul.f32 %v4964, %v5049
        %v5094 = vmul.f32 %v4965, %v5052
        %v5095 = vmul.f32 %v4966, %v5057
        %v5096 = vmul.f32 %v4967, %v5060
        %v5097 = vmul.f32 %v4968, %v5065
        %v5098 = vmul.f32 %v4969, %v5068
        %v5099 = vmul.f32 %v4970, %v5073
        %v5100 = vmul.f32 %v4971, %v5076
        %v5101 = vmul.f32 %v4972, %v5081
        %v5102 = vmul.f32 %v4973, %v5084
        %v5103 = vpack.c.bf16 %v5088, %v5087
        %v5104 = vpack.c.bf16 %v5090, %v5089
        %v5105 = vpack.c.bf16 %v5092, %v5091
        %v5106 = vpack.c.bf16 %v5094, %v5093
        %v5107 = vpack.c.bf16 %v5096, %v5095
        %v5108 = vpack.c.bf16 %v5098, %v5097
        %v5109 = vpack.c.bf16 %v5100, %v5099
        %v5110 = vpack.c.bf16 %v5102, %v5101
        %v5111 = vld [vmem:[%s18] sm:$0xf]
        %5112 = vmatprep.subr.bf16.mxu0 0
        %5113 = vmatpush1.bf16.msra.mxu0 %v5110
        %5114 = vmatprep.subr.bf16.mxu0 0
        %5115 = vmatpush1.bf16.msra.mxu0 %v5109
        %5116 = vmatprep.subr.bf16.mxu0 0
        %5117 = vmatpush1.bf16.msra.mxu0 %v5108
        %5118 = vmatprep.subr.bf16.mxu0 0
        %5119 = vmatpush1.bf16.msra.mxu0 %v5107
        %5120 = vmatprep.subr.bf16.mxu0 0
        %5121 = vmatpush1.bf16.msra.mxu0 %v5106
        %5122 = vmatprep.subr.bf16.mxu0 0
        %5123 = vmatpush1.bf16.msra.mxu0 %v5105
        %5124 = vmatprep.subr.bf16.mxu0 0
        %5125 = vmatpush1.bf16.msra.mxu0 %v5104
        %5126 = vmatprep.subr.bf16.mxu0 0
        %5127 = vmatpush1.bf16.msra.mxu0 %v5103
        %5128 = vmatprep.subr.bf16.mxu0 0
        %5129 = vmatpush2.bf16.msra.mxu0 0
        %5130 = vmatprep.subr.bf16.mxu0 0
        %5131 = vmatpush2.bf16.msra.mxu0 0
        %5132 = vmatprep.subr.bf16.mxu0 0
        %5133 = vmatpush2.bf16.msra.mxu0 0
        %5134 = vmatprep.subr.bf16.mxu0 0
        %5135 = vmatpush2.bf16.msra.mxu0 0
        %5136 = vmatprep.subr.bf16.mxu0 0
        %5137 = vmatpush2.bf16.msra.mxu0 0
        %5138 = vmatprep.subr.bf16.mxu0 0
        %5139 = vmatpush2.bf16.msra.mxu0 0
        %5140 = vmatprep.subr.bf16.mxu0 0
        %5141 = vmatpush2.bf16.msra.mxu0 0
        %5142 = vmatprep.subr.bf16.mxu0 0
        %5143 = vmatpush2.bf16.msra.mxu0 0
        %5144 = vmatprep.mubr.bf16.mxu0 0
        %5145 = vmatmul.mubr.bf16.gmra.mxu0 %v5111
        %v5146 = vpop.f32.mrf.mxu0
        %v5147 = vadd.f32 0.0, %v5146
        %v5148 = vpop.f32.mrf.mxu0
        %v5149 = vpop.f32.mrf.mxu0
        %v5150 = vpop.f32.mrf.mxu0
        %5151 = vdwg.mxu0
        %v5152 = vmax.f32 %v5147, 0.0
        %5153 = vst [vmem:[%s861] sm:$0xff] %v5152
        %s5154 = sand.u32 %s464, 1
        %s5155 = scalar_lea.sflag [#allocation5], %s5154
        %s5156 = sand.u32 %s464, 1
        %s5157 = smul.addr %s5156, 8
        %s5158 = scalar_lea.vmem [#allocation4], %s5157
        // Predicated region
        $region176: #{forward.1} parent=166 // pred_check
          %p5159 = pneg %p474
        $region177: #{forward.1} parent=166 // pred_check_branch
          %5161 = sbr.rel (%p5159) target = $region179
        $region178: #{forward.1} parent=166 // pred_region
          %s5163 = ssub.s32 128, 128
          %5164 = vsyncadd %s5155, %s5163
          %s5165 = smul.addr %s33, 128
          %s5166 = scalar_lea.hbm %s19, %s5165
          %s5168 = sshll.u32 %s5158, 4
          %s5169 = int_to_ptr.vmem [resolvable:$true] %s5168
          %5171 = dma.vmem_to_hbm [thread:$0]  %s5169, 128, %s5166, %s5155
        $region179: #{forward.1} parent=166 // pred_fallthru
          _
      $region167: #{forward.1} parent=5 // pred_fallthru
        _
      %p5172 = scmp.le.s32.totalorder 2, %s28
      // Predicated region
      $region180: #{forward.1} parent=5 // pred_check
        %p5173 = pneg %p5172
      $region181: #{forward.1} parent=5 // pred_check_branch
        %5175 = sbr.rel (%p5173) target = $region183
      $region182: #{forward.1} parent=5 // pred_region
        %s5176 = ssub.s32 %s28, 2
        // Predicated region
        $region184: #{forward.1} parent=182 // pred_check
          %p5177 = pneg %p480
        $region185: #{forward.1} parent=182 // pred_check_branch
          %5179 = sbr.rel (%p5177) target = $region187
        $region186: #{forward.1} parent=182 // pred_region
          %s5180 = sand.u32 %s465, 1
          %s5181 = scalar_lea.sflag [#allocation5], %s5180
          %s5182 = sand.u32 %s465, 1
          %s5183 = smul.addr %s5182, 8
          %s5184 = scalar_lea.vmem [#allocation4], %s5183
          %5185 = dma.done %s5181, 128
        $region187: #{forward.1} parent=182 // pred_fallthru
          _
      $region183: #{forward.1} parent=5 // pred_fallthru
        _
    $region6: #{forward.1} parent=1 // loop_footer
      %s32 = sadd.s32 1, %s28
    $region7: #{forward.1} parent=1 // loop_footer_branch
      %27 = sbr.rel target = $region3
    $region8: #{forward.1} parent=1 // loop_exit
      _
    %5186 = vsyncpa [#allocation5], 1
    %s5187 = scalar_lea.sflag [#allocation5], 1
    %5188 = vsyncpa %s5187, 1

</llo_original>
